<compile_context>
chip_gen: v7x
topology: tpu7x:2x2x1
jax: 0.10.0
libtpu: 0.0.40
codegen_flags: <defaults>
</compile_context>

<pallas_src>
import numpy as np
import jax
import jax.numpy as jnp
from jax import lax
from jax.experimental import pallas as pl
from jax.experimental.pallas import tpu as pltpu


def cdm_kernel(
    feat_ref, bank_ref, mask_ref, mask_bank_ref,
    w_mask_ref, b_mask_ref,
    w_ie_ref, w_csum_ref, b_ie_ref,
    w_f_ref, b_fuse_ref,
    w_mem_ref, b_mem_ref,
    p_out_ref, aff_out_ref, mem_ref,
    feat_sm_scr,
):
    b = pl.program_id(0)          # batch index ("parallel")
    i = pl.program_id(1)          # bank-loop index (innermost, "arbitrary")
    nbank = pl.num_programs(1)
    j = (i + b) % nbank           # circular bank index: bank[(i + b) % bank_size]

    fb = bank_ref[j]              # (HW, C) f32, sliced from the VMEM-resident bank

    w_mask = w_mask_ref[...]
    b_mask = b_mask_ref[...]

    def class_probs(h):           # 2-class softmax of the mask head (tiny; exact divide)
        logits = jnp.dot(h, w_mask, preferred_element_type=jnp.float32) + b_mask
        m = jnp.max(logits, axis=-1, keepdims=True)
        e = jnp.exp(logits - m)
        return e / jnp.sum(e, axis=-1, keepdims=True)

    # Feature-side class probabilities depend only on b -> compute once per b.
    @pl.when(i == 0)
    def _():
        feat_sm_scr[...] = class_probs(feat_ref[0])

    feat_sm = feat_sm_scr[...]                                             # (HW, 2)
    fb_sm = class_probs(fb)                                                # (HW, 2)

    # A[q, k] = <feat_sm[q, :], fb_sm[k, :]>  (torch: bmm(feat^T, feat_bank)); A in [0,1]
    A = lax.dot_general(feat_sm, fb_sm, (((1,), (1,)), ((), ())),
                        preferred_element_type=jnp.float32)                # (HWq, HWk)

    # One shared exp serves both softmaxes over A (A in [0,1] -> no max-shift needed).
    E = jnp.exp(A)
    # P = softmax(A, dim=1): normalize over the query axis (axis 0 here).
    p_out_ref[0, 0] = E * pl.reciprocal(
        jnp.sum(E, axis=0, keepdims=True), approx=True)
    # P_T = softmax(A^T, dim=1): normalize over the key axis; kept in row form.
    prow = E * pl.reciprocal(jnp.sum(E, axis=-1, keepdims=True), approx=True)

    # feature_intra = prow @ fb (bf16 MXU, f32 accumulate).
    # feature_inter = (1 - prow) @ fb == colsum(fb) - intra: not materialized, folded
    # into the merged conv below.
    intra = jnp.dot(prow.astype(jnp.bfloat16), fb.astype(jnp.bfloat16),
                    preferred_element_type=jnp.float32)                    # (HW, C)
    colsum = jnp.sum(fb, axis=0, keepdims=True)                            # (1, C)

    # intra_conv & inter_conv (surrounding BNs folded) as ONE matmul:
    #   Z = ReLU(intra @ [W_i | -W_e] + colsum @ [0 | W_e] + [b_i | b_e]) = [hi | he]
    bias_ie = jnp.dot(colsum, w_csum_ref[...],
                      preferred_element_type=jnp.float32) + b_ie_ref[...]  # (1, 2C)
    z = jnp.maximum(
        jnp.dot(intra.astype(jnp.bfloat16), w_ie_ref[...],
                preferred_element_type=jnp.float32) + bias_ie, 0.0)        # (HW, 2C)

    # fuse (folded BN) as ONE matmul: ReLU([hi | he] @ [[Wf_i],[Wf_e]] + b_f)
    fused = jnp.maximum(
        jnp.dot(z.astype(jnp.bfloat16), w_f_ref[...],
                preferred_element_type=jnp.float32) + b_fuse_ref[...], 0.0)  # (HW, C)

    # Ideal affinity matrix: one-hot(mask) @ one-hot(mask_bank)^T == equality compare.
    aff_out_ref[0, 0] = (mask_ref[0] == mask_bank_ref[j]).astype(jnp.float32)

    # fuse_memory_conv (1x1 conv over the concatenated bank_size*C channels):
    # accumulate the per-bank-step partial matmul directly in the resident output
    # block (its out_spec index (b, 0, 0) is constant over i).
    part = jnp.dot(fused.astype(jnp.bfloat16), w_mem_ref[0],
                   preferred_element_type=jnp.float32)                     # (HW, 4C)

    @pl.when(i == 0)
    def _():
        mem_ref[0] = part

    @pl.when(i != 0)
    def _():
        mem_ref[0] = mem_ref[0] + part

    @pl.when(i == nbank - 1)
    def _():
        mem_ref[0] = jnp.maximum(mem_ref[0] + b_mem_ref[...], 0.0)


def fold_params(p, C, nbank):
    """Fold inference-mode BatchNorms into the 1x1 convs and merge the branch convs."""
    f32, bf16 = jnp.float32, jnp.bfloat16
    # intra_conv: BN(a) -> conv -> BN(b)
    w_intra = (p['sc_ia'].reshape(C, 1) * p['w_intra']) * p['sc_ib'].reshape(1, C)
    b_intra = (p['sh_ia'] @ p['w_intra'] + p['b_intra']) * p['sc_ib'] + p['sh_ib']
    # inter_conv: BN(a) -> conv -> BN(b)
    w_inter = (p['sc_ea'].reshape(C, 1) * p['w_inter']) * p['sc_eb'].reshape(1, C)
    b_inter = (p['sh_ea'] @ p['w_inter'] + p['b_inter']) * p['sc_eb'] + p['sh_eb']
    # Merge both branches (inter = colsum - intra is affine in intra):
    #   Z_pre = intra @ [W_i | -W_e] + colsum @ [0 | W_e] + [b_i | b_e]
    w_ie = jnp.concatenate([w_intra, -w_inter], axis=1)                    # (C, 2C)
    w_csum = jnp.concatenate([jnp.zeros((C, C), f32), w_inter], axis=1)    # (C, 2C)
    b_ie = jnp.concatenate([b_intra, b_inter], axis=1)                     # (1, 2C)
    # fuse: conv -> BN, merged over the concatenated [hi | he] input
    wf_intra = p['wf_intra'] * p['sc_f']
    wf_inter = p['wf_inter'] * p['sc_f']
    w_f = jnp.concatenate([wf_intra, wf_inter], axis=0)                    # (2C, C)
    b_fuse = p['b_fuse'] * p['sc_f'] + p['sh_f']
    # fuse_memory_conv: conv -> BN
    w_mem = (p['w_mem'] * p['sc_m']).reshape(nbank, C, 4 * C)
    b_mem = p['b_mem'] * p['sc_m'] + p['sh_m']
    return dict(
        w_mask=p['w_mask'].astype(f32), b_mask=p['b_mask'].astype(f32),
        w_ie=w_ie.astype(bf16), w_csum=w_csum.astype(f32), b_ie=b_ie.astype(f32),
        w_f=w_f.astype(bf16), b_fuse=b_fuse.astype(f32),
        w_mem=w_mem.astype(bf16), b_mem=b_mem.astype(f32),
    )


def cdm_forward(bank_nchw, feature_ini_nchw, ptr, mask, mask_bank, params):
    del ptr  # unused by the PyTorch forward as well
    B, C, H, W = feature_ini_nchw.shape
    nbank = bank_nchw.shape[0]
    HW = H * W
    C4 = 4 * C
    fp = fold_params(params, C, nbank)

    def to_hwc(x):  # NCHW -> (N, HW, C)
        n, c = x.shape[0], x.shape[1]
        return jnp.transpose(x.reshape(n, c, HW), (0, 2, 1))

    feat = to_hwc(feature_ini_nchw).astype(jnp.float32)
    bank = to_hwc(bank_nchw).astype(jnp.float32)
    # masks as plain {0,1} values: (B, HW, 1) column form and (nbank, 1, HW) row form
    mask_q = mask.reshape(B, HW, 1).astype(jnp.float32)
    mask_k = mask_bank.reshape(nbank, 1, HW).astype(jnp.float32)

    def full_spec(a):
        shp = a.shape
        return pl.BlockSpec(shp, lambda b, i, _n=len(shp): (0,) * _n)

    in_specs = [
        pl.BlockSpec((1, HW, C), lambda b, i: (b, 0, 0)),      # feature_ini (per b)
        full_spec(bank),                                       # bank, VMEM resident
        pl.BlockSpec((1, HW, 1), lambda b, i: (b, 0, 0)),      # mask (per b)
        full_spec(mask_k),                                     # mask_bank, resident
        full_spec(fp['w_mask']), full_spec(fp['b_mask']),
        full_spec(fp['w_ie']), full_spec(fp['w_csum']), full_spec(fp['b_ie']),
        full_spec(fp['w_f']), full_spec(fp['b_fuse']),
        pl.BlockSpec((1, C, C4), lambda b, i: (i, 0, 0)),      # w_mem slice i
        full_spec(fp['b_mem']),
    ]
    out_specs = [
        pl.BlockSpec((1, 1, HW, HW), lambda b, i: (i, b, 0, 0)),   # P_list
        pl.BlockSpec((1, 1, HW, HW), lambda b, i: (i, b, 0, 0)),   # affinity_list
        pl.BlockSpec((1, HW, C4), lambda b, i: (b, 0, 0)),         # fused memory (acc)
    ]
    out_shape = (
        jax.ShapeDtypeStruct((nbank, B, HW, HW), jnp.float32),
        jax.ShapeDtypeStruct((nbank, B, HW, HW), jnp.float32),
        jax.ShapeDtypeStruct((B, HW, C4), jnp.float32),
    )

    P_stack, aff_stack, mem = pl.pallas_call(
        cdm_kernel,
        out_shape=out_shape,
        grid_spec=pltpu.PrefetchScalarGridSpec(
            num_scalar_prefetch=0,
            grid=(B, nbank),
            in_specs=in_specs,
            out_specs=out_specs,
            scratch_shapes=[pltpu.VMEM((HW, 2), jnp.float32)],   # feat_sm, reused over i
        ),
        compiler_params=pltpu.CompilerParams(
            dimension_semantics=("parallel", "arbitrary")),
    )(feat, bank, mask_q, mask_k,
      fp['w_mask'], fp['b_mask'],
      fp['w_ie'], fp['w_csum'], fp['b_ie'],
      fp['w_f'], fp['b_fuse'],
      fp['w_mem'], fp['b_mem'])

    feature_memory = jnp.transpose(mem, (0, 2, 1)).reshape(B, C4, H, W)    # back to NCHW
    P_list = [P_stack[j] for j in range(nbank)]
    aff_list = [aff_stack[j] for j in range(nbank)]
    return feature_memory, P_list, aff_list


def make_params(key, C, nbank):
    C4 = 4 * C
    ks = iter(jax.random.split(key, 24))

    def nrm(shape, scale):
        return (scale * jax.random.normal(next(ks), shape)).astype(jnp.float32)

    def bn_fold(c):  # eval-mode BatchNorm folded to scale / shift
        k1, k2, k3, k4 = jax.random.split(next(ks), 4)
        gamma = 1.0 + 0.1 * jax.random.normal(k1, (c,))
        beta = 0.05 * jax.random.normal(k2, (c,))
        mean = 0.1 * jax.random.normal(k3, (c,))
        var = jax.random.uniform(k4, (c,), minval=0.5, maxval=1.5)
        sc = gamma / jnp.sqrt(var + 1e-5)
        sh = beta - mean * sc
        return sc.reshape(1, c).astype(jnp.float32), sh.reshape(1, c).astype(jnp.float32)

    p = {}
    p['w_mask'] = nrm((C, 2), 1.0 / np.sqrt(C))
    p['b_mask'] = jnp.zeros((1, 2), jnp.float32)
    p['sc_ia'], p['sh_ia'] = bn_fold(C)
    p['w_intra'] = nrm((C, C), 1.0 / np.sqrt(C))
    p['b_intra'] = nrm((1, C), 0.02)
    p['sc_ib'], p['sh_ib'] = bn_fold(C)
    p['sc_ea'], p['sh_ea'] = bn_fold(C)
    p['w_inter'] = nrm((C, C), 1.0 / np.sqrt(C))
    p['b_inter'] = nrm((1, C), 0.02)
    p['sc_eb'], p['sh_eb'] = bn_fold(C)
    p['wf_intra'] = nrm((C, C), 1.0 / np.sqrt(2 * C))
    p['wf_inter'] = nrm((C, C), 1.0 / np.sqrt(2 * C))
    p['b_fuse'] = nrm((1, C), 0.02)
    p['sc_f'], p['sh_f'] = bn_fold(C)
    p['w_mem'] = nrm((nbank * C, C4), 1.0 / np.sqrt(nbank * C))
    p['b_mem'] = nrm((1, C4), 0.02)
    p['sc_m'], p['sh_m'] = bn_fold(C4)
    return p


def cdm_reference(bank_nchw, feat_nchw, mask, mask_bank, p):
    """Plain-JAX f32 reference mirroring the PyTorch forward (for the sanity check)."""
    B, C, H, W = feat_nchw.shape
    nbank = bank_nchw.shape[0]
    HW = H * W
    to_hwc = lambda x: jnp.transpose(x.reshape(x.shape[0], x.shape[1], HW), (0, 2, 1))
    feat = to_hwc(feat_nchw).astype(jnp.float32)
    bank = to_hwc(bank_nchw).astype(jnp.float32)
    mask_oh = jax.nn.one_hot(mask.reshape(B, HW), 2, dtype=jnp.float32)
    mask_bank_oh = jax.nn.one_hot(mask_bank.reshape(nbank, HW), 2, dtype=jnp.float32)

    feat_sm = jax.nn.softmax(feat @ p['w_mask'] + p['b_mask'], axis=-1)
    P_list, aff_list, outs = [], [], []
    for i in range(nbank):
        idx = (i + jnp.arange(B)) % nbank
        fb = bank[idx]
        moh_b = mask_bank_oh[idx]
        fb_sm = jax.nn.softmax(fb @ p['w_mask'] + p['b_mask'], axis=-1)
        A = jnp.einsum('bqn,bkn->bqk', feat_sm, fb_sm)
        P = jax.nn.softmax(A, axis=1)
        prow = jax.nn.softmax(A, axis=2)
        intra = jnp.einsum('bqk,bkc->bqc', prow, fb)
        inter = jnp.einsum('bqk,bkc->bqc', 1.0 - prow, fb)
        hi = intra * p['sc_ia'] + p['sh_ia']
        hi = hi @ p['w_intra'] + p['b_intra']
        hi = jnp.maximum(hi * p['sc_ib'] + p['sh_ib'], 0.0)
        he = inter * p['sc_ea'] + p['sh_ea']
        he = he @ p['w_inter'] + p['b_inter']
        he = jnp.maximum(he * p['sc_eb'] + p['sh_eb'], 0.0)
        fused = hi @ p['wf_intra'] + he @ p['wf_inter'] + p['b_fuse']
        fused = jnp.maximum(fused * p['sc_f'] + p['sh_f'], 0.0)
        aff = jnp.einsum('bqn,bkn->bqk', mask_oh, moh_b)
        P_list.append(P); aff_list.append(aff); outs.append(fused)
    cat = jnp.concatenate(outs, axis=-1)
    mem = jnp.maximum((cat @ p['w_mem'] + p['b_mem']) * p['sc_m'] + p['sh_m'], 0.0)
    mem_nchw = jnp.transpose(mem, (0, 2, 1)).reshape(B, 4 * C, H, W)
    return mem_nchw, jnp.stack(P_list), jnp.stack(aff_list)


if __name__ == "__main__":
    B, C, H, W = 2, 32, 16, 16     # batch, feat_channels, spatial (HW=256, a 128 multiple)
    nbank = 4                      # bank_size (kept small for the demo)
    key = jax.random.PRNGKey(0)
    k1, k2, k3, k4, kp = jax.random.split(key, 5)

    bank = jax.random.normal(k1, (nbank, C, H, W), jnp.float32)
    feature_ini = jax.random.normal(k2, (B, C, H, W), jnp.float32)
    mask = jax.random.randint(k3, (B, 1, H, W), 0, 2)
    mask_bank = jax.random.randint(k4, (nbank, 1, H, W), 0, 2)
    ptr = jnp.array(0, jnp.int32)
    params = make_params(kp, C, nbank)

    feature_memory, P_list, aff_list = cdm_forward(
        bank, feature_ini, ptr, mask, mask_bank, params)
    jax.block_until_ready(feature_memory)
    jax.block_until_ready(P_list)
    jax.block_until_ready(aff_list)

    # silent correctness check against the plain-JAX f32 reference
    ref_mem, ref_P, ref_aff = cdm_reference(bank, feature_ini, mask, mask_bank, params)

    mem_got = np.asarray(feature_memory, np.float32)
    mem_ref = np.asarray(ref_mem, np.float32)
    # bf16 MXU operands + approximate reciprocal -> scale-aware tolerance on the deep path
    atol_mem = 3e-2 * float(np.max(np.abs(mem_ref)) + 1e-6)
    np.testing.assert_allclose(mem_got, mem_ref, rtol=3e-2, atol=atol_mem)
    np.testing.assert_allclose(np.asarray(jnp.stack(P_list)), np.asarray(ref_P),
                               rtol=2e-2, atol=1e-4)
    np.testing.assert_allclose(np.asarray(jnp.stack(aff_list)), np.asarray(ref_aff),
                               rtol=0, atol=1e-6)

    print("KERNEL_OK")
</pallas_src>

<mosaic_0001>
module attributes {stable_mosaic.version = 11 : i64} {
  func.func @cdm_kernel(%arg0: i32, %arg1: i32, %arg2: memref<1x256x32xf32, #tpu.memory_space<vmem>>, %arg3: memref<4x256x32xf32, #tpu.memory_space<vmem>>, %arg4: memref<1x256x1xf32, #tpu.memory_space<vmem>>, %arg5: memref<4x1x256xf32, #tpu.memory_space<vmem>>, %arg6: memref<32x2xf32, #tpu.memory_space<vmem>>, %arg7: memref<1x2xf32, #tpu.memory_space<vmem>>, %arg8: memref<32x64xbf16, #tpu.memory_space<vmem>>, %arg9: memref<32x64xf32, #tpu.memory_space<vmem>>, %arg10: memref<1x64xf32, #tpu.memory_space<vmem>>, %arg11: memref<64x32xbf16, #tpu.memory_space<vmem>>, %arg12: memref<1x32xf32, #tpu.memory_space<vmem>>, %arg13: memref<1x32x128xbf16, #tpu.memory_space<vmem>>, %arg14: memref<1x128xf32, #tpu.memory_space<vmem>>, %arg15: memref<1x1x256x256xf32, #tpu.memory_space<vmem>>, %arg16: memref<1x1x256x256xf32, #tpu.memory_space<vmem>>, %arg17: memref<1x256x128xf32, #tpu.memory_space<vmem>>, %arg18: memref<256x2xf32, #tpu.memory_space<vmem>>) attributes {dimension_semantics = [#tpu.dimension_semantics<parallel>, #tpu.dimension_semantics<arbitrary>], iteration_bounds = array<i64: 2, 4>, scalar_prefetch = 0 : i64, scratch_operands = 1 : i64, tpu.core_type = #tpu.core_type<tc>, window_params = [{transform_indices = @transform_0, window_bounds = array<i64: 1, 256, 32>}, {pipeline_mode = #tpu.pipeline_mode<synchronous>, transform_indices = @transform_1, window_bounds = array<i64: 4, 256, 32>}, {transform_indices = @transform_2, window_bounds = array<i64: 1, 256, 1>}, {pipeline_mode = #tpu.pipeline_mode<synchronous>, transform_indices = @transform_3, window_bounds = array<i64: 4, 1, 256>}, {pipeline_mode = #tpu.pipeline_mode<synchronous>, transform_indices = @transform_4, window_bounds = array<i64: 32, 2>}, {pipeline_mode = #tpu.pipeline_mode<synchronous>, transform_indices = @transform_5, window_bounds = array<i64: 1, 2>}, {pipeline_mode = #tpu.pipeline_mode<synchronous>, transform_indices = @transform_6, window_bounds = array<i64: 32, 64>}, {pipeline_mode = #tpu.pipeline_mode<synchronous>, transform_indices = @transform_7, window_bounds = array<i64: 32, 64>}, {pipeline_mode = #tpu.pipeline_mode<synchronous>, transform_indices = @transform_8, window_bounds = array<i64: 1, 64>}, {pipeline_mode = #tpu.pipeline_mode<synchronous>, transform_indices = @transform_9, window_bounds = array<i64: 64, 32>}, {pipeline_mode = #tpu.pipeline_mode<synchronous>, transform_indices = @transform_10, window_bounds = array<i64: 1, 32>}, {transform_indices = @transform_11, window_bounds = array<i64: 1, 32, 128>}, {pipeline_mode = #tpu.pipeline_mode<synchronous>, transform_indices = @transform_12, window_bounds = array<i64: 1, 128>}, {transform_indices = @transform_13, window_bounds = array<i64: 1, 1, 256, 256>}, {transform_indices = @transform_14, window_bounds = array<i64: 1, 1, 256, 256>}, {transform_indices = @transform_15, window_bounds = array<i64: 1, 256, 128>}]} {
    %0 = arith.addi %arg1, %arg0 : i32
    %c4_i32 = arith.constant 4 : i32
    %c0_i32 = arith.constant 0 : i32
    %1 = arith.cmpi eq, %c4_i32, %c0_i32 : i32
    %c1_i32 = arith.constant 1 : i32
    %2 = arith.select %1, %c1_i32, %c4_i32 : i32
    %3 = arith.remsi %0, %2 : i32
    %c0_i32_0 = arith.constant 0 : i32
    %4 = arith.cmpi ne, %3, %c0_i32_0 : i32
    %c0_i32_1 = arith.constant 0 : i32
    %5 = arith.cmpi slt, %3, %c0_i32_1 : i32
    %c0_i32_2 = arith.constant 0 : i32
    %6 = arith.cmpi slt, %2, %c0_i32_2 : i32
    %7 = arith.xori %5, %6 : i1
    %8 = arith.andi %7, %4 : i1
    %9 = arith.addi %3, %2 : i32
    %10 = arith.select %8, %9, %3 : i32
    %11 = arith.index_cast %10 : i32 to index
    %c0 = arith.constant 0 : index
    %c0_3 = arith.constant 0 : index
    %12 = vector.load %arg3[%11, %c0, %c0_3] : memref<4x256x32xf32, #tpu.memory_space<vmem>>, vector<1x256x32xf32>
    %13 = vector.shape_cast %12 : vector<1x256x32xf32> to vector<256x32xf32>
    %c0_4 = arith.constant 0 : index
    %c0_5 = arith.constant 0 : index
    %14 = vector.load %arg6[%c0_4, %c0_5] : memref<32x2xf32, #tpu.memory_space<vmem>>, vector<32x2xf32>
    %c0_6 = arith.constant 0 : index
    %c0_7 = arith.constant 0 : index
    %15 = vector.load %arg7[%c0_6, %c0_7] : memref<1x2xf32, #tpu.memory_space<vmem>>, vector<1x2xf32>
    %c0_i32_8 = arith.constant 0 : i32
    %16 = arith.cmpi eq, %arg1, %c0_i32_8 : i32
    %17 = arith.extui %16 : i1 to i32
    %c0_i32_9 = arith.constant 0 : i32
    %18 = arith.cmpi ne, %17, %c0_i32_9 : i32
    scf.if %18 {
      %c0_56 = arith.constant 0 : index
      %c0_57 = arith.constant 0 : index
      %c0_58 = arith.constant 0 : index
      %97 = vector.load %arg2[%c0_56, %c0_57, %c0_58] : memref<1x256x32xf32, #tpu.memory_space<vmem>>, vector<1x256x32xf32>
      %98 = vector.shape_cast %97 : vector<1x256x32xf32> to vector<256x32xf32>
      %cst_59 = arith.constant dense<0.000000e+00> : vector<256x2xf32>
      %99 = tpu.matmul %98, %14, %cst_59 {dimension_numbers = #tpu.dot_dimension_numbers<[1], [0], [0], [1], [0, 0, 1, 1], [], []>} : vector<256x32xf32>, vector<32x2xf32>, vector<256x2xf32> -> vector<256x2xf32>
      %100 = vector.broadcast %15 : vector<1x2xf32> to vector<256x2xf32>
      %101 = arith.addf %99, %100 : vector<256x2xf32>
      %cst_60 = arith.constant dense<0xFF800000> : vector<256xf32>
      %102 = vector.multi_reduction <maximumf>, %101, %cst_60 [1] : vector<256x2xf32> to vector<256xf32>
      %103 = vector.shape_cast %102 : vector<256xf32> to vector<256x1xf32>
      %104 = vector.broadcast %103 : vector<256x1xf32> to vector<256x2xf32>
      %105 = arith.subf %101, %104 : vector<256x2xf32>
      %106 = math.exp %105 : vector<256x2xf32>
      %cst_61 = arith.constant dense<0.000000e+00> : vector<256xf32>
      %107 = vector.multi_reduction <add>, %106, %cst_61 [1] : vector<256x2xf32> to vector<256xf32>
      %108 = vector.shape_cast %107 : vector<256xf32> to vector<256x1xf32>
      %109 = vector.broadcast %108 : vector<256x1xf32> to vector<256x2xf32>
      %110 = arith.divf %106, %109 : vector<256x2xf32>
      %c0_62 = arith.constant 0 : index
      %c0_63 = arith.constant 0 : index
      %111 = vector.load %arg18[%c0_62, %c0_63] : memref<256x2xf32, #tpu.memory_space<vmem>>, vector<256x2xf32>
      tpu.vector_store %arg18[%c0_62, %c0_63], %110 {strides = array<i32>} : memref<256x2xf32, #tpu.memory_space<vmem>>, vector<256x2xf32>,
    } else {
    }
    %c0_10 = arith.constant 0 : index
    %c0_11 = arith.constant 0 : index
    %19 = vector.load %arg18[%c0_10, %c0_11] : memref<256x2xf32, #tpu.memory_space<vmem>>, vector<256x2xf32>
    %cst = arith.constant dense<0.000000e+00> : vector<256x2xf32>
    %20 = tpu.matmul %13, %14, %cst {dimension_numbers = #tpu.dot_dimension_numbers<[1], [0], [0], [1], [0, 0, 1, 1], [], []>} : vector<256x32xf32>, vector<32x2xf32>, vector<256x2xf32> -> vector<256x2xf32>
    %21 = vector.broadcast %15 : vector<1x2xf32> to vector<256x2xf32>
    %22 = arith.addf %20, %21 : vector<256x2xf32>
    %cst_12 = arith.constant dense<0xFF800000> : vector<256xf32>
    %23 = vector.multi_reduction <maximumf>, %22, %cst_12 [1] : vector<256x2xf32> to vector<256xf32>
    %24 = vector.shape_cast %23 : vector<256xf32> to vector<256x1xf32>
    %25 = vector.broadcast %24 : vector<256x1xf32> to vector<256x2xf32>
    %26 = arith.subf %22, %25 : vector<256x2xf32>
    %27 = math.exp %26 : vector<256x2xf32>
    %cst_13 = arith.constant dense<0.000000e+00> : vector<256xf32>
    %28 = vector.multi_reduction <add>, %27, %cst_13 [1] : vector<256x2xf32> to vector<256xf32>
    %29 = vector.shape_cast %28 : vector<256xf32> to vector<256x1xf32>
    %30 = vector.broadcast %29 : vector<256x1xf32> to vector<256x2xf32>
    %31 = arith.divf %27, %30 : vector<256x2xf32>
    %cst_14 = arith.constant dense<0.000000e+00> : vector<256x256xf32>
    %32 = tpu.matmul %19, %31, %cst_14 {dimension_numbers = #tpu.dot_dimension_numbers<[1], [1], [0], [0], [0, 0, 1, 0], [], []>} : vector<256x2xf32>, vector<256x2xf32>, vector<256x256xf32> -> vector<256x256xf32>
    %33 = math.exp %32 : vector<256x256xf32>
    %cst_15 = arith.constant dense<0.000000e+00> : vector<256xf32>
    %34 = vector.multi_reduction <add>, %33, %cst_15 [0] : vector<256x256xf32> to vector<256xf32>
    %35 = vector.shape_cast %34 : vector<256xf32> to vector<1x256xf32>
    %36 = tpu.reciprocal %35 {approx = true} : vector<1x256xf32> -> vector<1x256xf32>
    %37 = vector.broadcast %36 : vector<1x256xf32> to vector<256x256xf32>
    %38 = arith.mulf %33, %37 : vector<256x256xf32>
    %c0_16 = arith.constant 0 : index
    %c0_17 = arith.constant 0 : index
    %c0_18 = arith.constant 0 : index
    %c0_19 = arith.constant 0 : index
    %39 = vector.load %arg15[%c0_16, %c0_17, %c0_18, %c0_19] : memref<1x1x256x256xf32, #tpu.memory_space<vmem>>, vector<1x1x256x256xf32>
    %40 = vector.shape_cast %39 : vector<1x1x256x256xf32> to vector<256x256xf32>
    %41 = vector.shape_cast %38 : vector<256x256xf32> to vector<1x1x256x256xf32>
    tpu.vector_store %arg15[%c0_16, %c0_17, %c0_18, %c0_19], %41 {strides = array<i32>} : memref<1x1x256x256xf32, #tpu.memory_space<vmem>>, vector<1x1x256x256xf32>,
    %cst_20 = arith.constant dense<0.000000e+00> : vector<256xf32>
    %42 = vector.multi_reduction <add>, %33, %cst_20 [1] : vector<256x256xf32> to vector<256xf32>
    %43 = vector.shape_cast %42 : vector<256xf32> to vector<256x1xf32>
    %44 = tpu.reciprocal %43 {approx = true} : vector<256x1xf32> -> vector<256x1xf32>
    %45 = vector.broadcast %44 : vector<256x1xf32> to vector<256x256xf32>
    %46 = arith.mulf %33, %45 : vector<256x256xf32>
    %47 = arith.truncf %46 : vector<256x256xf32> to vector<256x256xbf16>
    %48 = arith.truncf %13 : vector<256x32xf32> to vector<256x32xbf16>
    %cst_21 = arith.constant dense<0.000000e+00> : vector<256x32xf32>
    %49 = tpu.matmul %47, %48, %cst_21 {dimension_numbers = #tpu.dot_dimension_numbers<[1], [0], [0], [1], [0, 0, 1, 1], [], []>} : vector<256x256xbf16>, vector<256x32xbf16>, vector<256x32xf32> -> vector<256x32xf32>
    %cst_22 = arith.constant dense<0.000000e+00> : vector<32xf32>
    %50 = vector.multi_reduction <add>, %13, %cst_22 [0] : vector<256x32xf32> to vector<32xf32>
    %51 = vector.shape_cast %50 : vector<32xf32> to vector<1x32xf32>
    %c0_23 = arith.constant 0 : index
    %c0_24 = arith.constant 0 : index
    %52 = vector.load %arg9[%c0_23, %c0_24] : memref<32x64xf32, #tpu.memory_space<vmem>>, vector<32x64xf32>
    %cst_25 = arith.constant dense<0.000000e+00> : vector<1x64xf32>
    %53 = tpu.matmul %51, %52, %cst_25 {dimension_numbers = #tpu.dot_dimension_numbers<[1], [0], [0], [1], [0, 0, 1, 1], [], []>} : vector<1x32xf32>, vector<32x64xf32>, vector<1x64xf32> -> vector<1x64xf32>
    %c0_26 = arith.constant 0 : index
    %c0_27 = arith.constant 0 : index
    %54 = vector.load %arg10[%c0_26, %c0_27] : memref<1x64xf32, #tpu.memory_space<vmem>>, vector<1x64xf32>
    %55 = arith.addf %53, %54 : vector<1x64xf32>
    %56 = arith.truncf %49 : vector<256x32xf32> to vector<256x32xbf16>
    %c0_28 = arith.constant 0 : index
    %c0_29 = arith.constant 0 : index
    %57 = vector.load %arg8[%c0_28, %c0_29] : memref<32x64xbf16, #tpu.memory_space<vmem>>, vector<32x64xbf16>
    %cst_30 = arith.constant dense<0.000000e+00> : vector<256x64xf32>
    %58 = tpu.matmul %56, %57, %cst_30 {dimension_numbers = #tpu.dot_dimension_numbers<[1], [0], [0], [1], [0, 0, 1, 1], [], []>} : vector<256x32xbf16>, vector<32x64xbf16>, vector<256x64xf32> -> vector<256x64xf32>
    %59 = vector.broadcast %55 : vector<1x64xf32> to vector<256x64xf32>
    %60 = arith.addf %58, %59 : vector<256x64xf32>
    %cst_31 = arith.constant 0.000000e+00 : f32
    %61 = vector.broadcast %cst_31 : f32 to vector<256x64xf32>
    %62 = arith.maximumf %60, %61 : vector<256x64xf32>
    %63 = arith.truncf %62 : vector<256x64xf32> to vector<256x64xbf16>
    %c0_32 = arith.constant 0 : index
    %c0_33 = arith.constant 0 : index
    %64 = vector.load %arg11[%c0_32, %c0_33] : memref<64x32xbf16, #tpu.memory_space<vmem>>, vector<64x32xbf16>
    %cst_34 = arith.constant dense<0.000000e+00> : vector<256x32xf32>
    %65 = tpu.matmul %63, %64, %cst_34 {dimension_numbers = #tpu.dot_dimension_numbers<[1], [0], [0], [1], [0, 0, 1, 1], [], []>} : vector<256x64xbf16>, vector<64x32xbf16>, vector<256x32xf32> -> vector<256x32xf32>
    %c0_35 = arith.constant 0 : index
    %c0_36 = arith.constant 0 : index
    %66 = vector.load %arg12[%c0_35, %c0_36] : memref<1x32xf32, #tpu.memory_space<vmem>>, vector<1x32xf32>
    %67 = vector.broadcast %66 : vector<1x32xf32> to vector<256x32xf32>
    %68 = arith.addf %65, %67 : vector<256x32xf32>
    %cst_37 = arith.constant 0.000000e+00 : f32
    %69 = vector.broadcast %cst_37 : f32 to vector<256x32xf32>
    %70 = arith.maximumf %68, %69 : vector<256x32xf32>
    %c0_38 = arith.constant 0 : index
    %c0_39 = arith.constant 0 : index
    %c0_40 = arith.constant 0 : index
    %71 = vector.load %arg4[%c0_38, %c0_39, %c0_40] : memref<1x256x1xf32, #tpu.memory_space<vmem>>, vector<1x256x1xf32>
    %72 = vector.shape_cast %71 : vector<1x256x1xf32> to vector<256x1xf32>
    %73 = arith.index_cast %10 : i32 to index
    %c0_41 = arith.constant 0 : index
    %c0_42 = arith.constant 0 : index
    %74 = vector.load %arg5[%73, %c0_41, %c0_42] : memref<4x1x256xf32, #tpu.memory_space<vmem>>, vector<1x1x256xf32>
    %75 = vector.shape_cast %74 : vector<1x1x256xf32> to vector<1x256xf32>
    %76 = vector.broadcast %72 : vector<256x1xf32> to vector<256x256xf32>
    %77 = vector.broadcast %75 : vector<1x256xf32> to vector<256x256xf32>
    %78 = arith.cmpf oeq, %76, %77 : vector<256x256xf32>
    %79 = arith.extui %78 : vector<256x256xi1> to vector<256x256xi32>
    %80 = arith.sitofp %79 : vector<256x256xi32> to vector<256x256xf32>
    %c0_43 = arith.constant 0 : index
    %c0_44 = arith.constant 0 : index
    %c0_45 = arith.constant 0 : index
    %c0_46 = arith.constant 0 : index
    %81 = vector.load %arg16[%c0_43, %c0_44, %c0_45, %c0_46] : memref<1x1x256x256xf32, #tpu.memory_space<vmem>>, vector<1x1x256x256xf32>
    %82 = vector.shape_cast %81 : vector<1x1x256x256xf32> to vector<256x256xf32>
    %83 = vector.shape_cast %80 : vector<256x256xf32> to vector<1x1x256x256xf32>
    tpu.vector_store %arg16[%c0_43, %c0_44, %c0_45, %c0_46], %83 {strides = array<i32>} : memref<1x1x256x256xf32, #tpu.memory_space<vmem>>, vector<1x1x256x256xf32>,
    %84 = arith.truncf %70 : vector<256x32xf32> to vector<256x32xbf16>
    %c0_47 = arith.constant 0 : index
    %c0_48 = arith.constant 0 : index
    %c0_49 = arith.constant 0 : index
    %85 = vector.load %arg13[%c0_47, %c0_48, %c0_49] : memref<1x32x128xbf16, #tpu.memory_space<vmem>>, vector<1x32x128xbf16>
    %86 = vector.shape_cast %85 : vector<1x32x128xbf16> to vector<32x128xbf16>
    %cst_50 = arith.constant dense<0.000000e+00> : vector<256x128xf32>
    %87 = tpu.matmul %84, %86, %cst_50 {dimension_numbers = #tpu.dot_dimension_numbers<[1], [0], [0], [1], [0, 0, 1, 1], [], []>} : vector<256x32xbf16>, vector<32x128xbf16>, vector<256x128xf32> -> vector<256x128xf32>
    %c0_i32_51 = arith.constant 0 : i32
    %88 = arith.cmpi eq, %arg1, %c0_i32_51 : i32
    %89 = arith.extui %88 : i1 to i32
    %c0_i32_52 = arith.constant 0 : i32
    %90 = arith.cmpi ne, %89, %c0_i32_52 : i32
    scf.if %90 {
      %c0_56 = arith.constant 0 : index
      %c0_57 = arith.constant 0 : index
      %c0_58 = arith.constant 0 : index
      %97 = vector.load %arg17[%c0_56, %c0_57, %c0_58] : memref<1x256x128xf32, #tpu.memory_space<vmem>>, vector<1x256x128xf32>
      %98 = vector.shape_cast %97 : vector<1x256x128xf32> to vector<256x128xf32>
      %99 = vector.shape_cast %87 : vector<256x128xf32> to vector<1x256x128xf32>
      tpu.vector_store %arg17[%c0_56, %c0_57, %c0_58], %99 {strides = array<i32>} : memref<1x256x128xf32, #tpu.memory_space<vmem>>, vector<1x256x128xf32>,
    } else {
    }
    %c0_i32_53 = arith.constant 0 : i32
    %91 = arith.cmpi ne, %arg1, %c0_i32_53 : i32
    %92 = arith.extui %91 : i1 to i32
    %c0_i32_54 = arith.constant 0 : i32
    %93 = arith.cmpi ne, %92, %c0_i32_54 : i32
    scf.if %93 {
      %c0_56 = arith.constant 0 : index
      %c0_57 = arith.constant 0 : index
      %c0_58 = arith.constant 0 : index
      %97 = vector.load %arg17[%c0_56, %c0_57, %c0_58] : memref<1x256x128xf32, #tpu.memory_space<vmem>>, vector<1x256x128xf32>
      %98 = vector.shape_cast %97 : vector<1x256x128xf32> to vector<256x128xf32>
      %99 = arith.addf %98, %87 : vector<256x128xf32>
      %c0_59 = arith.constant 0 : index
      %c0_60 = arith.constant 0 : index
      %c0_61 = arith.constant 0 : index
      %100 = vector.load %arg17[%c0_59, %c0_60, %c0_61] : memref<1x256x128xf32, #tpu.memory_space<vmem>>, vector<1x256x128xf32>
      %101 = vector.shape_cast %100 : vector<1x256x128xf32> to vector<256x128xf32>
      %102 = vector.shape_cast %99 : vector<256x128xf32> to vector<1x256x128xf32>
      tpu.vector_store %arg17[%c0_59, %c0_60, %c0_61], %102 {strides = array<i32>} : memref<1x256x128xf32, #tpu.memory_space<vmem>>, vector<1x256x128xf32>,
    } else {
    }
    %c3_i32 = arith.constant 3 : i32
    %94 = arith.cmpi eq, %arg1, %c3_i32 : i32
    %95 = arith.extui %94 : i1 to i32
    %c0_i32_55 = arith.constant 0 : i32
    %96 = arith.cmpi ne, %95, %c0_i32_55 : i32
    scf.if %96 {
      %c0_56 = arith.constant 0 : index
      %c0_57 = arith.constant 0 : index
      %c0_58 = arith.constant 0 : index
      %97 = vector.load %arg17[%c0_56, %c0_57, %c0_58] : memref<1x256x128xf32, #tpu.memory_space<vmem>>, vector<1x256x128xf32>
      %98 = vector.shape_cast %97 : vector<1x256x128xf32> to vector<256x128xf32>
      %c0_59 = arith.constant 0 : index
      %c0_60 = arith.constant 0 : index
      %99 = vector.load %arg14[%c0_59, %c0_60] : memref<1x128xf32, #tpu.memory_space<vmem>>, vector<1x128xf32>
      %100 = vector.broadcast %99 : vector<1x128xf32> to vector<256x128xf32>
      %101 = arith.addf %98, %100 : vector<256x128xf32>
      %cst_61 = arith.constant 0.000000e+00 : f32
      %102 = vector.broadcast %cst_61 : f32 to vector<256x128xf32>
      %103 = arith.maximumf %101, %102 : vector<256x128xf32>
      %c0_62 = arith.constant 0 : index
      %c0_63 = arith.constant 0 : index
      %c0_64 = arith.constant 0 : index
      %104 = vector.load %arg17[%c0_62, %c0_63, %c0_64] : memref<1x256x128xf32, #tpu.memory_space<vmem>>, vector<1x256x128xf32>
      %105 = vector.shape_cast %104 : vector<1x256x128xf32> to vector<256x128xf32>
      %106 = vector.shape_cast %103 : vector<256x128xf32> to vector<1x256x128xf32>
      tpu.vector_store %arg17[%c0_62, %c0_63, %c0_64], %106 {strides = array<i32>} : memref<1x256x128xf32, #tpu.memory_space<vmem>>, vector<1x256x128xf32>,
    } else {
    }
    return
  }
  func.func @transform_0(%arg0: i32, %arg1: i32) -> (i32, i32, i32) {
    %c0_i32 = arith.constant 0 : i32
    %c0_i32_0 = arith.constant 0 : i32
    %c0_i32_1 = arith.constant 0 : i32
    return %arg0, %c0_i32, %c0_i32_0 : i32, i32, i32
  }
  func.func @transform_1(%arg0: i32, %arg1: i32) -> (i32, i32, i32) {
    %c0_i32 = arith.constant 0 : i32
    %c0_i32_0 = arith.constant 0 : i32
    %c0_i32_1 = arith.constant 0 : i32
    %c0_i32_2 = arith.constant 0 : i32
    return %c0_i32, %c0_i32_0, %c0_i32_1 : i32, i32, i32
  }
  func.func @transform_2(%arg0: i32, %arg1: i32) -> (i32, i32, i32) {
    %c0_i32 = arith.constant 0 : i32
    %c0_i32_0 = arith.constant 0 : i32
    %c0_i32_1 = arith.constant 0 : i32
    return %arg0, %c0_i32, %c0_i32_0 : i32, i32, i32
  }
  func.func @transform_3(%arg0: i32, %arg1: i32) -> (i32, i32, i32) {
    %c0_i32 = arith.constant 0 : i32
    %c0_i32_0 = arith.constant 0 : i32
    %c0_i32_1 = arith.constant 0 : i32
    %c0_i32_2 = arith.constant 0 : i32
    return %c0_i32, %c0_i32_0, %c0_i32_1 : i32, i32, i32
  }
  func.func @transform_4(%arg0: i32, %arg1: i32) -> (i32, i32) {
    %c0_i32 = arith.constant 0 : i32
    %c0_i32_0 = arith.constant 0 : i32
    %c0_i32_1 = arith.constant 0 : i32
    return %c0_i32, %c0_i32_0 : i32, i32
  }
  func.func @transform_5(%arg0: i32, %arg1: i32) -> (i32, i32) {
    %c0_i32 = arith.constant 0 : i32
    %c0_i32_0 = arith.constant 0 : i32
    %c0_i32_1 = arith.constant 0 : i32
    return %c0_i32, %c0_i32_0 : i32, i32
  }
  func.func @transform_6(%arg0: i32, %arg1: i32) -> (i32, i32) {
    %c0_i32 = arith.constant 0 : i32
    %c0_i32_0 = arith.constant 0 : i32
    %c0_i32_1 = arith.constant 0 : i32
    return %c0_i32, %c0_i32_0 : i32, i32
  }
  func.func @transform_7(%arg0: i32, %arg1: i32) -> (i32, i32) {
    %c0_i32 = arith.constant 0 : i32
    %c0_i32_0 = arith.constant 0 : i32
    %c0_i32_1 = arith.constant 0 : i32
    return %c0_i32, %c0_i32_0 : i32, i32
  }
  func.func @transform_8(%arg0: i32, %arg1: i32) -> (i32, i32) {
    %c0_i32 = arith.constant 0 : i32
    %c0_i32_0 = arith.constant 0 : i32
    %c0_i32_1 = arith.constant 0 : i32
    return %c0_i32, %c0_i32_0 : i32, i32
  }
  func.func @transform_9(%arg0: i32, %arg1: i32) -> (i32, i32) {
    %c0_i32 = arith.constant 0 : i32
    %c0_i32_0 = arith.constant 0 : i32
    %c0_i32_1 = arith.constant 0 : i32
    return %c0_i32, %c0_i32_0 : i32, i32
  }
  func.func @transform_10(%arg0: i32, %arg1: i32) -> (i32, i32) {
    %c0_i32 = arith.constant 0 : i32
    %c0_i32_0 = arith.constant 0 : i32
    %c0_i32_1 = arith.constant 0 : i32
    return %c0_i32, %c0_i32_0 : i32, i32
  }
  func.func @transform_11(%arg0: i32, %arg1: i32) -> (i32, i32, i32) {
    %c0_i32 = arith.constant 0 : i32
    %c0_i32_0 = arith.constant 0 : i32
    %c0_i32_1 = arith.constant 0 : i32
    return %arg1, %c0_i32, %c0_i32_0 : i32, i32, i32
  }
  func.func @transform_12(%arg0: i32, %arg1: i32) -> (i32, i32) {
    %c0_i32 = arith.constant 0 : i32
    %c0_i32_0 = arith.constant 0 : i32
    %c0_i32_1 = arith.constant 0 : i32
    return %c0_i32, %c0_i32_0 : i32, i32
  }
  func.func @transform_13(%arg0: i32, %arg1: i32) -> (i32, i32, i32, i32) {
    %c0_i32 = arith.constant 0 : i32
    %c0_i32_0 = arith.constant 0 : i32
    %c0_i32_1 = arith.constant 0 : i32
    return %arg1, %arg0, %c0_i32, %c0_i32_0 : i32, i32, i32, i32
  }
  func.func @transform_14(%arg0: i32, %arg1: i32) -> (i32, i32, i32, i32) {
    %c0_i32 = arith.constant 0 : i32
    %c0_i32_0 = arith.constant 0 : i32
    %c0_i32_1 = arith.constant 0 : i32
    return %arg1, %arg0, %c0_i32, %c0_i32_0 : i32, i32, i32, i32
  }
  func.func @transform_15(%arg0: i32, %arg1: i32) -> (i32, i32, i32) {
    %c0_i32 = arith.constant 0 : i32
    %c0_i32_0 = arith.constant 0 : i32
    %c0_i32_1 = arith.constant 0 : i32
    return %arg0, %c0_i32, %c0_i32_0 : i32, i32, i32
  }
}

</mosaic_0001>

<llo_original>
// kernel: tpu_custom_call.1
$region0: #{tpu_custom_call.1}
  #allocation0 [shape = 'u32[]', space=smem, size = 0x4, offset = 0x4, fixed_abs, tag = 'smem constant byte address 0x4 - core index']
  #allocation1 [shape = 'u32[144,128]{1,0:T(1,128)}', space=vmem, size = 0x12000, scoped, tag = 'internal scratch']
  #allocation2 [shape = 'f32[256,2]{1,0:T(8,128)}', space=vmem, size = 0x20000, scoped, tag = 'scratch operand']
  %s0 = inlined_call_operand.vmem [shape: f32[2,256,32], index: 0, kind: input, shape index: {}]
  %s1 = inlined_call_operand.vmem [shape: f32[4,256,32], index: 1, kind: input, shape index: {}]
  %s2 = inlined_call_operand.vmem [shape: f32[2,256,1], index: 2, kind: input, shape index: {}]
  %s3 = inlined_call_operand.hbm [shape: f32[4,1,256], index: 3, kind: input, shape index: {}]
  %s4 = inlined_call_operand.vmem [shape: f32[32,2], index: 4, kind: input, shape index: {}]
  %s5 = inlined_call_operand.hbm [shape: f32[1,2], index: 5, kind: input, shape index: {}]
  %s6 = inlined_call_operand.hbm [shape: bf16[32,64], index: 6, kind: input, shape index: {}]
  %s7 = inlined_call_operand.hbm [shape: f32[32,64], index: 7, kind: input, shape index: {}]
  %s8 = inlined_call_operand.hbm [shape: f32[1,64], index: 8, kind: input, shape index: {}]
  %s9 = inlined_call_operand.vmem [shape: bf16[64,32], index: 9, kind: input, shape index: {}]
  %s10 = inlined_call_operand.hbm [shape: f32[1,32], index: 10, kind: input, shape index: {}]
  %s11 = inlined_call_operand.hbm [shape: bf16[4,32,128], index: 11, kind: input, shape index: {}]
  %s12 = inlined_call_operand.hbm [shape: f32[1,128], index: 12, kind: input, shape index: {}]
  %s13 = inlined_call_operand.hbm [shape: f32[4,2,256,256], index: 13, kind: output, shape index: {0}]
  %s14 = inlined_call_operand.hbm [shape: f32[4,2,256,256], index: 14, kind: output, shape index: {1}]
  %s15 = inlined_call_operand.hbm [shape: f32[2,256,128], index: 15, kind: output, shape index: {2}]
  %16 = xla_tuple %s13, %s14, %s15
  %s17 = sld [smem:[#allocation0]]
  $region149: #{tpu_custom_call.1} parent=0
    _
  %s19 = ssub.s32 1, %s17
  %s20 = scalar_select 0, %s19, %s17
  $region1: #{tpu_custom_call.1} parent=0
    #allocation3 [shape = 'u8[4096]{0}', space=vmem, size = 0x1000, scoped, tag = 'input window, operand 3, single buffered']
    #allocation4 [shape = 's32[2]{0}', space=sflag, size = 0x8, scoped, tag = 'scoped memory for tpu_custom_call.1']
    #allocation5 [shape = 's32[2]{0}', space=sflag, size = 0x8, scoped, tag = 'scoped memory for tpu_custom_call.1']
    #allocation6 [shape = 'u8[512]{0}', space=vmem, size = 0x400, scoped, tag = 'input window, operand 5, single buffered']
    #allocation7 [shape = 's32[1]{0}', space=sflag, size = 0x4, scoped, tag = 'scoped memory for tpu_custom_call.1']
    #allocation8 [shape = 'u8[8192]{0}', space=vmem, size = 0x2000, scoped, tag = 'input window, operand 6, single buffered']
    #allocation9 [shape = 'u8[16384]{0}', space=vmem, size = 0x4000, scoped, tag = 'input window, operand 7, single buffered']
    #allocation10 [shape = 's32[1]{0}', space=sflag, size = 0x4, scoped, tag = 'scoped memory for tpu_custom_call.1']
    #allocation11 [shape = 'u8[512]{0}', space=vmem, size = 0x400, scoped, tag = 'input window, operand 8, single buffered']
    #allocation12 [shape = 'u8[512]{0}', space=vmem, size = 0x400, scoped, tag = 'input window, operand 10, single buffered']
    #allocation13 [shape = 's32[1]{0}', space=sflag, size = 0x4, scoped, tag = 'scoped memory for tpu_custom_call.1']
    #allocation14 [shape = 'u8[16384]{0}', space=vmem, size = 0x4000, scoped, tag = 'input window, operand 11']
    #allocation15 [shape = 'u8[512]{0}', space=vmem, size = 0x400, scoped, tag = 'input window, operand 12, single buffered']
    #allocation16 [shape = 'u8[524288]{0}', space=vmem, size = 0x80000, scoped, tag = 'output window, operand 0']
    #allocation17 [shape = 'u8[524288]{0}', space=vmem, size = 0x80000, scoped, tag = 'output window, operand 1']
    #allocation18 [shape = 's32[2]{0}', space=sflag, size = 0x8, scoped, tag = 'scoped memory for tpu_custom_call.1']
    #allocation19 [shape = 'u8[262144]{0}', space=vmem, size = 0x40000, scoped, tag = 'output window, operand 2']
    %21 = vsyncpa [#allocation4], 0
    %22 = vsyncpa [#allocation7], 0
    %23 = vsyncpa [#allocation10], 0
    %24 = vsyncpa [#allocation13], 0
    %25 = vsyncpa [#allocation5], 0
    %s26 = scalar_lea.sflag [#allocation5], 1
    %27 = vsyncpa %s26, 0
    %28 = vsyncpa [#allocation18], 0
    %s29 = scalar_lea.sflag [#allocation18], 1
    %30 = vsyncpa %s29, 0
    loop: start=0, step=1, limit=10
    $region2: #{tpu_custom_call.1} parent=1 // loop_pre_header
      _
    $region3: #{tpu_custom_call.1} parent=1 // loop_header
      %s32 = sphi 0, %s36
      %p33 = scmp.ge.s32.totalorder %s32, 10
      %s39 = sphi 0, %s51
      %s40 = sphi 0, %s47
      %s41 = sphi 0, %s39
      %s42 = sphi 0, %s40
      %s43 = sphi 0, %s41
      %s44 = sphi 0, %s42
      %s54 = sphi 0, %s56
      %s57 = sphi 0, %s54
      %s58 = sphi 0, %s57
      %s74 = sphi 0, %s58
      %s78 = sphi 0, %s78
      %s80 = sphi 0, %s78
      %s81 = sphi 0, %s80
      %s95 = sphi 0, %s81
      %s101 = sphi 0, %s103
      %s104 = sphi 0, %s101
      %s105 = sphi 0, %s104
      %s121 = sphi 0, %s105
      %s125 = sphi 0, %s125
      %s127 = sphi 0, %s125
      %s128 = sphi 0, %s127
      %s142 = sphi 0, %s128
      %s146 = sphi 0, %s146
      %s148 = sphi 0, %s146
      %s149 = sphi 0, %s148
      %s163 = sphi 0, %s149
      %s167 = sphi 0, %s167
      %s169 = sphi 0, %s167
      %s170 = sphi 0, %s169
      %s184 = sphi 0, %s170
      %s188 = sphi 0, %s188
      %s190 = sphi 0, %s188
      %s191 = sphi 0, %s190
      %s205 = sphi 0, %s191
      %s209 = sphi 0, %s209
      %s211 = sphi 0, %s209
      %s212 = sphi 0, %s211
      %s226 = sphi 0, %s212
      %s230 = sphi 0, %s230
      %s232 = sphi 0, %s230
      %s233 = sphi 0, %s232
      %s247 = sphi 0, %s233
      %s251 = sphi 0, %s251
      %s253 = sphi 0, %s251
      %s254 = sphi 0, %s253
      %s268 = sphi 0, %s254
      %s272 = sphi 0, %s272
      %s274 = sphi 0, %s272
      %s275 = sphi 0, %s274
      %s289 = sphi 0, %s275
      %s295 = sphi 0, %s297
      %s298 = sphi 0, %s295
      %s299 = sphi 0, %s298
      %s315 = sphi 0, %s299
      %s319 = sphi 0, %s319
      %s321 = sphi 0, %s319
      %s322 = sphi 0, %s321
      %s336 = sphi 0, %s322
      %s344 = sphi 0, %s346
      %s347 = sphi 0, %s344
      %s348 = sphi 0, %s347
      %s364 = sphi 0, %s348
      %s372 = sphi 0, %s374
      %s375 = sphi 0, %s372
      %s376 = sphi 0, %s375
      %s392 = sphi 0, %s376
      %s398 = sphi 0, %s400
      %s401 = sphi 0, %s398
      %s402 = sphi 0, %s401
      %s418 = sphi 0, %s402
    $region4: #{tpu_custom_call.1} parent=1 // loop_header_branch
      %35 = sbr.rel (%p33) target = $region8
    $region5: #{tpu_custom_call.1} parent=1 // loop_body
      %s37 = ssub.s32 %s32, 1
      %s38 = ssub.s32 %s32, 2
      %s45 = sadd.s32 1, %s40
      %p46 = scmp.ge.s32.totalorder %s45, 4
      %s47 = scalar_select %p46, 0, %s45
      %s48 = sadd.s32 1, %s39
      %s49 = scalar_select %p46, %s48, %s39
      %p50 = scmp.ge.s32.totalorder %s49, 2
      %s51 = scalar_select %p50, 0, %s49
      %s52 = ssub.s32 %s39, %s51
      %p53 = scmp.eq.s32.totalorder %s52, 0
      %s55 = sadd.s32 %s54, 1
      %s56 = scalar_select %p53, %s54, %s55
      %p59 = pneg %p53
      %p60 = scmp.eq.s32.totalorder %s32, 7
      %p61 = por %p59, %p60
      %p62 = scmp.ne.s32.totalorder %s54, %s57
      %p63 = scmp.eq.s32.totalorder %s32, 0
      %p64 = por %p62, %p63
      %p65 = scmp.ne.s32.totalorder %s54, %s57
      %p66 = scmp.eq.s32.totalorder %s37, 7
      %p67 = por %p65, %p66
      %p68 = scmp.ne.s32.totalorder %s57, %s58
      %p69 = scmp.eq.s32.totalorder %s37, 0
      %p70 = por %p68, %p69
      %p71 = scmp.ne.s32.totalorder %s57, %s58
      %p72 = scmp.eq.s32.totalorder %s38, 7
      %p73 = por %p71, %p72
      %p75 = scmp.ne.s32.totalorder %s58, %s74
      %p76 = scmp.eq.s32.totalorder %s38, 0
      %p77 = por %p75, %p76
      %s79 = sadd.s32 %s78, 1
      %p82 = scmp.eq.s32.totalorder %s32, 7
      %p83 = scmp.ne.s32.totalorder %s78, %s80
      %p84 = scmp.eq.s32.totalorder %s32, 0
      %p85 = por %p83, %p84
      %p86 = scmp.ne.s32.totalorder %s78, %s80
      %p87 = scmp.eq.s32.totalorder %s37, 7
      %p88 = por %p86, %p87
      %p89 = scmp.ne.s32.totalorder %s80, %s81
      %p90 = scmp.eq.s32.totalorder %s37, 0
      %p91 = por %p89, %p90
      %p92 = scmp.ne.s32.totalorder %s80, %s81
      %p93 = scmp.eq.s32.totalorder %s38, 7
      %p94 = por %p92, %p93
      %p96 = scmp.ne.s32.totalorder %s81, %s95
      %p97 = scmp.eq.s32.totalorder %s38, 0
      %p98 = por %p96, %p97
      %s99 = ssub.s32 %s39, %s51
      %p100 = scmp.eq.s32.totalorder %s99, 0
      %s102 = sadd.s32 %s101, 1
      %s103 = scalar_select %p100, %s101, %s102
      %p106 = pneg %p100
      %p107 = scmp.eq.s32.totalorder %s32, 7
      %p108 = por %p106, %p107
      %p109 = scmp.ne.s32.totalorder %s101, %s104
      %p110 = scmp.eq.s32.totalorder %s32, 0
      %p111 = por %p109, %p110
      %p112 = scmp.ne.s32.totalorder %s101, %s104
      %p113 = scmp.eq.s32.totalorder %s37, 7
      %p114 = por %p112, %p113
      %p115 = scmp.ne.s32.totalorder %s104, %s105
      %p116 = scmp.eq.s32.totalorder %s37, 0
      %p117 = por %p115, %p116
      %p118 = scmp.ne.s32.totalorder %s104, %s105
      %p119 = scmp.eq.s32.totalorder %s38, 7
      %p120 = por %p118, %p119
      %p122 = scmp.ne.s32.totalorder %s105, %s121
      %p123 = scmp.eq.s32.totalorder %s38, 0
      %p124 = por %p122, %p123
      %s126 = sadd.s32 %s125, 1
      %p129 = scmp.eq.s32.totalorder %s32, 7
      %p130 = scmp.ne.s32.totalorder %s125, %s127
      %p131 = scmp.eq.s32.totalorder %s32, 0
      %p132 = por %p130, %p131
      %p133 = scmp.ne.s32.totalorder %s125, %s127
      %p134 = scmp.eq.s32.totalorder %s37, 7
      %p135 = por %p133, %p134
      %p136 = scmp.ne.s32.totalorder %s127, %s128
      %p137 = scmp.eq.s32.totalorder %s37, 0
      %p138 = por %p136, %p137
      %p139 = scmp.ne.s32.totalorder %s127, %s128
      %p140 = scmp.eq.s32.totalorder %s38, 7
      %p141 = por %p139, %p140
      %p143 = scmp.ne.s32.totalorder %s128, %s142
      %p144 = scmp.eq.s32.totalorder %s38, 0
      %p145 = por %p143, %p144
      %s147 = sadd.s32 %s146, 1
      %p150 = scmp.eq.s32.totalorder %s32, 7
      %p151 = scmp.ne.s32.totalorder %s146, %s148
      %p152 = scmp.eq.s32.totalorder %s32, 0
      %p153 = por %p151, %p152
      %p154 = scmp.ne.s32.totalorder %s146, %s148
      %p155 = scmp.eq.s32.totalorder %s37, 7
      %p156 = por %p154, %p155
      %p157 = scmp.ne.s32.totalorder %s148, %s149
      %p158 = scmp.eq.s32.totalorder %s37, 0
      %p159 = por %p157, %p158
      %p160 = scmp.ne.s32.totalorder %s148, %s149
      %p161 = scmp.eq.s32.totalorder %s38, 7
      %p162 = por %p160, %p161
      %p164 = scmp.ne.s32.totalorder %s149, %s163
      %p165 = scmp.eq.s32.totalorder %s38, 0
      %p166 = por %p164, %p165
      %s168 = sadd.s32 %s167, 1
      %p171 = scmp.eq.s32.totalorder %s32, 7
      %p172 = scmp.ne.s32.totalorder %s167, %s169
      %p173 = scmp.eq.s32.totalorder %s32, 0
      %p174 = por %p172, %p173
      %p175 = scmp.ne.s32.totalorder %s167, %s169
      %p176 = scmp.eq.s32.totalorder %s37, 7
      %p177 = por %p175, %p176
      %p178 = scmp.ne.s32.totalorder %s169, %s170
      %p179 = scmp.eq.s32.totalorder %s37, 0
      %p180 = por %p178, %p179
      %p181 = scmp.ne.s32.totalorder %s169, %s170
      %p182 = scmp.eq.s32.totalorder %s38, 7
      %p183 = por %p181, %p182
      %p185 = scmp.ne.s32.totalorder %s170, %s184
      %p186 = scmp.eq.s32.totalorder %s38, 0
      %p187 = por %p185, %p186
      %s189 = sadd.s32 %s188, 1
      %p192 = scmp.eq.s32.totalorder %s32, 7
      %p193 = scmp.ne.s32.totalorder %s188, %s190
      %p194 = scmp.eq.s32.totalorder %s32, 0
      %p195 = por %p193, %p194
      %p196 = scmp.ne.s32.totalorder %s188, %s190
      %p197 = scmp.eq.s32.totalorder %s37, 7
      %p198 = por %p196, %p197
      %p199 = scmp.ne.s32.totalorder %s190, %s191
      %p200 = scmp.eq.s32.totalorder %s37, 0
      %p201 = por %p199, %p200
      %p202 = scmp.ne.s32.totalorder %s190, %s191
      %p203 = scmp.eq.s32.totalorder %s38, 7
      %p204 = por %p202, %p203
      %p206 = scmp.ne.s32.totalorder %s191, %s205
      %p207 = scmp.eq.s32.totalorder %s38, 0
      %p208 = por %p206, %p207
      %s210 = sadd.s32 %s209, 1
      %p213 = scmp.eq.s32.totalorder %s32, 7
      %p214 = scmp.ne.s32.totalorder %s209, %s211
      %p215 = scmp.eq.s32.totalorder %s32, 0
      %p216 = por %p214, %p215
      %p217 = scmp.ne.s32.totalorder %s209, %s211
      %p218 = scmp.eq.s32.totalorder %s37, 7
      %p219 = por %p217, %p218
      %p220 = scmp.ne.s32.totalorder %s211, %s212
      %p221 = scmp.eq.s32.totalorder %s37, 0
      %p222 = por %p220, %p221
      %p223 = scmp.ne.s32.totalorder %s211, %s212
      %p224 = scmp.eq.s32.totalorder %s38, 7
      %p225 = por %p223, %p224
      %p227 = scmp.ne.s32.totalorder %s212, %s226
      %p228 = scmp.eq.s32.totalorder %s38, 0
      %p229 = por %p227, %p228
      %s231 = sadd.s32 %s230, 1
      %p234 = scmp.eq.s32.totalorder %s32, 7
      %p235 = scmp.ne.s32.totalorder %s230, %s232
      %p236 = scmp.eq.s32.totalorder %s32, 0
      %p237 = por %p235, %p236
      %p238 = scmp.ne.s32.totalorder %s230, %s232
      %p239 = scmp.eq.s32.totalorder %s37, 7
      %p240 = por %p238, %p239
      %p241 = scmp.ne.s32.totalorder %s232, %s233
      %p242 = scmp.eq.s32.totalorder %s37, 0
      %p243 = por %p241, %p242
      %p244 = scmp.ne.s32.totalorder %s232, %s233
      %p245 = scmp.eq.s32.totalorder %s38, 7
      %p246 = por %p244, %p245
      %p248 = scmp.ne.s32.totalorder %s233, %s247
      %p249 = scmp.eq.s32.totalorder %s38, 0
      %p250 = por %p248, %p249
      %s252 = sadd.s32 %s251, 1
      %p255 = scmp.eq.s32.totalorder %s32, 7
      %p256 = scmp.ne.s32.totalorder %s251, %s253
      %p257 = scmp.eq.s32.totalorder %s32, 0
      %p258 = por %p256, %p257
      %p259 = scmp.ne.s32.totalorder %s251, %s253
      %p260 = scmp.eq.s32.totalorder %s37, 7
      %p261 = por %p259, %p260
      %p262 = scmp.ne.s32.totalorder %s253, %s254
      %p263 = scmp.eq.s32.totalorder %s37, 0
      %p264 = por %p262, %p263
      %p265 = scmp.ne.s32.totalorder %s253, %s254
      %p266 = scmp.eq.s32.totalorder %s38, 7
      %p267 = por %p265, %p266
      %p269 = scmp.ne.s32.totalorder %s254, %s268
      %p270 = scmp.eq.s32.totalorder %s38, 0
      %p271 = por %p269, %p270
      %s273 = sadd.s32 %s272, 1
      %p276 = scmp.eq.s32.totalorder %s32, 7
      %p277 = scmp.ne.s32.totalorder %s272, %s274
      %p278 = scmp.eq.s32.totalorder %s32, 0
      %p279 = por %p277, %p278
      %p280 = scmp.ne.s32.totalorder %s272, %s274
      %p281 = scmp.eq.s32.totalorder %s37, 7
      %p282 = por %p280, %p281
      %p283 = scmp.ne.s32.totalorder %s274, %s275
      %p284 = scmp.eq.s32.totalorder %s37, 0
      %p285 = por %p283, %p284
      %p286 = scmp.ne.s32.totalorder %s274, %s275
      %p287 = scmp.eq.s32.totalorder %s38, 7
      %p288 = por %p286, %p287
      %p290 = scmp.ne.s32.totalorder %s275, %s289
      %p291 = scmp.eq.s32.totalorder %s38, 0
      %p292 = por %p290, %p291
      %s293 = ssub.s32 %s40, %s47
      %p294 = scmp.eq.s32.totalorder %s293, 0
      %s296 = sadd.s32 %s295, 1
      %s297 = scalar_select %p294, %s295, %s296
      %p300 = pneg %p294
      %p301 = scmp.eq.s32.totalorder %s32, 7
      %p302 = por %p300, %p301
      %p303 = scmp.ne.s32.totalorder %s295, %s298
      %p304 = scmp.eq.s32.totalorder %s32, 0
      %p305 = por %p303, %p304
      %p306 = scmp.ne.s32.totalorder %s295, %s298
      %p307 = scmp.eq.s32.totalorder %s37, 7
      %p308 = por %p306, %p307
      %p309 = scmp.ne.s32.totalorder %s298, %s299
      %p310 = scmp.eq.s32.totalorder %s37, 0
      %p311 = por %p309, %p310
      %p312 = scmp.ne.s32.totalorder %s298, %s299
      %p313 = scmp.eq.s32.totalorder %s38, 7
      %p314 = por %p312, %p313
      %p316 = scmp.ne.s32.totalorder %s299, %s315
      %p317 = scmp.eq.s32.totalorder %s38, 0
      %p318 = por %p316, %p317
      %s320 = sadd.s32 %s319, 1
      %p323 = scmp.eq.s32.totalorder %s32, 7
      %p324 = scmp.ne.s32.totalorder %s319, %s321
      %p325 = scmp.eq.s32.totalorder %s32, 0
      %p326 = por %p324, %p325
      %p327 = scmp.ne.s32.totalorder %s319, %s321
      %p328 = scmp.eq.s32.totalorder %s37, 7
      %p329 = por %p327, %p328
      %p330 = scmp.ne.s32.totalorder %s321, %s322
      %p331 = scmp.eq.s32.totalorder %s37, 0
      %p332 = por %p330, %p331
      %p333 = scmp.ne.s32.totalorder %s321, %s322
      %p334 = scmp.eq.s32.totalorder %s38, 7
      %p335 = por %p333, %p334
      %p337 = scmp.ne.s32.totalorder %s322, %s336
      %p338 = scmp.eq.s32.totalorder %s38, 0
      %p339 = por %p337, %p338
      %s340 = ssub.s32 %s40, %s47
      %s341 = ssub.s32 %s39, %s51
      %s342 = sor.u32 %s340, %s341
      %p343 = scmp.eq.s32.totalorder %s342, 0
      %s345 = sadd.s32 %s344, 1
      %s346 = scalar_select %p343, %s344, %s345
      %p349 = pneg %p343
      %p350 = scmp.eq.s32.totalorder %s32, 7
      %p351 = por %p349, %p350
      %p352 = scmp.ne.s32.totalorder %s344, %s347
      %p353 = scmp.eq.s32.totalorder %s32, 0
      %p354 = por %p352, %p353
      %p355 = scmp.ne.s32.totalorder %s344, %s347
      %p356 = scmp.eq.s32.totalorder %s37, 7
      %p357 = por %p355, %p356
      %p358 = scmp.ne.s32.totalorder %s347, %s348
      %p359 = scmp.eq.s32.totalorder %s37, 0
      %p360 = por %p358, %p359
      %p361 = scmp.ne.s32.totalorder %s347, %s348
      %p362 = scmp.eq.s32.totalorder %s38, 7
      %p363 = por %p361, %p362
      %p365 = scmp.ne.s32.totalorder %s348, %s364
      %p366 = scmp.eq.s32.totalorder %s38, 0
      %p367 = por %p365, %p366
      %s368 = ssub.s32 %s40, %s47
      %s369 = ssub.s32 %s39, %s51
      %s370 = sor.u32 %s368, %s369
      %p371 = scmp.eq.s32.totalorder %s370, 0
      %s373 = sadd.s32 %s372, 1
      %s374 = scalar_select %p371, %s372, %s373
      %p377 = pneg %p371
      %p378 = scmp.eq.s32.totalorder %s32, 7
      %p379 = por %p377, %p378
      %p380 = scmp.ne.s32.totalorder %s372, %s375
      %p381 = scmp.eq.s32.totalorder %s32, 0
      %p382 = por %p380, %p381
      %p383 = scmp.ne.s32.totalorder %s372, %s375
      %p384 = scmp.eq.s32.totalorder %s37, 7
      %p385 = por %p383, %p384
      %p386 = scmp.ne.s32.totalorder %s375, %s376
      %p387 = scmp.eq.s32.totalorder %s37, 0
      %p388 = por %p386, %p387
      %p389 = scmp.ne.s32.totalorder %s375, %s376
      %p390 = scmp.eq.s32.totalorder %s38, 7
      %p391 = por %p389, %p390
      %p393 = scmp.ne.s32.totalorder %s376, %s392
      %p394 = scmp.eq.s32.totalorder %s38, 0
      %p395 = por %p393, %p394
      %s396 = ssub.s32 %s39, %s51
      %p397 = scmp.eq.s32.totalorder %s396, 0
      %s399 = sadd.s32 %s398, 1
      %s400 = scalar_select %p397, %s398, %s399
      %p403 = pneg %p397
      %p404 = scmp.eq.s32.totalorder %s32, 7
      %p405 = por %p403, %p404
      %p406 = scmp.ne.s32.totalorder %s398, %s401
      %p407 = scmp.eq.s32.totalorder %s32, 0
      %p408 = por %p406, %p407
      %p409 = scmp.ne.s32.totalorder %s398, %s401
      %p410 = scmp.eq.s32.totalorder %s37, 7
      %p411 = por %p409, %p410
      %p412 = scmp.ne.s32.totalorder %s401, %s402
      %p413 = scmp.eq.s32.totalorder %s37, 0
      %p414 = por %p412, %p413
      %p415 = scmp.ne.s32.totalorder %s401, %s402
      %p416 = scmp.eq.s32.totalorder %s38, 7
      %p417 = por %p415, %p416
      %p419 = scmp.ne.s32.totalorder %s402, %s418
      %p420 = scmp.eq.s32.totalorder %s38, 0
      %p421 = por %p419, %p420
      %p422 = scmp.le.s32.totalorder 1, %s32
      %p423 = scmp.lt.s32.totalorder %s32, 9
      %p424 = pnand %p422, %p423
      %p425 = pneg %p424
      // Predicated region
      $region9: #{tpu_custom_call.1} parent=5 // pred_check
        _
      $region10: #{tpu_custom_call.1} parent=5 // pred_check_branch
        %427 = sbr.rel (%p424) target = $region12
      $region11: #{tpu_custom_call.1} parent=5 // pred_region
        %s428 = ssub.s32 %s32, 1
        // Predicated region
        $region13: #{tpu_custom_call.1} parent=11 // pred_check
          %p429 = pneg %p91
        $region14: #{tpu_custom_call.1} parent=11 // pred_check_branch
          %431 = sbr.rel (%p429) target = $region16
        $region15: #{tpu_custom_call.1} parent=11 // pred_region
          _
        $region16: #{tpu_custom_call.1} parent=11 // pred_fallthru
          _
        // Predicated region
        $region17: #{tpu_custom_call.1} parent=11 // pred_check
          %p432 = pneg %p138
        $region18: #{tpu_custom_call.1} parent=11 // pred_check_branch
          %434 = sbr.rel (%p432) target = $region20
        $region19: #{tpu_custom_call.1} parent=11 // pred_region
          %s436 = ssub.s32 128, 128
          %437 = vsyncadd [#allocation4], %s436
          %s438 = sshll.u32 [#allocation3], 4
          %s439 = int_to_ptr.vmem [resolvable:$true] %s438
          %444 = dma.hbm_to_vmem [thread:$0]  %s3, 128, %s439, [#allocation4], 32, 32, 2
        $region20: #{tpu_custom_call.1} parent=11 // pred_fallthru
          _
        // Predicated region
        $region21: #{tpu_custom_call.1} parent=11 // pred_check
          %p445 = pneg %p159
        $region22: #{tpu_custom_call.1} parent=11 // pred_check_branch
          %447 = sbr.rel (%p445) target = $region24
        $region23: #{tpu_custom_call.1} parent=11 // pred_region
          _
        $region24: #{tpu_custom_call.1} parent=11 // pred_fallthru
          _
        // Predicated region
        $region25: #{tpu_custom_call.1} parent=11 // pred_check
          %p448 = pneg %p180
        $region26: #{tpu_custom_call.1} parent=11 // pred_check_branch
          %450 = sbr.rel (%p448) target = $region28
        $region27: #{tpu_custom_call.1} parent=11 // pred_region
          %s452 = ssub.s32 16, 16
          %453 = vsyncadd [#allocation7], %s452
          %s455 = sshll.u32 [#allocation6], 4
          %s456 = int_to_ptr.vmem [resolvable:$true] %s455
          %458 = dma.hbm_to_vmem [thread:$0]  %s5, 16, %s456, [#allocation7]
        $region28: #{tpu_custom_call.1} parent=11 // pred_fallthru
          _
        // Predicated region
        $region29: #{tpu_custom_call.1} parent=11 // pred_check
          %p459 = pneg %p201
        $region30: #{tpu_custom_call.1} parent=11 // pred_check_branch
          %461 = sbr.rel (%p459) target = $region32
        $region31: #{tpu_custom_call.1} parent=11 // pred_region
          %s463 = ssub.s32 256, 256
          %464 = vsyncadd [#allocation7], %s463
          %s465 = sshll.u32 [#allocation8], 4
          %s466 = int_to_ptr.vmem [resolvable:$true] %s465
          %471 = dma.hbm_to_vmem [thread:$0]  %s6, 256, %s466, [#allocation7], 64, 64, 4
        $region32: #{tpu_custom_call.1} parent=11 // pred_fallthru
          _
        // Predicated region
        $region33: #{tpu_custom_call.1} parent=11 // pred_check
          %p472 = pneg %p222
        $region34: #{tpu_custom_call.1} parent=11 // pred_check_branch
          %474 = sbr.rel (%p472) target = $region36
        $region35: #{tpu_custom_call.1} parent=11 // pred_region
          %s476 = ssub.s32 512, 512
          %477 = vsyncadd [#allocation10], %s476
          %s478 = sshll.u32 [#allocation9], 4
          %s479 = int_to_ptr.vmem [resolvable:$true] %s478
          %484 = dma.hbm_to_vmem [thread:$0]  %s7, 512, %s479, [#allocation10], 128, 128, 8
        $region36: #{tpu_custom_call.1} parent=11 // pred_fallthru
          _
        // Predicated region
        $region37: #{tpu_custom_call.1} parent=11 // pred_check
          %p485 = pneg %p243
        $region38: #{tpu_custom_call.1} parent=11 // pred_check_branch
          %487 = sbr.rel (%p485) target = $region40
        $region39: #{tpu_custom_call.1} parent=11 // pred_region
          %s489 = ssub.s32 16, 16
          %490 = vsyncadd [#allocation10], %s489
          %s492 = sshll.u32 [#allocation11], 4
          %s493 = int_to_ptr.vmem [resolvable:$true] %s492
          %495 = dma.hbm_to_vmem [thread:$0]  %s8, 16, %s493, [#allocation10]
        $region40: #{tpu_custom_call.1} parent=11 // pred_fallthru
          _
        // Predicated region
        $region41: #{tpu_custom_call.1} parent=11 // pred_check
          %p496 = pneg %p264
        $region42: #{tpu_custom_call.1} parent=11 // pred_check_branch
          %498 = sbr.rel (%p496) target = $region44
        $region43: #{tpu_custom_call.1} parent=11 // pred_region
          _
        $region44: #{tpu_custom_call.1} parent=11 // pred_fallthru
          _
        // Predicated region
        $region45: #{tpu_custom_call.1} parent=11 // pred_check
          %p499 = pneg %p285
        $region46: #{tpu_custom_call.1} parent=11 // pred_check_branch
          %501 = sbr.rel (%p499) target = $region48
        $region47: #{tpu_custom_call.1} parent=11 // pred_region
          %s503 = ssub.s32 16, 16
          %504 = vsyncadd [#allocation13], %s503
          %s506 = sshll.u32 [#allocation12], 4
          %s507 = int_to_ptr.vmem [resolvable:$true] %s506
          %509 = dma.hbm_to_vmem [thread:$0]  %s10, 16, %s507, [#allocation13]
        $region48: #{tpu_custom_call.1} parent=11 // pred_fallthru
          _
        // Predicated region
        $region49: #{tpu_custom_call.1} parent=11 // pred_check
          %p510 = pneg %p332
        $region50: #{tpu_custom_call.1} parent=11 // pred_check_branch
          %512 = sbr.rel (%p510) target = $region52
        $region51: #{tpu_custom_call.1} parent=11 // pred_region
          %s514 = ssub.s32 16, 16
          %515 = vsyncadd [#allocation7], %s514
          %s517 = sshll.u32 [#allocation15], 4
          %s518 = int_to_ptr.vmem [resolvable:$true] %s517
          %520 = dma.hbm_to_vmem [thread:$0]  %s12, 16, %s518, [#allocation7]
        $region52: #{tpu_custom_call.1} parent=11 // pred_fallthru
          _
      $region12: #{tpu_custom_call.1} parent=5 // pred_fallthru
        _
      %p521 = scmp.lt.s32.totalorder %s32, 8
      // Predicated region
      $region53: #{tpu_custom_call.1} parent=5 // pred_check
        %p522 = pneg %p521
      $region54: #{tpu_custom_call.1} parent=5 // pred_check_branch
        %524 = sbr.rel (%p522) target = $region56
      $region55: #{tpu_custom_call.1} parent=5 // pred_region
        // Predicated region
        $region57: #{tpu_custom_call.1} parent=55 // pred_check
          %p525 = pneg %p64
        $region58: #{tpu_custom_call.1} parent=55 // pred_check_branch
          %527 = sbr.rel (%p525) target = $region60
        $region59: #{tpu_custom_call.1} parent=55 // pred_region
          %p528 = scmp.lt.s32.totalorder %s39, 1
          %s529 = scalar_select %p528, %s39, 1
          %s530 = smul.addr %s529, 32
          %s531 = smul.addr %s530, 8
          %s532 = scalar_lea.vmem %s0, %s531
        $region60: #{tpu_custom_call.1} parent=55 // pred_fallthru
          _
        // Predicated region
        $region61: #{tpu_custom_call.1} parent=55 // pred_check
          %p533 = pneg %p111
        $region62: #{tpu_custom_call.1} parent=55 // pred_check_branch
          %535 = sbr.rel (%p533) target = $region64
        $region63: #{tpu_custom_call.1} parent=55 // pred_region
          %p536 = scmp.lt.s32.totalorder %s39, 1
          %s537 = scalar_select %p536, %s39, 1
          %s538 = smul.addr %s537, 32
          %s539 = smul.addr %s538, 8
          %s540 = scalar_lea.vmem %s2, %s539
        $region64: #{tpu_custom_call.1} parent=55 // pred_fallthru
          _
        // Predicated region
        $region65: #{tpu_custom_call.1} parent=55 // pred_check
          %p541 = pneg %p305
        $region66: #{tpu_custom_call.1} parent=55 // pred_check_branch
          %543 = sbr.rel (%p541) target = $region68
        $region67: #{tpu_custom_call.1} parent=55 // pred_region
          %s544 = sand.u32 %s32, 1
          %s545 = scalar_lea.sflag [#allocation4], %s544
          %s546 = sand.u32 %s295, 1
          %s547 = smul.addr %s546, 16
          %s548 = scalar_lea.vmem [#allocation14], %s547
          %s550 = ssub.s32 256, 256
          %551 = vsyncadd %s545, %s550
          %s552 = smul.addr %s40, 4
          %s553 = smul.addr %s552, 64
          %s554 = scalar_lea.hbm %s11, %s553
          %s555 = sshll.u32 %s548, 4
          %s556 = int_to_ptr.vmem [resolvable:$true] %s555
          %561 = dma.hbm_to_vmem [thread:$0]  %s554, 256, %s556, %s545, 64, 64, 4
        $region68: #{tpu_custom_call.1} parent=55 // pred_fallthru
          _
      $region56: #{tpu_custom_call.1} parent=5 // pred_fallthru
        _
      %p562 = scmp.le.s32.totalorder 1, %s32
      %p563 = scmp.lt.s32.totalorder %s32, 9
      %p564 = pnand %p562, %p563
      %p565 = pneg %p564
      // Predicated region
      $region69: #{tpu_custom_call.1} parent=5 // pred_check
        _
      $region70: #{tpu_custom_call.1} parent=5 // pred_check_branch
        %567 = sbr.rel (%p564) target = $region72
      $region71: #{tpu_custom_call.1} parent=5 // pred_region
        %s568 = ssub.s32 %s32, 1
        // Predicated region
        $region73: #{tpu_custom_call.1} parent=71 // pred_check
          %p569 = pneg %p138
        $region74: #{tpu_custom_call.1} parent=71 // pred_check_branch
          %571 = sbr.rel (%p569) target = $region76
        $region75: #{tpu_custom_call.1} parent=71 // pred_region
          %572 = dma.done [#allocation4], 128
        $region76: #{tpu_custom_call.1} parent=71 // pred_fallthru
          _
        // Predicated region
        $region77: #{tpu_custom_call.1} parent=71 // pred_check
          %p573 = pneg %p180
        $region78: #{tpu_custom_call.1} parent=71 // pred_check_branch
          %575 = sbr.rel (%p573) target = $region80
        $region79: #{tpu_custom_call.1} parent=71 // pred_region
          %576 = dma.done [#allocation7], 16
        $region80: #{tpu_custom_call.1} parent=71 // pred_fallthru
          _
        // Predicated region
        $region81: #{tpu_custom_call.1} parent=71 // pred_check
          %p577 = pneg %p201
        $region82: #{tpu_custom_call.1} parent=71 // pred_check_branch
          %579 = sbr.rel (%p577) target = $region84
        $region83: #{tpu_custom_call.1} parent=71 // pred_region
          %580 = dma.done [#allocation7], 256
        $region84: #{tpu_custom_call.1} parent=71 // pred_fallthru
          _
        // Predicated region
        $region85: #{tpu_custom_call.1} parent=71 // pred_check
          %p581 = pneg %p222
        $region86: #{tpu_custom_call.1} parent=71 // pred_check_branch
          %583 = sbr.rel (%p581) target = $region88
        $region87: #{tpu_custom_call.1} parent=71 // pred_region
          %584 = dma.done [#allocation10], 512
        $region88: #{tpu_custom_call.1} parent=71 // pred_fallthru
          _
        // Predicated region
        $region89: #{tpu_custom_call.1} parent=71 // pred_check
          %p585 = pneg %p243
        $region90: #{tpu_custom_call.1} parent=71 // pred_check_branch
          %587 = sbr.rel (%p585) target = $region92
        $region91: #{tpu_custom_call.1} parent=71 // pred_region
          %588 = dma.done [#allocation10], 16
        $region92: #{tpu_custom_call.1} parent=71 // pred_fallthru
          _
        // Predicated region
        $region93: #{tpu_custom_call.1} parent=71 // pred_check
          %p589 = pneg %p285
        $region94: #{tpu_custom_call.1} parent=71 // pred_check_branch
          %591 = sbr.rel (%p589) target = $region96
        $region95: #{tpu_custom_call.1} parent=71 // pred_region
          %592 = dma.done [#allocation13], 16
        $region96: #{tpu_custom_call.1} parent=71 // pred_fallthru
          _
        %s593 = sand.u32 %s37, 1
        %s594 = scalar_lea.sflag [#allocation4], %s593
        %s595 = sand.u32 %s298, 1
        %s596 = smul.addr %s595, 16
        %s597 = scalar_lea.vmem [#allocation14], %s596
        // Predicated region
        $region97: #{tpu_custom_call.1} parent=71 // pred_check
          %p598 = pneg %p311
        $region98: #{tpu_custom_call.1} parent=71 // pred_check_branch
          %600 = sbr.rel (%p598) target = $region100
        $region99: #{tpu_custom_call.1} parent=71 // pred_region
          %601 = dma.done %s594, 256
        $region100: #{tpu_custom_call.1} parent=71 // pred_fallthru
          _
        // Predicated region
        $region101: #{tpu_custom_call.1} parent=71 // pred_check
          %p602 = pneg %p332
        $region102: #{tpu_custom_call.1} parent=71 // pred_check_branch
          %604 = sbr.rel (%p602) target = $region104
        $region103: #{tpu_custom_call.1} parent=71 // pred_region
          %605 = dma.done [#allocation7], 16
        $region104: #{tpu_custom_call.1} parent=71 // pred_fallthru
          _
        %p606 = scmp.lt.s32.totalorder %s41, 1
        %s607 = scalar_select %p606, %s41, 1
        %s608 = smul.addr %s607, 32
        %s609 = smul.addr %s608, 8
        %s610 = scalar_lea.vmem %s0, %s609
        %p611 = pneg %p70
        %p612 = pneg %p67
        %p613 = pneg %p91
        %p614 = pneg %p88
        %p615 = scmp.lt.s32.totalorder %s41, 1
        %s616 = scalar_select %p615, %s41, 1
        %s617 = smul.addr %s616, 32
        %s618 = smul.addr %s617, 8
        %s619 = scalar_lea.vmem %s2, %s618
        %p620 = pneg %p117
        %p621 = pneg %p114
        %p622 = pneg %p138
        %p623 = pneg %p135
        %p624 = pneg %p159
        %p625 = pneg %p156
        %p626 = pneg %p180
        %p627 = pneg %p177
        %p628 = pneg %p201
        %p629 = pneg %p198
        %p630 = pneg %p222
        %p631 = pneg %p219
        %p632 = pneg %p243
        %p633 = pneg %p240
        %p634 = pneg %p264
        %p635 = pneg %p261
        %p636 = pneg %p285
        %p637 = pneg %p282
        %s638 = sand.u32 %s37, 1
        %s639 = scalar_lea.sflag [#allocation4], %s638
        %s640 = sand.u32 %s298, 1
        %s641 = smul.addr %s640, 16
        %s642 = scalar_lea.vmem [#allocation14], %s641
        %p643 = pneg %p311
        %p644 = pneg %p308
        %p645 = pneg %p332
        %p646 = pneg %p329
        %p647 = pneg %p360
        %p648 = pneg %p357
        %s649 = sand.u32 %s347, 1
        %s650 = scalar_lea.sflag [#allocation5], %s649
        %s651 = sand.u32 %s347, 1
        %s652 = smul.addr %s651, 512
        %s653 = scalar_lea.vmem [#allocation16], %s652
        %p654 = pneg %p388
        %p655 = pneg %p385
        %s656 = sand.u32 %s37, 1
        %s657 = scalar_lea.sflag [#allocation18], %s656
        %s658 = sand.u32 %s375, 1
        %s659 = smul.addr %s658, 512
        %s660 = scalar_lea.vmem [#allocation17], %s659
        %p661 = pneg %p414
        %p662 = pneg %p411
        %s663 = sand.u32 %s37, 1
        %s664 = scalar_lea.sflag [#allocation18], %s663
        %s665 = sand.u32 %s401, 1
        %s666 = smul.addr %s665, 256
        %s667 = scalar_lea.vmem [#allocation19], %s666
        %p668 = scmp.lt.s32.totalorder %s41, 1
        %s669 = scalar_select %p668, %s41, 1
        %s670 = smul.addr %s669, 32
        %s671 = smul.addr %s670, 8
        %s672 = scalar_lea.vmem %s0, %s671
        %p673 = scmp.lt.s32.totalorder %s41, 1
        %s674 = scalar_select %p673, %s41, 1
        %s675 = smul.addr %s674, 32
        %s676 = smul.addr %s675, 8
        %s677 = scalar_lea.vmem %s2, %s676
        %s679 = sadd.s32 %s42, %s41
        %p680 = scmp.lt.s32.totalorder %s679, 0
        %s681 = ssub.s32 0, %s679
        %s682 = scalar_select %p680, %s681, %s679
        %s683 = sand.u32 %s682, 3
        %s684 = ssub.s32 0, %s683
        %s685 = scalar_select %p680, %s684, %s683
        %p686 = scmp.ne.s32.totalorder %s685, 0
        %p687 = scmp.lt.s32.totalorder %s685, 0
        %p688 = pnand %p687, %p686
        %p689 = pneg %p688
        %s690 = sadd.s32 %s685, 4
        %s691 = scalar_select %p689, %s690, %s685
        %s692 = smul.u32 %s691, 256
        %s693 = scalar_lea.vmem %s1, %s692
        %v694 = vld [vmem:[%s693] sm:$0xff]
        %v695 = vld [vmem:[%s693 + $0x8] sm:$0xff]
        %v696 = vld [vmem:[%s693 + $0x10] sm:$0xff]
        %v697 = vld [vmem:[%s693 + $0x18] sm:$0xff]
        %v698 = vld [vmem:[%s693 + $0x20] sm:$0xff]
        %v699 = vld [vmem:[%s693 + $0x28] sm:$0xff]
        %v700 = vld [vmem:[%s693 + $0x30] sm:$0xff]
        %v701 = vld [vmem:[%s693 + $0x38] sm:$0xff]
        %v702 = vld [vmem:[%s693 + $0x40] sm:$0xff]
        %v703 = vld [vmem:[%s693 + $0x48] sm:$0xff]
        %v704 = vld [vmem:[%s693 + $0x50] sm:$0xff]
        %v705 = vld [vmem:[%s693 + $0x58] sm:$0xff]
        %v706 = vld [vmem:[%s693 + $0x60] sm:$0xff]
        %v707 = vld [vmem:[%s693 + $0x68] sm:$0xff]
        %v708 = vld [vmem:[%s693 + $0x70] sm:$0xff]
        %v709 = vld [vmem:[%s693 + $0x78] sm:$0xff]
        %v710 = vld [vmem:[%s693 + $0x80] sm:$0xff]
        %v711 = vld [vmem:[%s693 + $0x88] sm:$0xff]
        %v712 = vld [vmem:[%s693 + $0x90] sm:$0xff]
        %v713 = vld [vmem:[%s693 + $0x98] sm:$0xff]
        %v714 = vld [vmem:[%s693 + $0xa0] sm:$0xff]
        %v715 = vld [vmem:[%s693 + $0xa8] sm:$0xff]
        %v716 = vld [vmem:[%s693 + $0xb0] sm:$0xff]
        %v717 = vld [vmem:[%s693 + $0xb8] sm:$0xff]
        %v718 = vld [vmem:[%s693 + $0xc0] sm:$0xff]
        %v719 = vld [vmem:[%s693 + $0xc8] sm:$0xff]
        %v720 = vld [vmem:[%s693 + $0xd0] sm:$0xff]
        %v721 = vld [vmem:[%s693 + $0xd8] sm:$0xff]
        %v722 = vld [vmem:[%s693 + $0xe0] sm:$0xff]
        %v723 = vld [vmem:[%s693 + $0xe8] sm:$0xff]
        %v724 = vld [vmem:[%s693 + $0xf0] sm:$0xff]
        %v725 = vld [vmem:[%s693 + $0xf8] sm:$0xff]
        %v726 = vld [vmem:[%s4] sm:$0xff]
        %v727 = vld [vmem:[%s4 + $0x8] sm:$0xff]
        %v728 = vld [vmem:[%s4 + $0x10] sm:$0xff]
        %v729 = vld [vmem:[%s4 + $0x18] sm:$0xff]
        %v730 = vld [vmem:[#allocation6] sm:$0x1]
        %p731 = scmp.eq.s32.totalorder %s42, 0
        // Predicated region
        $region105: #{tpu_custom_call.1} parent=71 // pred_check
          %p732 = pneg %p731
        $region106: #{tpu_custom_call.1} parent=71 // pred_check_branch
          %734 = sbr.rel (%p732) target = $region108
        $region107: #{tpu_custom_call.1} parent=71 // pred_region
          %v735 = vld [vmem:[%s672] sm:$0xff]
          %v736 = vld [vmem:[%s672 + $0x8] sm:$0xff]
          %v737 = vld [vmem:[%s672 + $0x10] sm:$0xff]
          %v738 = vld [vmem:[%s672 + $0x18] sm:$0xff]
          %v739 = vld [vmem:[%s672 + $0x20] sm:$0xff]
          %v740 = vld [vmem:[%s672 + $0x28] sm:$0xff]
          %v741 = vld [vmem:[%s672 + $0x30] sm:$0xff]
          %v742 = vld [vmem:[%s672 + $0x38] sm:$0xff]
          %v743 = vld [vmem:[%s672 + $0x40] sm:$0xff]
          %v744 = vld [vmem:[%s672 + $0x48] sm:$0xff]
          %v745 = vld [vmem:[%s672 + $0x50] sm:$0xff]
          %v746 = vld [vmem:[%s672 + $0x58] sm:$0xff]
          %v747 = vld [vmem:[%s672 + $0x60] sm:$0xff]
          %v748 = vld [vmem:[%s672 + $0x68] sm:$0xff]
          %v749 = vld [vmem:[%s672 + $0x70] sm:$0xff]
          %v750 = vld [vmem:[%s672 + $0x78] sm:$0xff]
          %v751 = vld [vmem:[%s672 + $0x80] sm:$0xff]
          %v752 = vld [vmem:[%s672 + $0x88] sm:$0xff]
          %v753 = vld [vmem:[%s672 + $0x90] sm:$0xff]
          %v754 = vld [vmem:[%s672 + $0x98] sm:$0xff]
          %v755 = vld [vmem:[%s672 + $0xa0] sm:$0xff]
          %v756 = vld [vmem:[%s672 + $0xa8] sm:$0xff]
          %v757 = vld [vmem:[%s672 + $0xb0] sm:$0xff]
          %v758 = vld [vmem:[%s672 + $0xb8] sm:$0xff]
          %v759 = vld [vmem:[%s672 + $0xc0] sm:$0xff]
          %v760 = vld [vmem:[%s672 + $0xc8] sm:$0xff]
          %v761 = vld [vmem:[%s672 + $0xd0] sm:$0xff]
          %v762 = vld [vmem:[%s672 + $0xd8] sm:$0xff]
          %v763 = vld [vmem:[%s672 + $0xe0] sm:$0xff]
          %v764 = vld [vmem:[%s672 + $0xe8] sm:$0xff]
          %v765 = vld [vmem:[%s672 + $0xf0] sm:$0xff]
          %v766 = vld [vmem:[%s672 + $0xf8] sm:$0xff]
          %v768 = vlaneseq
          %v769 = vshrl.u32 %v768, 7
          %v770 = vsub.s32 0, %v769
          %v771 = vrot.slane %v730, %v770
          %vm773 = vcmask 261120
          %v775 = vsel %vm773, %v735, 0
          %v778 = vsel %vm773, %v736, 0
          %v781 = vsel %vm773, %v737, 0
          %v784 = vsel %vm773, %v738, 0
          %v787 = vsel %vm773, %v739, 0
          %v790 = vsel %vm773, %v740, 0
          %v793 = vsel %vm773, %v741, 0
          %v796 = vsel %vm773, %v742, 0
          %v799 = vsel %vm773, %v743, 0
          %v802 = vsel %vm773, %v744, 0
          %v805 = vsel %vm773, %v745, 0
          %v808 = vsel %vm773, %v746, 0
          %v811 = vsel %vm773, %v747, 0
          %v814 = vsel %vm773, %v748, 0
          %v817 = vsel %vm773, %v749, 0
          %v820 = vsel %vm773, %v750, 0
          %v823 = vsel %vm773, %v751, 0
          %v826 = vsel %vm773, %v752, 0
          %v829 = vsel %vm773, %v753, 0
          %v832 = vsel %vm773, %v754, 0
          %v835 = vsel %vm773, %v755, 0
          %v838 = vsel %vm773, %v756, 0
          %v841 = vsel %vm773, %v757, 0
          %v844 = vsel %vm773, %v758, 0
          %v847 = vsel %vm773, %v759, 0
          %v850 = vsel %vm773, %v760, 0
          %v853 = vsel %vm773, %v761, 0
          %v856 = vsel %vm773, %v762, 0
          %v859 = vsel %vm773, %v763, 0
          %v862 = vsel %vm773, %v764, 0
          %v865 = vsel %vm773, %v765, 0
          %v868 = vsel %vm773, %v766, 0
          %870 = vmatprep.subr.mxu0 0.0
          %871 = vmatpush1.msra.mxu0 %v726
          %872 = vmatprep.subr.mxu0 0.0
          %873 = vmatpush1.msra.mxu0 %v727
          %874 = vmatprep.subr.mxu0 0.0
          %875 = vmatpush1.msra.mxu0 %v728
          %876 = vmatprep.subr.mxu0 0.0
          %877 = vmatpush1.msra.mxu0 %v729
          %878 = vmatprep.subr.mxu0 0.0
          %879 = vmatpush1.msra.mxu0 0.0
          %880 = vmatprep.subr.mxu0 0.0
          %881 = vmatpush1.msra.mxu0 0.0
          %882 = vmatprep.subr.mxu0 0.0
          %883 = vmatpush1.msra.mxu0 0.0
          %884 = vmatprep.subr.mxu0 0.0
          %885 = vmatpush1.msra.mxu0 0.0
          %886 = vmatprep.subr.mxu0 0.0
          %887 = vmatpush1.msra.mxu0 0.0
          %888 = vmatprep.subr.mxu0 0.0
          %889 = vmatpush1.msra.mxu0 0.0
          %890 = vmatprep.subr.mxu0 0.0
          %891 = vmatpush1.msra.mxu0 0.0
          %892 = vmatprep.subr.mxu0 0.0
          %893 = vmatpush1.msra.mxu0 0.0
          %894 = vmatprep.subr.mxu0 0.0
          %895 = vmatpush1.msra.mxu0 0.0
          %896 = vmatprep.subr.mxu0 0.0
          %897 = vmatpush1.msra.mxu0 0.0
          %898 = vmatprep.subr.mxu0 0.0
          %899 = vmatpush1.msra.mxu0 0.0
          %900 = vmatprep.subr.mxu0 0.0
          %901 = vmatpush1.msra.mxu0 0.0
          %902 = vmatprep.subr.mxu0 0.0
          %903 = vmatpush1.msra.mxu0 0.0
          %904 = vmatprep.subr.mxu0 0.0
          %905 = vmatpush1.msra.mxu0 0.0
          %906 = vmatprep.subr.mxu0 0.0
          %907 = vmatpush1.msra.mxu0 0.0
          %908 = vmatprep.subr.mxu0 0.0
          %909 = vmatpush1.msra.mxu0 0.0
          %910 = vmatprep.subr.mxu0 0.0
          %911 = vmatpush1.msra.mxu0 0.0
          %912 = vmatprep.subr.mxu0 0.0
          %913 = vmatpush1.msra.mxu0 0.0
          %914 = vmatprep.subr.mxu0 0.0
          %915 = vmatpush1.msra.mxu0 0.0
          %916 = vmatprep.subr.mxu0 0.0
          %917 = vmatpush1.msra.mxu0 0.0
          %918 = vmatprep.subr.mxu0 0.0
          %919 = vmatpush1.msra.mxu0 0.0
          %920 = vmatprep.subr.mxu0 0.0
          %921 = vmatpush1.msra.mxu0 0.0
          %922 = vmatprep.subr.mxu0 0.0
          %923 = vmatpush1.msra.mxu0 0.0
          %924 = vmatprep.subr.mxu0 0.0
          %925 = vmatpush1.msra.mxu0 0.0
          %926 = vmatprep.subr.mxu0 0.0
          %927 = vmatpush1.msra.mxu0 0.0
          %928 = vmatprep.subr.mxu0 0.0
          %929 = vmatpush1.msra.mxu0 0.0
          %930 = vmatprep.subr.mxu0 0.0
          %931 = vmatpush1.msra.mxu0 0.0
          %932 = vmatprep.subr.mxu0 0.0
          %933 = vmatpush1.msra.mxu0 0.0
          %934 = vmatprep.mubr.f32.mxu0 0.0
          %935 = vmatmul.mubr.f32.gmra.mrb[0].mxu0 %v775
          %v936 = vpop.f32.mrb[0].mxu0
          %v937 = vadd.f32 %v771, %v936
          %v938 = vpop.f32.mrb[0].mxu0
          %939 = vmatprep.mubr.f32.mxu0 0.0
          %940 = vmatmul.mubr.f32.gmra.mrb[0].mxu0 %v778
          %v941 = vpop.f32.mrb[0].mxu0
          %v942 = vadd.f32 %v771, %v941
          %v943 = vpop.f32.mrb[0].mxu0
          %944 = vmatprep.mubr.f32.mxu0 0.0
          %945 = vmatmul.mubr.f32.gmra.mrb[0].mxu0 %v781
          %v946 = vpop.f32.mrb[0].mxu0
          %v947 = vadd.f32 %v771, %v946
          %v948 = vpop.f32.mrb[0].mxu0
          %949 = vmatprep.mubr.f32.mxu0 0.0
          %950 = vmatmul.mubr.f32.gmra.mrb[0].mxu0 %v784
          %v951 = vpop.f32.mrb[0].mxu0
          %v952 = vadd.f32 %v771, %v951
          %v953 = vpop.f32.mrb[0].mxu0
          %954 = vmatprep.mubr.f32.mxu0 0.0
          %955 = vmatmul.mubr.f32.gmra.mrb[0].mxu0 %v787
          %v956 = vpop.f32.mrb[0].mxu0
          %v957 = vadd.f32 %v771, %v956
          %v958 = vpop.f32.mrb[0].mxu0
          %959 = vmatprep.mubr.f32.mxu0 0.0
          %960 = vmatmul.mubr.f32.gmra.mrb[0].mxu0 %v790
          %v961 = vpop.f32.mrb[0].mxu0
          %v962 = vadd.f32 %v771, %v961
          %v963 = vpop.f32.mrb[0].mxu0
          %964 = vmatprep.mubr.f32.mxu0 0.0
          %965 = vmatmul.mubr.f32.gmra.mrb[0].mxu0 %v793
          %v966 = vpop.f32.mrb[0].mxu0
          %v967 = vadd.f32 %v771, %v966
          %v968 = vpop.f32.mrb[0].mxu0
          %969 = vmatprep.mubr.f32.mxu0 0.0
          %970 = vmatmul.mubr.f32.gmra.mrb[0].mxu0 %v796
          %v971 = vpop.f32.mrb[0].mxu0
          %v972 = vadd.f32 %v771, %v971
          %v973 = vpop.f32.mrb[0].mxu0
          %974 = vmatprep.mubr.f32.mxu0 0.0
          %975 = vmatmul.mubr.f32.gmra.mrb[0].mxu0 %v799
          %v976 = vpop.f32.mrb[0].mxu0
          %v977 = vadd.f32 %v771, %v976
          %v978 = vpop.f32.mrb[0].mxu0
          %979 = vmatprep.mubr.f32.mxu0 0.0
          %980 = vmatmul.mubr.f32.gmra.mrb[0].mxu0 %v802
          %v981 = vpop.f32.mrb[0].mxu0
          %v982 = vadd.f32 %v771, %v981
          %v983 = vpop.f32.mrb[0].mxu0
          %984 = vmatprep.mubr.f32.mxu0 0.0
          %985 = vmatmul.mubr.f32.gmra.mrb[0].mxu0 %v805
          %v986 = vpop.f32.mrb[0].mxu0
          %v987 = vadd.f32 %v771, %v986
          %v988 = vpop.f32.mrb[0].mxu0
          %989 = vmatprep.mubr.f32.mxu0 0.0
          %990 = vmatmul.mubr.f32.gmra.mrb[0].mxu0 %v808
          %v991 = vpop.f32.mrb[0].mxu0
          %v992 = vadd.f32 %v771, %v991
          %v993 = vpop.f32.mrb[0].mxu0
          %994 = vmatprep.mubr.f32.mxu0 0.0
          %995 = vmatmul.mubr.f32.gmra.mrb[0].mxu0 %v811
          %v996 = vpop.f32.mrb[0].mxu0
          %v997 = vadd.f32 %v771, %v996
          %v998 = vpop.f32.mrb[0].mxu0
          %999 = vmatprep.mubr.f32.mxu0 0.0
          %1000 = vmatmul.mubr.f32.gmra.mrb[0].mxu0 %v814
          %v1001 = vpop.f32.mrb[0].mxu0
          %v1002 = vadd.f32 %v771, %v1001
          %v1003 = vpop.f32.mrb[0].mxu0
          %1004 = vmatprep.mubr.f32.mxu0 0.0
          %1005 = vmatmul.mubr.f32.gmra.mrb[0].mxu0 %v817
          %v1006 = vpop.f32.mrb[0].mxu0
          %v1007 = vadd.f32 %v771, %v1006
          %v1008 = vpop.f32.mrb[0].mxu0
          %1009 = vmatprep.mubr.f32.mxu0 0.0
          %1010 = vmatmul.mubr.f32.gmra.mrb[0].mxu0 %v820
          %v1011 = vpop.f32.mrb[0].mxu0
          %v1012 = vadd.f32 %v771, %v1011
          %v1013 = vpop.f32.mrb[0].mxu0
          %1014 = vmatprep.mubr.f32.mxu0 0.0
          %1015 = vmatmul.mubr.f32.gmra.mrb[0].mxu0 %v823
          %v1016 = vpop.f32.mrb[0].mxu0
          %v1017 = vadd.f32 %v771, %v1016
          %v1018 = vpop.f32.mrb[0].mxu0
          %1019 = vmatprep.mubr.f32.mxu0 0.0
          %1020 = vmatmul.mubr.f32.gmra.mrb[0].mxu0 %v826
          %v1021 = vpop.f32.mrb[0].mxu0
          %v1022 = vadd.f32 %v771, %v1021
          %v1023 = vpop.f32.mrb[0].mxu0
          %1024 = vmatprep.mubr.f32.mxu0 0.0
          %1025 = vmatmul.mubr.f32.gmra.mrb[0].mxu0 %v829
          %v1026 = vpop.f32.mrb[0].mxu0
          %v1027 = vadd.f32 %v771, %v1026
          %v1028 = vpop.f32.mrb[0].mxu0
          %1029 = vmatprep.mubr.f32.mxu0 0.0
          %1030 = vmatmul.mubr.f32.gmra.mrb[0].mxu0 %v832
          %v1031 = vpop.f32.mrb[0].mxu0
          %v1032 = vadd.f32 %v771, %v1031
          %v1033 = vpop.f32.mrb[0].mxu0
          %1034 = vmatprep.mubr.f32.mxu0 0.0
          %1035 = vmatmul.mubr.f32.gmra.mrb[0].mxu0 %v835
          %v1036 = vpop.f32.mrb[0].mxu0
          %v1037 = vadd.f32 %v771, %v1036
          %v1038 = vpop.f32.mrb[0].mxu0
          %1039 = vmatprep.mubr.f32.mxu0 0.0
          %1040 = vmatmul.mubr.f32.gmra.mrb[0].mxu0 %v838
          %v1041 = vpop.f32.mrb[0].mxu0
          %v1042 = vadd.f32 %v771, %v1041
          %v1043 = vpop.f32.mrb[0].mxu0
          %1044 = vmatprep.mubr.f32.mxu0 0.0
          %1045 = vmatmul.mubr.f32.gmra.mrb[0].mxu0 %v841
          %v1046 = vpop.f32.mrb[0].mxu0
          %v1047 = vadd.f32 %v771, %v1046
          %v1048 = vpop.f32.mrb[0].mxu0
          %1049 = vmatprep.mubr.f32.mxu0 0.0
          %1050 = vmatmul.mubr.f32.gmra.mrb[0].mxu0 %v844
          %v1051 = vpop.f32.mrb[0].mxu0
          %v1052 = vadd.f32 %v771, %v1051
          %v1053 = vpop.f32.mrb[0].mxu0
          %1054 = vmatprep.mubr.f32.mxu0 0.0
          %1055 = vmatmul.mubr.f32.gmra.mrb[0].mxu0 %v847
          %v1056 = vpop.f32.mrb[0].mxu0
          %v1057 = vadd.f32 %v771, %v1056
          %v1058 = vpop.f32.mrb[0].mxu0
          %1059 = vmatprep.mubr.f32.mxu0 0.0
          %1060 = vmatmul.mubr.f32.gmra.mrb[0].mxu0 %v850
          %v1061 = vpop.f32.mrb[0].mxu0
          %v1062 = vadd.f32 %v771, %v1061
          %v1063 = vpop.f32.mrb[0].mxu0
          %1064 = vmatprep.mubr.f32.mxu0 0.0
          %1065 = vmatmul.mubr.f32.gmra.mrb[0].mxu0 %v853
          %v1066 = vpop.f32.mrb[0].mxu0
          %v1067 = vadd.f32 %v771, %v1066
          %v1068 = vpop.f32.mrb[0].mxu0
          %1069 = vmatprep.mubr.f32.mxu0 0.0
          %1070 = vmatmul.mubr.f32.gmra.mrb[0].mxu0 %v856
          %v1071 = vpop.f32.mrb[0].mxu0
          %v1072 = vadd.f32 %v771, %v1071
          %v1073 = vpop.f32.mrb[0].mxu0
          %1074 = vmatprep.mubr.f32.mxu0 0.0
          %1075 = vmatmul.mubr.f32.gmra.mrb[0].mxu0 %v859
          %v1076 = vpop.f32.mrb[0].mxu0
          %v1077 = vadd.f32 %v771, %v1076
          %v1078 = vpop.f32.mrb[0].mxu0
          %1079 = vmatprep.mubr.f32.mxu0 0.0
          %1080 = vmatmul.mubr.f32.gmra.mrb[0].mxu0 %v862
          %v1081 = vpop.f32.mrb[0].mxu0
          %v1082 = vadd.f32 %v771, %v1081
          %v1083 = vpop.f32.mrb[0].mxu0
          %1084 = vmatprep.mubr.f32.mxu0 0.0
          %1085 = vmatmul.mubr.f32.gmra.mrb[0].mxu0 %v865
          %v1086 = vpop.f32.mrb[0].mxu0
          %v1087 = vadd.f32 %v771, %v1086
          %v1088 = vpop.f32.mrb[0].mxu0
          %1089 = vmatprep.mubr.f32.mxu0 0.0
          %1090 = vmatmul.mubr.f32.gmra.mrb[0].mxu0 %v868
          %v1091 = vpop.f32.mrb[0].mxu0
          %v1092 = vadd.f32 %v771, %v1091
          %v1093 = vpop.f32.mrb[0].mxu0
          %1094 = vdwg.mxu0
          %vm1095 = vcmask 15360
          %v1096 = vsel %vm1095, %v937, -inf
          %1097 = vmax.xlane.f32.xlu0 %v1096
          %v1098 = vpop.xlane.xlu0 %1097
          %v1099 = vsel %vm1095, %v942, -inf
          %1100 = vmax.xlane.f32.xlu0 %v1099
          %v1101 = vpop.xlane.xlu0 %1100
          %v1102 = vsel %vm1095, %v947, -inf
          %1103 = vmax.xlane.f32.xlu0 %v1102
          %v1104 = vpop.xlane.xlu0 %1103
          %v1105 = vsel %vm1095, %v952, -inf
          %1106 = vmax.xlane.f32.xlu0 %v1105
          %v1107 = vpop.xlane.xlu0 %1106
          %v1108 = vsel %vm1095, %v957, -inf
          %1109 = vmax.xlane.f32.xlu0 %v1108
          %v1110 = vpop.xlane.xlu0 %1109
          %v1111 = vsel %vm1095, %v962, -inf
          %1112 = vmax.xlane.f32.xlu0 %v1111
          %v1113 = vpop.xlane.xlu0 %1112
          %v1114 = vsel %vm1095, %v967, -inf
          %1115 = vmax.xlane.f32.xlu0 %v1114
          %v1116 = vpop.xlane.xlu0 %1115
          %v1117 = vsel %vm1095, %v972, -inf
          %1118 = vmax.xlane.f32.xlu0 %v1117
          %v1119 = vpop.xlane.xlu0 %1118
          %v1120 = vsel %vm1095, %v977, -inf
          %1121 = vmax.xlane.f32.xlu0 %v1120
          %v1122 = vpop.xlane.xlu0 %1121
          %v1123 = vsel %vm1095, %v982, -inf
          %1124 = vmax.xlane.f32.xlu0 %v1123
          %v1125 = vpop.xlane.xlu0 %1124
          %v1126 = vsel %vm1095, %v987, -inf
          %1127 = vmax.xlane.f32.xlu0 %v1126
          %v1128 = vpop.xlane.xlu0 %1127
          %v1129 = vsel %vm1095, %v992, -inf
          %1130 = vmax.xlane.f32.xlu0 %v1129
          %v1131 = vpop.xlane.xlu0 %1130
          %v1132 = vsel %vm1095, %v997, -inf
          %1133 = vmax.xlane.f32.xlu0 %v1132
          %v1134 = vpop.xlane.xlu0 %1133
          %v1135 = vsel %vm1095, %v1002, -inf
          %1136 = vmax.xlane.f32.xlu0 %v1135
          %v1137 = vpop.xlane.xlu0 %1136
          %v1138 = vsel %vm1095, %v1007, -inf
          %1139 = vmax.xlane.f32.xlu0 %v1138
          %v1140 = vpop.xlane.xlu0 %1139
          %v1141 = vsel %vm1095, %v1012, -inf
          %1142 = vmax.xlane.f32.xlu0 %v1141
          %v1143 = vpop.xlane.xlu0 %1142
          %v1144 = vsel %vm1095, %v1017, -inf
          %1145 = vmax.xlane.f32.xlu0 %v1144
          %v1146 = vpop.xlane.xlu0 %1145
          %v1147 = vsel %vm1095, %v1022, -inf
          %1148 = vmax.xlane.f32.xlu0 %v1147
          %v1149 = vpop.xlane.xlu0 %1148
          %v1150 = vsel %vm1095, %v1027, -inf
          %1151 = vmax.xlane.f32.xlu0 %v1150
          %v1152 = vpop.xlane.xlu0 %1151
          %v1153 = vsel %vm1095, %v1032, -inf
          %1154 = vmax.xlane.f32.xlu0 %v1153
          %v1155 = vpop.xlane.xlu0 %1154
          %v1156 = vsel %vm1095, %v1037, -inf
          %1157 = vmax.xlane.f32.xlu0 %v1156
          %v1158 = vpop.xlane.xlu0 %1157
          %v1159 = vsel %vm1095, %v1042, -inf
          %1160 = vmax.xlane.f32.xlu0 %v1159
          %v1161 = vpop.xlane.xlu0 %1160
          %v1162 = vsel %vm1095, %v1047, -inf
          %1163 = vmax.xlane.f32.xlu0 %v1162
          %v1164 = vpop.xlane.xlu0 %1163
          %v1165 = vsel %vm1095, %v1052, -inf
          %1166 = vmax.xlane.f32.xlu0 %v1165
          %v1167 = vpop.xlane.xlu0 %1166
          %v1168 = vsel %vm1095, %v1057, -inf
          %1169 = vmax.xlane.f32.xlu0 %v1168
          %v1170 = vpop.xlane.xlu0 %1169
          %v1171 = vsel %vm1095, %v1062, -inf
          %1172 = vmax.xlane.f32.xlu0 %v1171
          %v1173 = vpop.xlane.xlu0 %1172
          %v1174 = vsel %vm1095, %v1067, -inf
          %1175 = vmax.xlane.f32.xlu0 %v1174
          %v1176 = vpop.xlane.xlu0 %1175
          %v1177 = vsel %vm1095, %v1072, -inf
          %1178 = vmax.xlane.f32.xlu0 %v1177
          %v1179 = vpop.xlane.xlu0 %1178
          %v1180 = vsel %vm1095, %v1077, -inf
          %1181 = vmax.xlane.f32.xlu0 %v1180
          %v1182 = vpop.xlane.xlu0 %1181
          %v1183 = vsel %vm1095, %v1082, -inf
          %1184 = vmax.xlane.f32.xlu0 %v1183
          %v1185 = vpop.xlane.xlu0 %1184
          %v1186 = vsel %vm1095, %v1087, -inf
          %1187 = vmax.xlane.f32.xlu0 %v1186
          %v1188 = vpop.xlane.xlu0 %1187
          %v1189 = vsel %vm1095, %v1092, -inf
          %1190 = vmax.xlane.f32.xlu0 %v1189
          %v1191 = vpop.xlane.xlu0 %1190
          %v1192 = vsub.f32 %v937, %v1098
          %v1193 = vsub.f32 %v942, %v1101
          %v1194 = vsub.f32 %v947, %v1104
          %v1195 = vsub.f32 %v952, %v1107
          %v1196 = vsub.f32 %v957, %v1110
          %v1197 = vsub.f32 %v962, %v1113
          %v1198 = vsub.f32 %v967, %v1116
          %v1199 = vsub.f32 %v972, %v1119
          %v1200 = vsub.f32 %v977, %v1122
          %v1201 = vsub.f32 %v982, %v1125
          %v1202 = vsub.f32 %v987, %v1128
          %v1203 = vsub.f32 %v992, %v1131
          %v1204 = vsub.f32 %v997, %v1134
          %v1205 = vsub.f32 %v1002, %v1137
          %v1206 = vsub.f32 %v1007, %v1140
          %v1207 = vsub.f32 %v1012, %v1143
          %v1208 = vsub.f32 %v1017, %v1146
          %v1209 = vsub.f32 %v1022, %v1149
          %v1210 = vsub.f32 %v1027, %v1152
          %v1211 = vsub.f32 %v1032, %v1155
          %v1212 = vsub.f32 %v1037, %v1158
          %v1213 = vsub.f32 %v1042, %v1161
          %v1214 = vsub.f32 %v1047, %v1164
          %v1215 = vsub.f32 %v1052, %v1167
          %v1216 = vsub.f32 %v1057, %v1170
          %v1217 = vsub.f32 %v1062, %v1173
          %v1218 = vsub.f32 %v1067, %v1176
          %v1219 = vsub.f32 %v1072, %v1179
          %v1220 = vsub.f32 %v1077, %v1182
          %v1221 = vsub.f32 %v1082, %v1185
          %v1222 = vsub.f32 %v1087, %v1188
          %v1223 = vsub.f32 %v1092, %v1191
          %v1224 = vmul.f32 %v1192, 1.442695
          %v1225 = vpow.pop %v1224
          %v1226 = vmul.f32 %v1193, 1.442695
          %v1227 = vpow.pop %v1226
          %v1228 = vmul.f32 %v1194, 1.442695
          %v1229 = vpow.pop %v1228
          %v1230 = vmul.f32 %v1195, 1.442695
          %v1231 = vpow.pop %v1230
          %v1232 = vmul.f32 %v1196, 1.442695
          %v1233 = vpow.pop %v1232
          %v1234 = vmul.f32 %v1197, 1.442695
          %v1235 = vpow.pop %v1234
          %v1236 = vmul.f32 %v1198, 1.442695
          %v1237 = vpow.pop %v1236
          %v1238 = vmul.f32 %v1199, 1.442695
          %v1239 = vpow.pop %v1238
          %v1240 = vmul.f32 %v1200, 1.442695
          %v1241 = vpow.pop %v1240
          %v1242 = vmul.f32 %v1201, 1.442695
          %v1243 = vpow.pop %v1242
          %v1244 = vmul.f32 %v1202, 1.442695
          %v1245 = vpow.pop %v1244
          %v1246 = vmul.f32 %v1203, 1.442695
          %v1247 = vpow.pop %v1246
          %v1248 = vmul.f32 %v1204, 1.442695
          %v1249 = vpow.pop %v1248
          %v1250 = vmul.f32 %v1205, 1.442695
          %v1251 = vpow.pop %v1250
          %v1252 = vmul.f32 %v1206, 1.442695
          %v1253 = vpow.pop %v1252
          %v1254 = vmul.f32 %v1207, 1.442695
          %v1255 = vpow.pop %v1254
          %v1256 = vmul.f32 %v1208, 1.442695
          %v1257 = vpow.pop %v1256
          %v1258 = vmul.f32 %v1209, 1.442695
          %v1259 = vpow.pop %v1258
          %v1260 = vmul.f32 %v1210, 1.442695
          %v1261 = vpow.pop %v1260
          %v1262 = vmul.f32 %v1211, 1.442695
          %v1263 = vpow.pop %v1262
          %v1264 = vmul.f32 %v1212, 1.442695
          %v1265 = vpow.pop %v1264
          %v1266 = vmul.f32 %v1213, 1.442695
          %v1267 = vpow.pop %v1266
          %v1268 = vmul.f32 %v1214, 1.442695
          %v1269 = vpow.pop %v1268
          %v1270 = vmul.f32 %v1215, 1.442695
          %v1271 = vpow.pop %v1270
          %v1272 = vmul.f32 %v1216, 1.442695
          %v1273 = vpow.pop %v1272
          %v1274 = vmul.f32 %v1217, 1.442695
          %v1275 = vpow.pop %v1274
          %v1276 = vmul.f32 %v1218, 1.442695
          %v1277 = vpow.pop %v1276
          %v1278 = vmul.f32 %v1219, 1.442695
          %v1279 = vpow.pop %v1278
          %v1280 = vmul.f32 %v1220, 1.442695
          %v1281 = vpow.pop %v1280
          %v1282 = vmul.f32 %v1221, 1.442695
          %v1283 = vpow.pop %v1282
          %v1284 = vmul.f32 %v1222, 1.442695
          %v1285 = vpow.pop %v1284
          %v1286 = vmul.f32 %v1223, 1.442695
          %v1287 = vpow.pop %v1286
          %v1288 = vsel %vm1095, %v1225, 0.0
          %1289 = vadd.xlane.f32.xlu0 %v1288
          %v1290 = vpop.xlane.xlu0 %1289
          %v1291 = vsel %vm1095, %v1227, 0.0
          %1292 = vadd.xlane.f32.xlu0 %v1291
          %v1293 = vpop.xlane.xlu0 %1292
          %v1294 = vsel %vm1095, %v1229, 0.0
          %1295 = vadd.xlane.f32.xlu0 %v1294
          %v1296 = vpop.xlane.xlu0 %1295
          %v1297 = vsel %vm1095, %v1231, 0.0
          %1298 = vadd.xlane.f32.xlu0 %v1297
          %v1299 = vpop.xlane.xlu0 %1298
          %v1300 = vsel %vm1095, %v1233, 0.0
          %1301 = vadd.xlane.f32.xlu0 %v1300
          %v1302 = vpop.xlane.xlu0 %1301
          %v1303 = vsel %vm1095, %v1235, 0.0
          %1304 = vadd.xlane.f32.xlu0 %v1303
          %v1305 = vpop.xlane.xlu0 %1304
          %v1306 = vsel %vm1095, %v1237, 0.0
          %1307 = vadd.xlane.f32.xlu0 %v1306
          %v1308 = vpop.xlane.xlu0 %1307
          %v1309 = vsel %vm1095, %v1239, 0.0
          %1310 = vadd.xlane.f32.xlu0 %v1309
          %v1311 = vpop.xlane.xlu0 %1310
          %v1312 = vsel %vm1095, %v1241, 0.0
          %1313 = vadd.xlane.f32.xlu0 %v1312
          %v1314 = vpop.xlane.xlu0 %1313
          %v1315 = vsel %vm1095, %v1243, 0.0
          %1316 = vadd.xlane.f32.xlu0 %v1315
          %v1317 = vpop.xlane.xlu0 %1316
          %v1318 = vsel %vm1095, %v1245, 0.0
          %1319 = vadd.xlane.f32.xlu0 %v1318
          %v1320 = vpop.xlane.xlu0 %1319
          %v1321 = vsel %vm1095, %v1247, 0.0
          %1322 = vadd.xlane.f32.xlu0 %v1321
          %v1323 = vpop.xlane.xlu0 %1322
          %v1324 = vsel %vm1095, %v1249, 0.0
          %1325 = vadd.xlane.f32.xlu0 %v1324
          %v1326 = vpop.xlane.xlu0 %1325
          %v1327 = vsel %vm1095, %v1251, 0.0
          %1328 = vadd.xlane.f32.xlu0 %v1327
          %v1329 = vpop.xlane.xlu0 %1328
          %v1330 = vsel %vm1095, %v1253, 0.0
          %1331 = vadd.xlane.f32.xlu0 %v1330
          %v1332 = vpop.xlane.xlu0 %1331
          %v1333 = vsel %vm1095, %v1255, 0.0
          %1334 = vadd.xlane.f32.xlu0 %v1333
          %v1335 = vpop.xlane.xlu0 %1334
          %v1336 = vsel %vm1095, %v1257, 0.0
          %1337 = vadd.xlane.f32.xlu0 %v1336
          %v1338 = vpop.xlane.xlu0 %1337
          %v1339 = vsel %vm1095, %v1259, 0.0
          %1340 = vadd.xlane.f32.xlu0 %v1339
          %v1341 = vpop.xlane.xlu0 %1340
          %v1342 = vsel %vm1095, %v1261, 0.0
          %1343 = vadd.xlane.f32.xlu0 %v1342
          %v1344 = vpop.xlane.xlu0 %1343
          %v1345 = vsel %vm1095, %v1263, 0.0
          %1346 = vadd.xlane.f32.xlu0 %v1345
          %v1347 = vpop.xlane.xlu0 %1346
          %v1348 = vsel %vm1095, %v1265, 0.0
          %1349 = vadd.xlane.f32.xlu0 %v1348
          %v1350 = vpop.xlane.xlu0 %1349
          %v1351 = vsel %vm1095, %v1267, 0.0
          %1352 = vadd.xlane.f32.xlu0 %v1351
          %v1353 = vpop.xlane.xlu0 %1352
          %v1354 = vsel %vm1095, %v1269, 0.0
          %1355 = vadd.xlane.f32.xlu0 %v1354
          %v1356 = vpop.xlane.xlu0 %1355
          %v1357 = vsel %vm1095, %v1271, 0.0
          %1358 = vadd.xlane.f32.xlu0 %v1357
          %v1359 = vpop.xlane.xlu0 %1358
          %v1360 = vsel %vm1095, %v1273, 0.0
          %1361 = vadd.xlane.f32.xlu0 %v1360
          %v1362 = vpop.xlane.xlu0 %1361
          %v1363 = vsel %vm1095, %v1275, 0.0
          %1364 = vadd.xlane.f32.xlu0 %v1363
          %v1365 = vpop.xlane.xlu0 %1364
          %v1366 = vsel %vm1095, %v1277, 0.0
          %1367 = vadd.xlane.f32.xlu0 %v1366
          %v1368 = vpop.xlane.xlu0 %1367
          %v1369 = vsel %vm1095, %v1279, 0.0
          %1370 = vadd.xlane.f32.xlu0 %v1369
          %v1371 = vpop.xlane.xlu0 %1370
          %v1372 = vsel %vm1095, %v1281, 0.0
          %1373 = vadd.xlane.f32.xlu0 %v1372
          %v1374 = vpop.xlane.xlu0 %1373
          %v1375 = vsel %vm1095, %v1283, 0.0
          %1376 = vadd.xlane.f32.xlu0 %v1375
          %v1377 = vpop.xlane.xlu0 %1376
          %v1378 = vsel %vm1095, %v1285, 0.0
          %1379 = vadd.xlane.f32.xlu0 %v1378
          %v1380 = vpop.xlane.xlu0 %1379
          %v1381 = vsel %vm1095, %v1287, 0.0
          %1382 = vadd.xlane.f32.xlu0 %v1381
          %v1383 = vpop.xlane.xlu0 %1382
          %v1384 = vrcp.pop %v1290
          %v1385 = vmul.f32 %v1225, %v1384
          %v1386 = vrcp.pop %v1293
          %v1387 = vmul.f32 %v1227, %v1386
          %v1388 = vrcp.pop %v1296
          %v1389 = vmul.f32 %v1229, %v1388
          %v1390 = vrcp.pop %v1299
          %v1391 = vmul.f32 %v1231, %v1390
          %v1392 = vrcp.pop %v1302
          %v1393 = vmul.f32 %v1233, %v1392
          %v1394 = vrcp.pop %v1305
          %v1395 = vmul.f32 %v1235, %v1394
          %v1396 = vrcp.pop %v1308
          %v1397 = vmul.f32 %v1237, %v1396
          %v1398 = vrcp.pop %v1311
          %v1399 = vmul.f32 %v1239, %v1398
          %v1400 = vrcp.pop %v1314
          %v1401 = vmul.f32 %v1241, %v1400
          %v1402 = vrcp.pop %v1317
          %v1403 = vmul.f32 %v1243, %v1402
          %v1404 = vrcp.pop %v1320
          %v1405 = vmul.f32 %v1245, %v1404
          %v1406 = vrcp.pop %v1323
          %v1407 = vmul.f32 %v1247, %v1406
          %v1408 = vrcp.pop %v1326
          %v1409 = vmul.f32 %v1249, %v1408
          %v1410 = vrcp.pop %v1329
          %v1411 = vmul.f32 %v1251, %v1410
          %v1412 = vrcp.pop %v1332
          %v1413 = vmul.f32 %v1253, %v1412
          %v1414 = vrcp.pop %v1335
          %v1415 = vmul.f32 %v1255, %v1414
          %v1416 = vrcp.pop %v1338
          %v1417 = vmul.f32 %v1257, %v1416
          %v1418 = vrcp.pop %v1341
          %v1419 = vmul.f32 %v1259, %v1418
          %v1420 = vrcp.pop %v1344
          %v1421 = vmul.f32 %v1261, %v1420
          %v1422 = vrcp.pop %v1347
          %v1423 = vmul.f32 %v1263, %v1422
          %v1424 = vrcp.pop %v1350
          %v1425 = vmul.f32 %v1265, %v1424
          %v1426 = vrcp.pop %v1353
          %v1427 = vmul.f32 %v1267, %v1426
          %v1428 = vrcp.pop %v1356
          %v1429 = vmul.f32 %v1269, %v1428
          %v1430 = vrcp.pop %v1359
          %v1431 = vmul.f32 %v1271, %v1430
          %v1432 = vrcp.pop %v1362
          %v1433 = vmul.f32 %v1273, %v1432
          %v1434 = vrcp.pop %v1365
          %v1435 = vmul.f32 %v1275, %v1434
          %v1436 = vrcp.pop %v1368
          %v1437 = vmul.f32 %v1277, %v1436
          %v1438 = vrcp.pop %v1371
          %v1439 = vmul.f32 %v1279, %v1438
          %v1440 = vrcp.pop %v1374
          %v1441 = vmul.f32 %v1281, %v1440
          %v1442 = vrcp.pop %v1377
          %v1443 = vmul.f32 %v1283, %v1442
          %v1444 = vrcp.pop %v1380
          %v1445 = vmul.f32 %v1285, %v1444
          %v1446 = vrcp.pop %v1383
          %v1447 = vmul.f32 %v1287, %v1446
          %1448 = vst.msk [vmem:[#allocation2] sm:$0xff] %vm1095, %v1385
          %1449 = vst.msk [vmem:[#allocation2 + $0x8] sm:$0xff] %vm1095, %v1387
          %1450 = vst.msk [vmem:[#allocation2 + $0x10] sm:$0xff] %vm1095, %v1389
          %1451 = vst.msk [vmem:[#allocation2 + $0x18] sm:$0xff] %vm1095, %v1391
          %1452 = vst.msk [vmem:[#allocation2 + $0x20] sm:$0xff] %vm1095, %v1393
          %1453 = vst.msk [vmem:[#allocation2 + $0x28] sm:$0xff] %vm1095, %v1395
          %1454 = vst.msk [vmem:[#allocation2 + $0x30] sm:$0xff] %vm1095, %v1397
          %1455 = vst.msk [vmem:[#allocation2 + $0x38] sm:$0xff] %vm1095, %v1399
          %1456 = vst.msk [vmem:[#allocation2 + $0x40] sm:$0xff] %vm1095, %v1401
          %1457 = vst.msk [vmem:[#allocation2 + $0x48] sm:$0xff] %vm1095, %v1403
          %1458 = vst.msk [vmem:[#allocation2 + $0x50] sm:$0xff] %vm1095, %v1405
          %1459 = vst.msk [vmem:[#allocation2 + $0x58] sm:$0xff] %vm1095, %v1407
          %1460 = vst.msk [vmem:[#allocation2 + $0x60] sm:$0xff] %vm1095, %v1409
          %1461 = vst.msk [vmem:[#allocation2 + $0x68] sm:$0xff] %vm1095, %v1411
          %1462 = vst.msk [vmem:[#allocation2 + $0x70] sm:$0xff] %vm1095, %v1413
          %1463 = vst.msk [vmem:[#allocation2 + $0x78] sm:$0xff] %vm1095, %v1415
          %1464 = vst.msk [vmem:[#allocation2 + $0x80] sm:$0xff] %vm1095, %v1417
          %1465 = vst.msk [vmem:[#allocation2 + $0x88] sm:$0xff] %vm1095, %v1419
          %1466 = vst.msk [vmem:[#allocation2 + $0x90] sm:$0xff] %vm1095, %v1421
          %1467 = vst.msk [vmem:[#allocation2 + $0x98] sm:$0xff] %vm1095, %v1423
          %1468 = vst.msk [vmem:[#allocation2 + $0xa0] sm:$0xff] %vm1095, %v1425
          %1469 = vst.msk [vmem:[#allocation2 + $0xa8] sm:$0xff] %vm1095, %v1427
          %1470 = vst.msk [vmem:[#allocation2 + $0xb0] sm:$0xff] %vm1095, %v1429
          %1471 = vst.msk [vmem:[#allocation2 + $0xb8] sm:$0xff] %vm1095, %v1431
          %1472 = vst.msk [vmem:[#allocation2 + $0xc0] sm:$0xff] %vm1095, %v1433
          %1473 = vst.msk [vmem:[#allocation2 + $0xc8] sm:$0xff] %vm1095, %v1435
          %1474 = vst.msk [vmem:[#allocation2 + $0xd0] sm:$0xff] %vm1095, %v1437
          %1475 = vst.msk [vmem:[#allocation2 + $0xd8] sm:$0xff] %vm1095, %v1439
          %1476 = vst.msk [vmem:[#allocation2 + $0xe0] sm:$0xff] %vm1095, %v1441
          %1477 = vst.msk [vmem:[#allocation2 + $0xe8] sm:$0xff] %vm1095, %v1443
          %1478 = vst.msk [vmem:[#allocation2 + $0xf0] sm:$0xff] %vm1095, %v1445
          %1479 = vst.msk [vmem:[#allocation2 + $0xf8] sm:$0xff] %vm1095, %v1447
        $region108: #{tpu_custom_call.1} parent=71 // pred_fallthru
          _
        %v1480 = vld [vmem:[#allocation2] sm:$0xff]
        %v1481 = vld [vmem:[#allocation2 + $0x8] sm:$0xff]
        %v1482 = vld [vmem:[#allocation2 + $0x10] sm:$0xff]
        %v1483 = vld [vmem:[#allocation2 + $0x18] sm:$0xff]
        %v1484 = vld [vmem:[#allocation2 + $0x20] sm:$0xff]
        %v1485 = vld [vmem:[#allocation2 + $0x28] sm:$0xff]
        %v1486 = vld [vmem:[#allocation2 + $0x30] sm:$0xff]
        %v1487 = vld [vmem:[#allocation2 + $0x38] sm:$0xff]
        %v1488 = vld [vmem:[#allocation2 + $0x40] sm:$0xff]
        %v1489 = vld [vmem:[#allocation2 + $0x48] sm:$0xff]
        %v1490 = vld [vmem:[#allocation2 + $0x50] sm:$0xff]
        %v1491 = vld [vmem:[#allocation2 + $0x58] sm:$0xff]
        %v1492 = vld [vmem:[#allocation2 + $0x60] sm:$0xff]
        %v1493 = vld [vmem:[#allocation2 + $0x68] sm:$0xff]
        %v1494 = vld [vmem:[#allocation2 + $0x70] sm:$0xff]
        %v1495 = vld [vmem:[#allocation2 + $0x78] sm:$0xff]
        %v1496 = vld [vmem:[#allocation2 + $0x80] sm:$0xff]
        %v1497 = vld [vmem:[#allocation2 + $0x88] sm:$0xff]
        %v1498 = vld [vmem:[#allocation2 + $0x90] sm:$0xff]
        %v1499 = vld [vmem:[#allocation2 + $0x98] sm:$0xff]
        %v1500 = vld [vmem:[#allocation2 + $0xa0] sm:$0xff]
        %v1501 = vld [vmem:[#allocation2 + $0xa8] sm:$0xff]
        %v1502 = vld [vmem:[#allocation2 + $0xb0] sm:$0xff]
        %v1503 = vld [vmem:[#allocation2 + $0xb8] sm:$0xff]
        %v1504 = vld [vmem:[#allocation2 + $0xc0] sm:$0xff]
        %v1505 = vld [vmem:[#allocation2 + $0xc8] sm:$0xff]
        %v1506 = vld [vmem:[#allocation2 + $0xd0] sm:$0xff]
        %v1507 = vld [vmem:[#allocation2 + $0xd8] sm:$0xff]
        %v1508 = vld [vmem:[#allocation2 + $0xe0] sm:$0xff]
        %v1509 = vld [vmem:[#allocation2 + $0xe8] sm:$0xff]
        %v1510 = vld [vmem:[#allocation2 + $0xf0] sm:$0xff]
        %v1511 = vld [vmem:[#allocation2 + $0xf8] sm:$0xff]
        %v1513 = vlaneseq
        %v1514 = vshrl.u32 %v1513, 7
        %v1515 = vsub.s32 0, %v1514
        %v1516 = vrot.slane %v730, %v1515
        %vm1518 = vcmask 261120
        %v1520 = vsel %vm1518, %v694, 0
        %v1523 = vsel %vm1518, %v695, 0
        %v1526 = vsel %vm1518, %v696, 0
        %v1529 = vsel %vm1518, %v697, 0
        %v1532 = vsel %vm1518, %v698, 0
        %v1535 = vsel %vm1518, %v699, 0
        %v1538 = vsel %vm1518, %v700, 0
        %v1541 = vsel %vm1518, %v701, 0
        %v1544 = vsel %vm1518, %v702, 0
        %v1547 = vsel %vm1518, %v703, 0
        %v1550 = vsel %vm1518, %v704, 0
        %v1553 = vsel %vm1518, %v705, 0
        %v1556 = vsel %vm1518, %v706, 0
        %v1559 = vsel %vm1518, %v707, 0
        %v1562 = vsel %vm1518, %v708, 0
        %v1565 = vsel %vm1518, %v709, 0
        %v1568 = vsel %vm1518, %v710, 0
        %v1571 = vsel %vm1518, %v711, 0
        %v1574 = vsel %vm1518, %v712, 0
        %v1577 = vsel %vm1518, %v713, 0
        %v1580 = vsel %vm1518, %v714, 0
        %v1583 = vsel %vm1518, %v715, 0
        %v1586 = vsel %vm1518, %v716, 0
        %v1589 = vsel %vm1518, %v717, 0
        %v1592 = vsel %vm1518, %v718, 0
        %v1595 = vsel %vm1518, %v719, 0
        %v1598 = vsel %vm1518, %v720, 0
        %v1601 = vsel %vm1518, %v721, 0
        %v1604 = vsel %vm1518, %v722, 0
        %v1607 = vsel %vm1518, %v723, 0
        %v1610 = vsel %vm1518, %v724, 0
        %v1613 = vsel %vm1518, %v725, 0
        %1615 = vmatprep.subr.mxu0 0.0
        %1616 = vmatpush1.msra.mxu0 %v726
        %1617 = vmatprep.subr.mxu0 0.0
        %1618 = vmatpush1.msra.mxu0 %v727
        %1619 = vmatprep.subr.mxu0 0.0
        %1620 = vmatpush1.msra.mxu0 %v728
        %1621 = vmatprep.subr.mxu0 0.0
        %1622 = vmatpush1.msra.mxu0 %v729
        %1623 = vmatprep.subr.mxu0 0.0
        %1624 = vmatpush1.msra.mxu0 0.0
        %1625 = vmatprep.subr.mxu0 0.0
        %1626 = vmatpush1.msra.mxu0 0.0
        %1627 = vmatprep.subr.mxu0 0.0
        %1628 = vmatpush1.msra.mxu0 0.0
        %1629 = vmatprep.subr.mxu0 0.0
        %1630 = vmatpush1.msra.mxu0 0.0
        %1631 = vmatprep.subr.mxu0 0.0
        %1632 = vmatpush1.msra.mxu0 0.0
        %1633 = vmatprep.subr.mxu0 0.0
        %1634 = vmatpush1.msra.mxu0 0.0
        %1635 = vmatprep.subr.mxu0 0.0
        %1636 = vmatpush1.msra.mxu0 0.0
        %1637 = vmatprep.subr.mxu0 0.0
        %1638 = vmatpush1.msra.mxu0 0.0
        %1639 = vmatprep.subr.mxu0 0.0
        %1640 = vmatpush1.msra.mxu0 0.0
        %1641 = vmatprep.subr.mxu0 0.0
        %1642 = vmatpush1.msra.mxu0 0.0
        %1643 = vmatprep.subr.mxu0 0.0
        %1644 = vmatpush1.msra.mxu0 0.0
        %1645 = vmatprep.subr.mxu0 0.0
        %1646 = vmatpush1.msra.mxu0 0.0
        %1647 = vmatprep.subr.mxu0 0.0
        %1648 = vmatpush1.msra.mxu0 0.0
        %1649 = vmatprep.subr.mxu0 0.0
        %1650 = vmatpush1.msra.mxu0 0.0
        %1651 = vmatprep.subr.mxu0 0.0
        %1652 = vmatpush1.msra.mxu0 0.0
        %1653 = vmatprep.subr.mxu0 0.0
        %1654 = vmatpush1.msra.mxu0 0.0
        %1655 = vmatprep.subr.mxu0 0.0
        %1656 = vmatpush1.msra.mxu0 0.0
        %1657 = vmatprep.subr.mxu0 0.0
        %1658 = vmatpush1.msra.mxu0 0.0
        %1659 = vmatprep.subr.mxu0 0.0
        %1660 = vmatpush1.msra.mxu0 0.0
        %1661 = vmatprep.subr.mxu0 0.0
        %1662 = vmatpush1.msra.mxu0 0.0
        %1663 = vmatprep.subr.mxu0 0.0
        %1664 = vmatpush1.msra.mxu0 0.0
        %1665 = vmatprep.subr.mxu0 0.0
        %1666 = vmatpush1.msra.mxu0 0.0
        %1667 = vmatprep.subr.mxu0 0.0
        %1668 = vmatpush1.msra.mxu0 0.0
        %1669 = vmatprep.subr.mxu0 0.0
        %1670 = vmatpush1.msra.mxu0 0.0
        %1671 = vmatprep.subr.mxu0 0.0
        %1672 = vmatpush1.msra.mxu0 0.0
        %1673 = vmatprep.subr.mxu0 0.0
        %1674 = vmatpush1.msra.mxu0 0.0
        %1675 = vmatprep.subr.mxu0 0.0
        %1676 = vmatpush1.msra.mxu0 0.0
        %1677 = vmatprep.subr.mxu0 0.0
        %1678 = vmatpush1.msra.mxu0 0.0
        %1679 = vmatprep.mubr.f32.mxu0 0.0
        %1680 = vmatmul.mubr.f32.gmra.mrb[0].mxu0 %v1520
        %v1681 = vpop.f32.mrb[0].mxu0
        %v1682 = vadd.f32 %v1516, %v1681
        %v1683 = vpop.f32.mrb[0].mxu0
        %1684 = vmatprep.mubr.f32.mxu0 0.0
        %1685 = vmatmul.mubr.f32.gmra.mrb[0].mxu0 %v1523
        %v1686 = vpop.f32.mrb[0].mxu0
        %v1687 = vadd.f32 %v1516, %v1686
        %v1688 = vpop.f32.mrb[0].mxu0
        %1689 = vmatprep.mubr.f32.mxu0 0.0
        %1690 = vmatmul.mubr.f32.gmra.mrb[0].mxu0 %v1526
        %v1691 = vpop.f32.mrb[0].mxu0
        %v1692 = vadd.f32 %v1516, %v1691
        %v1693 = vpop.f32.mrb[0].mxu0
        %1694 = vmatprep.mubr.f32.mxu0 0.0
        %1695 = vmatmul.mubr.f32.gmra.mrb[0].mxu0 %v1529
        %v1696 = vpop.f32.mrb[0].mxu0
        %v1697 = vadd.f32 %v1516, %v1696
        %v1698 = vpop.f32.mrb[0].mxu0
        %1699 = vmatprep.mubr.f32.mxu0 0.0
        %1700 = vmatmul.mubr.f32.gmra.mrb[0].mxu0 %v1532
        %v1701 = vpop.f32.mrb[0].mxu0
        %v1702 = vadd.f32 %v1516, %v1701
        %v1703 = vpop.f32.mrb[0].mxu0
        %1704 = vmatprep.mubr.f32.mxu0 0.0
        %1705 = vmatmul.mubr.f32.gmra.mrb[0].mxu0 %v1535
        %v1706 = vpop.f32.mrb[0].mxu0
        %v1707 = vadd.f32 %v1516, %v1706
        %v1708 = vpop.f32.mrb[0].mxu0
        %1709 = vmatprep.mubr.f32.mxu0 0.0
        %1710 = vmatmul.mubr.f32.gmra.mrb[0].mxu0 %v1538
        %v1711 = vpop.f32.mrb[0].mxu0
        %v1712 = vadd.f32 %v1516, %v1711
        %v1713 = vpop.f32.mrb[0].mxu0
        %1714 = vmatprep.mubr.f32.mxu0 0.0
        %1715 = vmatmul.mubr.f32.gmra.mrb[0].mxu0 %v1541
        %v1716 = vpop.f32.mrb[0].mxu0
        %v1717 = vadd.f32 %v1516, %v1716
        %v1718 = vpop.f32.mrb[0].mxu0
        %1719 = vmatprep.mubr.f32.mxu0 0.0
        %1720 = vmatmul.mubr.f32.gmra.mrb[0].mxu0 %v1544
        %v1721 = vpop.f32.mrb[0].mxu0
        %v1722 = vadd.f32 %v1516, %v1721
        %v1723 = vpop.f32.mrb[0].mxu0
        %1724 = vmatprep.mubr.f32.mxu0 0.0
        %1725 = vmatmul.mubr.f32.gmra.mrb[0].mxu0 %v1547
        %v1726 = vpop.f32.mrb[0].mxu0
        %v1727 = vadd.f32 %v1516, %v1726
        %v1728 = vpop.f32.mrb[0].mxu0
        %1729 = vmatprep.mubr.f32.mxu0 0.0
        %1730 = vmatmul.mubr.f32.gmra.mrb[0].mxu0 %v1550
        %v1731 = vpop.f32.mrb[0].mxu0
        %v1732 = vadd.f32 %v1516, %v1731
        %v1733 = vpop.f32.mrb[0].mxu0
        %1734 = vmatprep.mubr.f32.mxu0 0.0
        %1735 = vmatmul.mubr.f32.gmra.mrb[0].mxu0 %v1553
        %v1736 = vpop.f32.mrb[0].mxu0
        %v1737 = vadd.f32 %v1516, %v1736
        %v1738 = vpop.f32.mrb[0].mxu0
        %1739 = vmatprep.mubr.f32.mxu0 0.0
        %1740 = vmatmul.mubr.f32.gmra.mrb[0].mxu0 %v1556
        %v1741 = vpop.f32.mrb[0].mxu0
        %v1742 = vadd.f32 %v1516, %v1741
        %v1743 = vpop.f32.mrb[0].mxu0
        %1744 = vmatprep.mubr.f32.mxu0 0.0
        %1745 = vmatmul.mubr.f32.gmra.mrb[0].mxu0 %v1559
        %v1746 = vpop.f32.mrb[0].mxu0
        %v1747 = vadd.f32 %v1516, %v1746
        %v1748 = vpop.f32.mrb[0].mxu0
        %1749 = vmatprep.mubr.f32.mxu0 0.0
        %1750 = vmatmul.mubr.f32.gmra.mrb[0].mxu0 %v1562
        %v1751 = vpop.f32.mrb[0].mxu0
        %v1752 = vadd.f32 %v1516, %v1751
        %v1753 = vpop.f32.mrb[0].mxu0
        %1754 = vmatprep.mubr.f32.mxu0 0.0
        %1755 = vmatmul.mubr.f32.gmra.mrb[0].mxu0 %v1565
        %v1756 = vpop.f32.mrb[0].mxu0
        %v1757 = vadd.f32 %v1516, %v1756
        %v1758 = vpop.f32.mrb[0].mxu0
        %1759 = vmatprep.mubr.f32.mxu0 0.0
        %1760 = vmatmul.mubr.f32.gmra.mrb[0].mxu0 %v1568
        %v1761 = vpop.f32.mrb[0].mxu0
        %v1762 = vadd.f32 %v1516, %v1761
        %v1763 = vpop.f32.mrb[0].mxu0
        %1764 = vmatprep.mubr.f32.mxu0 0.0
        %1765 = vmatmul.mubr.f32.gmra.mrb[0].mxu0 %v1571
        %v1766 = vpop.f32.mrb[0].mxu0
        %v1767 = vadd.f32 %v1516, %v1766
        %v1768 = vpop.f32.mrb[0].mxu0
        %1769 = vmatprep.mubr.f32.mxu0 0.0
        %1770 = vmatmul.mubr.f32.gmra.mrb[0].mxu0 %v1574
        %v1771 = vpop.f32.mrb[0].mxu0
        %v1772 = vadd.f32 %v1516, %v1771
        %v1773 = vpop.f32.mrb[0].mxu0
        %1774 = vmatprep.mubr.f32.mxu0 0.0
        %1775 = vmatmul.mubr.f32.gmra.mrb[0].mxu0 %v1577
        %v1776 = vpop.f32.mrb[0].mxu0
        %v1777 = vadd.f32 %v1516, %v1776
        %v1778 = vpop.f32.mrb[0].mxu0
        %1779 = vmatprep.mubr.f32.mxu0 0.0
        %1780 = vmatmul.mubr.f32.gmra.mrb[0].mxu0 %v1580
        %v1781 = vpop.f32.mrb[0].mxu0
        %v1782 = vadd.f32 %v1516, %v1781
        %v1783 = vpop.f32.mrb[0].mxu0
        %1784 = vmatprep.mubr.f32.mxu0 0.0
        %1785 = vmatmul.mubr.f32.gmra.mrb[0].mxu0 %v1583
        %v1786 = vpop.f32.mrb[0].mxu0
        %v1787 = vadd.f32 %v1516, %v1786
        %v1788 = vpop.f32.mrb[0].mxu0
        %1789 = vmatprep.mubr.f32.mxu0 0.0
        %1790 = vmatmul.mubr.f32.gmra.mrb[0].mxu0 %v1586
        %v1791 = vpop.f32.mrb[0].mxu0
        %v1792 = vadd.f32 %v1516, %v1791
        %v1793 = vpop.f32.mrb[0].mxu0
        %1794 = vmatprep.mubr.f32.mxu0 0.0
        %1795 = vmatmul.mubr.f32.gmra.mrb[0].mxu0 %v1589
        %v1796 = vpop.f32.mrb[0].mxu0
        %v1797 = vadd.f32 %v1516, %v1796
        %v1798 = vpop.f32.mrb[0].mxu0
        %1799 = vmatprep.mubr.f32.mxu0 0.0
        %1800 = vmatmul.mubr.f32.gmra.mrb[0].mxu0 %v1592
        %v1801 = vpop.f32.mrb[0].mxu0
        %v1802 = vadd.f32 %v1516, %v1801
        %v1803 = vpop.f32.mrb[0].mxu0
        %1804 = vmatprep.mubr.f32.mxu0 0.0
        %1805 = vmatmul.mubr.f32.gmra.mrb[0].mxu0 %v1595
        %v1806 = vpop.f32.mrb[0].mxu0
        %v1807 = vadd.f32 %v1516, %v1806
        %v1808 = vpop.f32.mrb[0].mxu0
        %1809 = vmatprep.mubr.f32.mxu0 0.0
        %1810 = vmatmul.mubr.f32.gmra.mrb[0].mxu0 %v1598
        %v1811 = vpop.f32.mrb[0].mxu0
        %v1812 = vadd.f32 %v1516, %v1811
        %v1813 = vpop.f32.mrb[0].mxu0
        %1814 = vmatprep.mubr.f32.mxu0 0.0
        %1815 = vmatmul.mubr.f32.gmra.mrb[0].mxu0 %v1601
        %v1816 = vpop.f32.mrb[0].mxu0
        %v1817 = vadd.f32 %v1516, %v1816
        %v1818 = vpop.f32.mrb[0].mxu0
        %1819 = vmatprep.mubr.f32.mxu0 0.0
        %1820 = vmatmul.mubr.f32.gmra.mrb[0].mxu0 %v1604
        %v1821 = vpop.f32.mrb[0].mxu0
        %v1822 = vadd.f32 %v1516, %v1821
        %v1823 = vpop.f32.mrb[0].mxu0
        %1824 = vmatprep.mubr.f32.mxu0 0.0
        %1825 = vmatmul.mubr.f32.gmra.mrb[0].mxu0 %v1607
        %v1826 = vpop.f32.mrb[0].mxu0
        %v1827 = vadd.f32 %v1516, %v1826
        %v1828 = vpop.f32.mrb[0].mxu0
        %1829 = vmatprep.mubr.f32.mxu0 0.0
        %1830 = vmatmul.mubr.f32.gmra.mrb[0].mxu0 %v1610
        %v1831 = vpop.f32.mrb[0].mxu0
        %v1832 = vadd.f32 %v1516, %v1831
        %v1833 = vpop.f32.mrb[0].mxu0
        %1834 = vmatprep.mubr.f32.mxu0 0.0
        %1835 = vmatmul.mubr.f32.gmra.mrb[0].mxu0 %v1613
        %v1836 = vpop.f32.mrb[0].mxu0
        %v1837 = vadd.f32 %v1516, %v1836
        %v1838 = vpop.f32.mrb[0].mxu0
        %1839 = vdwg.mxu0
        %vm1840 = vcmask 15360
        %v1841 = vsel %vm1840, %v1682, -inf
        %1842 = vmax.xlane.f32.xlu0 %v1841
        %v1843 = vpop.xlane.xlu0 %1842
        %v1844 = vsel %vm1840, %v1687, -inf
        %1845 = vmax.xlane.f32.xlu0 %v1844
        %v1846 = vpop.xlane.xlu0 %1845
        %v1847 = vsel %vm1840, %v1692, -inf
        %1848 = vmax.xlane.f32.xlu0 %v1847
        %v1849 = vpop.xlane.xlu0 %1848
        %v1850 = vsel %vm1840, %v1697, -inf
        %1851 = vmax.xlane.f32.xlu0 %v1850
        %v1852 = vpop.xlane.xlu0 %1851
        %v1853 = vsel %vm1840, %v1702, -inf
        %1854 = vmax.xlane.f32.xlu0 %v1853
        %v1855 = vpop.xlane.xlu0 %1854
        %v1856 = vsel %vm1840, %v1707, -inf
        %1857 = vmax.xlane.f32.xlu0 %v1856
        %v1858 = vpop.xlane.xlu0 %1857
        %v1859 = vsel %vm1840, %v1712, -inf
        %1860 = vmax.xlane.f32.xlu0 %v1859
        %v1861 = vpop.xlane.xlu0 %1860
        %v1862 = vsel %vm1840, %v1717, -inf
        %1863 = vmax.xlane.f32.xlu0 %v1862
        %v1864 = vpop.xlane.xlu0 %1863
        %v1865 = vsel %vm1840, %v1722, -inf
        %1866 = vmax.xlane.f32.xlu0 %v1865
        %v1867 = vpop.xlane.xlu0 %1866
        %v1868 = vsel %vm1840, %v1727, -inf
        %1869 = vmax.xlane.f32.xlu0 %v1868
        %v1870 = vpop.xlane.xlu0 %1869
        %v1871 = vsel %vm1840, %v1732, -inf
        %1872 = vmax.xlane.f32.xlu0 %v1871
        %v1873 = vpop.xlane.xlu0 %1872
        %v1874 = vsel %vm1840, %v1737, -inf
        %1875 = vmax.xlane.f32.xlu0 %v1874
        %v1876 = vpop.xlane.xlu0 %1875
        %v1877 = vsel %vm1840, %v1742, -inf
        %1878 = vmax.xlane.f32.xlu0 %v1877
        %v1879 = vpop.xlane.xlu0 %1878
        %v1880 = vsel %vm1840, %v1747, -inf
        %1881 = vmax.xlane.f32.xlu0 %v1880
        %v1882 = vpop.xlane.xlu0 %1881
        %v1883 = vsel %vm1840, %v1752, -inf
        %1884 = vmax.xlane.f32.xlu0 %v1883
        %v1885 = vpop.xlane.xlu0 %1884
        %v1886 = vsel %vm1840, %v1757, -inf
        %1887 = vmax.xlane.f32.xlu0 %v1886
        %v1888 = vpop.xlane.xlu0 %1887
        %v1889 = vsel %vm1840, %v1762, -inf
        %1890 = vmax.xlane.f32.xlu0 %v1889
        %v1891 = vpop.xlane.xlu0 %1890
        %v1892 = vsel %vm1840, %v1767, -inf
        %1893 = vmax.xlane.f32.xlu0 %v1892
        %v1894 = vpop.xlane.xlu0 %1893
        %v1895 = vsel %vm1840, %v1772, -inf
        %1896 = vmax.xlane.f32.xlu0 %v1895
        %v1897 = vpop.xlane.xlu0 %1896
        %v1898 = vsel %vm1840, %v1777, -inf
        %1899 = vmax.xlane.f32.xlu0 %v1898
        %v1900 = vpop.xlane.xlu0 %1899
        %v1901 = vsel %vm1840, %v1782, -inf
        %1902 = vmax.xlane.f32.xlu0 %v1901
        %v1903 = vpop.xlane.xlu0 %1902
        %v1904 = vsel %vm1840, %v1787, -inf
        %1905 = vmax.xlane.f32.xlu0 %v1904
        %v1906 = vpop.xlane.xlu0 %1905
        %v1907 = vsel %vm1840, %v1792, -inf
        %1908 = vmax.xlane.f32.xlu0 %v1907
        %v1909 = vpop.xlane.xlu0 %1908
        %v1910 = vsel %vm1840, %v1797, -inf
        %1911 = vmax.xlane.f32.xlu0 %v1910
        %v1912 = vpop.xlane.xlu0 %1911
        %v1913 = vsel %vm1840, %v1802, -inf
        %1914 = vmax.xlane.f32.xlu0 %v1913
        %v1915 = vpop.xlane.xlu0 %1914
        %v1916 = vsel %vm1840, %v1807, -inf
        %1917 = vmax.xlane.f32.xlu0 %v1916
        %v1918 = vpop.xlane.xlu0 %1917
        %v1919 = vsel %vm1840, %v1812, -inf
        %1920 = vmax.xlane.f32.xlu0 %v1919
        %v1921 = vpop.xlane.xlu0 %1920
        %v1922 = vsel %vm1840, %v1817, -inf
        %1923 = vmax.xlane.f32.xlu0 %v1922
        %v1924 = vpop.xlane.xlu0 %1923
        %v1925 = vsel %vm1840, %v1822, -inf
        %1926 = vmax.xlane.f32.xlu0 %v1925
        %v1927 = vpop.xlane.xlu0 %1926
        %v1928 = vsel %vm1840, %v1827, -inf
        %1929 = vmax.xlane.f32.xlu0 %v1928
        %v1930 = vpop.xlane.xlu0 %1929
        %v1931 = vsel %vm1840, %v1832, -inf
        %1932 = vmax.xlane.f32.xlu0 %v1931
        %v1933 = vpop.xlane.xlu0 %1932
        %v1934 = vsel %vm1840, %v1837, -inf
        %1935 = vmax.xlane.f32.xlu0 %v1934
        %v1936 = vpop.xlane.xlu0 %1935
        %v1937 = vsub.f32 %v1682, %v1843
        %v1938 = vsub.f32 %v1687, %v1846
        %v1939 = vsub.f32 %v1692, %v1849
        %v1940 = vsub.f32 %v1697, %v1852
        %v1941 = vsub.f32 %v1702, %v1855
        %v1942 = vsub.f32 %v1707, %v1858
        %v1943 = vsub.f32 %v1712, %v1861
        %v1944 = vsub.f32 %v1717, %v1864
        %v1945 = vsub.f32 %v1722, %v1867
        %v1946 = vsub.f32 %v1727, %v1870
        %v1947 = vsub.f32 %v1732, %v1873
        %v1948 = vsub.f32 %v1737, %v1876
        %v1949 = vsub.f32 %v1742, %v1879
        %v1950 = vsub.f32 %v1747, %v1882
        %v1951 = vsub.f32 %v1752, %v1885
        %v1952 = vsub.f32 %v1757, %v1888
        %v1953 = vsub.f32 %v1762, %v1891
        %v1954 = vsub.f32 %v1767, %v1894
        %v1955 = vsub.f32 %v1772, %v1897
        %v1956 = vsub.f32 %v1777, %v1900
        %v1957 = vsub.f32 %v1782, %v1903
        %v1958 = vsub.f32 %v1787, %v1906
        %v1959 = vsub.f32 %v1792, %v1909
        %v1960 = vsub.f32 %v1797, %v1912
        %v1961 = vsub.f32 %v1802, %v1915
        %v1962 = vsub.f32 %v1807, %v1918
        %v1963 = vsub.f32 %v1812, %v1921
        %v1964 = vsub.f32 %v1817, %v1924
        %v1965 = vsub.f32 %v1822, %v1927
        %v1966 = vsub.f32 %v1827, %v1930
        %v1967 = vsub.f32 %v1832, %v1933
        %v1968 = vsub.f32 %v1837, %v1936
        %v1969 = vmul.f32 %v1937, 1.442695
        %v1970 = vpow.pop %v1969
        %v1971 = vmul.f32 %v1938, 1.442695
        %v1972 = vpow.pop %v1971
        %v1973 = vmul.f32 %v1939, 1.442695
        %v1974 = vpow.pop %v1973
        %v1975 = vmul.f32 %v1940, 1.442695
        %v1976 = vpow.pop %v1975
        %v1977 = vmul.f32 %v1941, 1.442695
        %v1978 = vpow.pop %v1977
        %v1979 = vmul.f32 %v1942, 1.442695
        %v1980 = vpow.pop %v1979
        %v1981 = vmul.f32 %v1943, 1.442695
        %v1982 = vpow.pop %v1981
        %v1983 = vmul.f32 %v1944, 1.442695
        %v1984 = vpow.pop %v1983
        %v1985 = vmul.f32 %v1945, 1.442695
        %v1986 = vpow.pop %v1985
        %v1987 = vmul.f32 %v1946, 1.442695
        %v1988 = vpow.pop %v1987
        %v1989 = vmul.f32 %v1947, 1.442695
        %v1990 = vpow.pop %v1989
        %v1991 = vmul.f32 %v1948, 1.442695
        %v1992 = vpow.pop %v1991
        %v1993 = vmul.f32 %v1949, 1.442695
        %v1994 = vpow.pop %v1993
        %v1995 = vmul.f32 %v1950, 1.442695
        %v1996 = vpow.pop %v1995
        %v1997 = vmul.f32 %v1951, 1.442695
        %v1998 = vpow.pop %v1997
        %v1999 = vmul.f32 %v1952, 1.442695
        %v2000 = vpow.pop %v1999
        %v2001 = vmul.f32 %v1953, 1.442695
        %v2002 = vpow.pop %v2001
        %v2003 = vmul.f32 %v1954, 1.442695
        %v2004 = vpow.pop %v2003
        %v2005 = vmul.f32 %v1955, 1.442695
        %v2006 = vpow.pop %v2005
        %v2007 = vmul.f32 %v1956, 1.442695
        %v2008 = vpow.pop %v2007
        %v2009 = vmul.f32 %v1957, 1.442695
        %v2010 = vpow.pop %v2009
        %v2011 = vmul.f32 %v1958, 1.442695
        %v2012 = vpow.pop %v2011
        %v2013 = vmul.f32 %v1959, 1.442695
        %v2014 = vpow.pop %v2013
        %v2015 = vmul.f32 %v1960, 1.442695
        %v2016 = vpow.pop %v2015
        %v2017 = vmul.f32 %v1961, 1.442695
        %v2018 = vpow.pop %v2017
        %v2019 = vmul.f32 %v1962, 1.442695
        %v2020 = vpow.pop %v2019
        %v2021 = vmul.f32 %v1963, 1.442695
        %v2022 = vpow.pop %v2021
        %v2023 = vmul.f32 %v1964, 1.442695
        %v2024 = vpow.pop %v2023
        %v2025 = vmul.f32 %v1965, 1.442695
        %v2026 = vpow.pop %v2025
        %v2027 = vmul.f32 %v1966, 1.442695
        %v2028 = vpow.pop %v2027
        %v2029 = vmul.f32 %v1967, 1.442695
        %v2030 = vpow.pop %v2029
        %v2031 = vmul.f32 %v1968, 1.442695
        %v2032 = vpow.pop %v2031
        %v2033 = vsel %vm1840, %v1970, 0.0
        %2034 = vadd.xlane.f32.xlu0 %v2033
        %v2035 = vpop.xlane.xlu0 %2034
        %v2036 = vsel %vm1840, %v1972, 0.0
        %2037 = vadd.xlane.f32.xlu0 %v2036
        %v2038 = vpop.xlane.xlu0 %2037
        %v2039 = vsel %vm1840, %v1974, 0.0
        %2040 = vadd.xlane.f32.xlu0 %v2039
        %v2041 = vpop.xlane.xlu0 %2040
        %v2042 = vsel %vm1840, %v1976, 0.0
        %2043 = vadd.xlane.f32.xlu0 %v2042
        %v2044 = vpop.xlane.xlu0 %2043
        %v2045 = vsel %vm1840, %v1978, 0.0
        %2046 = vadd.xlane.f32.xlu0 %v2045
        %v2047 = vpop.xlane.xlu0 %2046
        %v2048 = vsel %vm1840, %v1980, 0.0
        %2049 = vadd.xlane.f32.xlu0 %v2048
        %v2050 = vpop.xlane.xlu0 %2049
        %v2051 = vsel %vm1840, %v1982, 0.0
        %2052 = vadd.xlane.f32.xlu0 %v2051
        %v2053 = vpop.xlane.xlu0 %2052
        %v2054 = vsel %vm1840, %v1984, 0.0
        %2055 = vadd.xlane.f32.xlu0 %v2054
        %v2056 = vpop.xlane.xlu0 %2055
        %v2057 = vsel %vm1840, %v1986, 0.0
        %2058 = vadd.xlane.f32.xlu0 %v2057
        %v2059 = vpop.xlane.xlu0 %2058
        %v2060 = vsel %vm1840, %v1988, 0.0
        %2061 = vadd.xlane.f32.xlu0 %v2060
        %v2062 = vpop.xlane.xlu0 %2061
        %v2063 = vsel %vm1840, %v1990, 0.0
        %2064 = vadd.xlane.f32.xlu0 %v2063
        %v2065 = vpop.xlane.xlu0 %2064
        %v2066 = vsel %vm1840, %v1992, 0.0
        %2067 = vadd.xlane.f32.xlu0 %v2066
        %v2068 = vpop.xlane.xlu0 %2067
        %v2069 = vsel %vm1840, %v1994, 0.0
        %2070 = vadd.xlane.f32.xlu0 %v2069
        %v2071 = vpop.xlane.xlu0 %2070
        %v2072 = vsel %vm1840, %v1996, 0.0
        %2073 = vadd.xlane.f32.xlu0 %v2072
        %v2074 = vpop.xlane.xlu0 %2073
        %v2075 = vsel %vm1840, %v1998, 0.0
        %2076 = vadd.xlane.f32.xlu0 %v2075
        %v2077 = vpop.xlane.xlu0 %2076
        %v2078 = vsel %vm1840, %v2000, 0.0
        %2079 = vadd.xlane.f32.xlu0 %v2078
        %v2080 = vpop.xlane.xlu0 %2079
        %v2081 = vsel %vm1840, %v2002, 0.0
        %2082 = vadd.xlane.f32.xlu0 %v2081
        %v2083 = vpop.xlane.xlu0 %2082
        %v2084 = vsel %vm1840, %v2004, 0.0
        %2085 = vadd.xlane.f32.xlu0 %v2084
        %v2086 = vpop.xlane.xlu0 %2085
        %v2087 = vsel %vm1840, %v2006, 0.0
        %2088 = vadd.xlane.f32.xlu0 %v2087
        %v2089 = vpop.xlane.xlu0 %2088
        %v2090 = vsel %vm1840, %v2008, 0.0
        %2091 = vadd.xlane.f32.xlu0 %v2090
        %v2092 = vpop.xlane.xlu0 %2091
        %v2093 = vsel %vm1840, %v2010, 0.0
        %2094 = vadd.xlane.f32.xlu0 %v2093
        %v2095 = vpop.xlane.xlu0 %2094
        %v2096 = vsel %vm1840, %v2012, 0.0
        %2097 = vadd.xlane.f32.xlu0 %v2096
        %v2098 = vpop.xlane.xlu0 %2097
        %v2099 = vsel %vm1840, %v2014, 0.0
        %2100 = vadd.xlane.f32.xlu0 %v2099
        %v2101 = vpop.xlane.xlu0 %2100
        %v2102 = vsel %vm1840, %v2016, 0.0
        %2103 = vadd.xlane.f32.xlu0 %v2102
        %v2104 = vpop.xlane.xlu0 %2103
        %v2105 = vsel %vm1840, %v2018, 0.0
        %2106 = vadd.xlane.f32.xlu0 %v2105
        %v2107 = vpop.xlane.xlu0 %2106
        %v2108 = vsel %vm1840, %v2020, 0.0
        %2109 = vadd.xlane.f32.xlu0 %v2108
        %v2110 = vpop.xlane.xlu0 %2109
        %v2111 = vsel %vm1840, %v2022, 0.0
        %2112 = vadd.xlane.f32.xlu0 %v2111
        %v2113 = vpop.xlane.xlu0 %2112
        %v2114 = vsel %vm1840, %v2024, 0.0
        %2115 = vadd.xlane.f32.xlu0 %v2114
        %v2116 = vpop.xlane.xlu0 %2115
        %v2117 = vsel %vm1840, %v2026, 0.0
        %2118 = vadd.xlane.f32.xlu0 %v2117
        %v2119 = vpop.xlane.xlu0 %2118
        %v2120 = vsel %vm1840, %v2028, 0.0
        %2121 = vadd.xlane.f32.xlu0 %v2120
        %v2122 = vpop.xlane.xlu0 %2121
        %v2123 = vsel %vm1840, %v2030, 0.0
        %2124 = vadd.xlane.f32.xlu0 %v2123
        %v2125 = vpop.xlane.xlu0 %2124
        %v2126 = vsel %vm1840, %v2032, 0.0
        %2127 = vadd.xlane.f32.xlu0 %v2126
        %v2128 = vpop.xlane.xlu0 %2127
        %v2129 = vrcp.pop %v2035
        %v2130 = vmul.f32 %v1970, %v2129
        %v2131 = vrcp.pop %v2038
        %v2132 = vmul.f32 %v1972, %v2131
        %v2133 = vrcp.pop %v2041
        %v2134 = vmul.f32 %v1974, %v2133
        %v2135 = vrcp.pop %v2044
        %v2136 = vmul.f32 %v1976, %v2135
        %v2137 = vrcp.pop %v2047
        %v2138 = vmul.f32 %v1978, %v2137
        %v2139 = vrcp.pop %v2050
        %v2140 = vmul.f32 %v1980, %v2139
        %v2141 = vrcp.pop %v2053
        %v2142 = vmul.f32 %v1982, %v2141
        %v2143 = vrcp.pop %v2056
        %v2144 = vmul.f32 %v1984, %v2143
        %v2145 = vrcp.pop %v2059
        %v2146 = vmul.f32 %v1986, %v2145
        %v2147 = vrcp.pop %v2062
        %v2148 = vmul.f32 %v1988, %v2147
        %v2149 = vrcp.pop %v2065
        %v2150 = vmul.f32 %v1990, %v2149
        %v2151 = vrcp.pop %v2068
        %v2152 = vmul.f32 %v1992, %v2151
        %v2153 = vrcp.pop %v2071
        %v2154 = vmul.f32 %v1994, %v2153
        %v2155 = vrcp.pop %v2074
        %v2156 = vmul.f32 %v1996, %v2155
        %v2157 = vrcp.pop %v2077
        %v2158 = vmul.f32 %v1998, %v2157
        %v2159 = vrcp.pop %v2080
        %v2160 = vmul.f32 %v2000, %v2159
        %v2161 = vrcp.pop %v2083
        %v2162 = vmul.f32 %v2002, %v2161
        %v2163 = vrcp.pop %v2086
        %v2164 = vmul.f32 %v2004, %v2163
        %v2165 = vrcp.pop %v2089
        %v2166 = vmul.f32 %v2006, %v2165
        %v2167 = vrcp.pop %v2092
        %v2168 = vmul.f32 %v2008, %v2167
        %v2169 = vrcp.pop %v2095
        %v2170 = vmul.f32 %v2010, %v2169
        %v2171 = vrcp.pop %v2098
        %v2172 = vmul.f32 %v2012, %v2171
        %v2173 = vrcp.pop %v2101
        %v2174 = vmul.f32 %v2014, %v2173
        %v2175 = vrcp.pop %v2104
        %v2176 = vmul.f32 %v2016, %v2175
        %v2177 = vrcp.pop %v2107
        %v2178 = vmul.f32 %v2018, %v2177
        %v2179 = vrcp.pop %v2110
        %v2180 = vmul.f32 %v2020, %v2179
        %v2181 = vrcp.pop %v2113
        %v2182 = vmul.f32 %v2022, %v2181
        %v2183 = vrcp.pop %v2116
        %v2184 = vmul.f32 %v2024, %v2183
        %v2185 = vrcp.pop %v2119
        %v2186 = vmul.f32 %v2026, %v2185
        %v2187 = vrcp.pop %v2122
        %v2188 = vmul.f32 %v2028, %v2187
        %v2189 = vrcp.pop %v2125
        %v2190 = vmul.f32 %v2030, %v2189
        %v2191 = vrcp.pop %v2128
        %v2192 = vmul.f32 %v2032, %v2191
        %v2194 = vsel %vm1840, %v1480, 0
        %v2197 = vsel %vm1840, %v1481, 0
        %v2200 = vsel %vm1840, %v1482, 0
        %v2203 = vsel %vm1840, %v1483, 0
        %v2206 = vsel %vm1840, %v1484, 0
        %v2209 = vsel %vm1840, %v1485, 0
        %v2212 = vsel %vm1840, %v1486, 0
        %v2215 = vsel %vm1840, %v1487, 0
        %v2218 = vsel %vm1840, %v1488, 0
        %v2221 = vsel %vm1840, %v1489, 0
        %v2224 = vsel %vm1840, %v1490, 0
        %v2227 = vsel %vm1840, %v1491, 0
        %v2230 = vsel %vm1840, %v1492, 0
        %v2233 = vsel %vm1840, %v1493, 0
        %v2236 = vsel %vm1840, %v1494, 0
        %v2239 = vsel %vm1840, %v1495, 0
        %v2242 = vsel %vm1840, %v1496, 0
        %v2245 = vsel %vm1840, %v1497, 0
        %v2248 = vsel %vm1840, %v1498, 0
        %v2251 = vsel %vm1840, %v1499, 0
        %v2254 = vsel %vm1840, %v1500, 0
        %v2257 = vsel %vm1840, %v1501, 0
        %v2260 = vsel %vm1840, %v1502, 0
        %v2263 = vsel %vm1840, %v1503, 0
        %v2266 = vsel %vm1840, %v1504, 0
        %v2269 = vsel %vm1840, %v1505, 0
        %v2272 = vsel %vm1840, %v1506, 0
        %v2275 = vsel %vm1840, %v1507, 0
        %v2278 = vsel %vm1840, %v1508, 0
        %v2281 = vsel %vm1840, %v1509, 0
        %v2284 = vsel %vm1840, %v1510, 0
        %v2287 = vsel %vm1840, %v1511, 0
        %v2290 = vsel %vm1840, %v2130, 0
        %v2293 = vsel %vm1840, %v2132, 0
        %v2296 = vsel %vm1840, %v2134, 0
        %v2299 = vsel %vm1840, %v2136, 0
        %v2302 = vsel %vm1840, %v2138, 0
        %v2305 = vsel %vm1840, %v2140, 0
        %v2308 = vsel %vm1840, %v2142, 0
        %v2311 = vsel %vm1840, %v2144, 0
        %v2314 = vsel %vm1840, %v2146, 0
        %v2317 = vsel %vm1840, %v2148, 0
        %v2320 = vsel %vm1840, %v2150, 0
        %v2323 = vsel %vm1840, %v2152, 0
        %v2326 = vsel %vm1840, %v2154, 0
        %v2329 = vsel %vm1840, %v2156, 0
        %v2332 = vsel %vm1840, %v2158, 0
        %v2335 = vsel %vm1840, %v2160, 0
        %v2338 = vsel %vm1840, %v2162, 0
        %v2341 = vsel %vm1840, %v2164, 0
        %v2344 = vsel %vm1840, %v2166, 0
        %v2347 = vsel %vm1840, %v2168, 0
        %v2350 = vsel %vm1840, %v2170, 0
        %v2353 = vsel %vm1840, %v2172, 0
        %v2356 = vsel %vm1840, %v2174, 0
        %v2359 = vsel %vm1840, %v2176, 0
        %v2362 = vsel %vm1840, %v2178, 0
        %v2365 = vsel %vm1840, %v2180, 0
        %v2368 = vsel %vm1840, %v2182, 0
        %v2371 = vsel %vm1840, %v2184, 0
        %v2374 = vsel %vm1840, %v2186, 0
        %v2377 = vsel %vm1840, %v2188, 0
        %v2380 = vsel %vm1840, %v2190, 0
        %v2383 = vsel %vm1840, %v2192, 0
        %2385 = vmatprep.subr.mxu0 0.0
        %2386 = vmatpush1.xpose.msra.mxu0 %v2290
        %2387 = vmatprep.subr.mxu0 0.0
        %2388 = vmatpush1.xpose.msra.mxu0 %v2293
        %2389 = vmatprep.subr.mxu0 0.0
        %2390 = vmatpush1.xpose.msra.mxu0 %v2296
        %2391 = vmatprep.subr.mxu0 0.0
        %2392 = vmatpush1.xpose.msra.mxu0 %v2299
        %2393 = vmatprep.subr.mxu0 0.0
        %2394 = vmatpush1.xpose.msra.mxu0 %v2302
        %2395 = vmatprep.subr.mxu0 0.0
        %2396 = vmatpush1.xpose.msra.mxu0 %v2305
        %2397 = vmatprep.subr.mxu0 0.0
        %2398 = vmatpush1.xpose.msra.mxu0 %v2308
        %2399 = vmatprep.subr.mxu0 0.0
        %2400 = vmatpush1.xpose.msra.mxu0 %v2311
        %2401 = vmatprep.subr.mxu0 0.0
        %2402 = vmatpush1.xpose.msra.mxu0 %v2314
        %2403 = vmatprep.subr.mxu0 0.0
        %2404 = vmatpush1.xpose.msra.mxu0 %v2317
        %2405 = vmatprep.subr.mxu0 0.0
        %2406 = vmatpush1.xpose.msra.mxu0 %v2320
        %2407 = vmatprep.subr.mxu0 0.0
        %2408 = vmatpush1.xpose.msra.mxu0 %v2323
        %2409 = vmatprep.subr.mxu0 0.0
        %2410 = vmatpush1.xpose.msra.mxu0 %v2326
        %2411 = vmatprep.subr.mxu0 0.0
        %2412 = vmatpush1.xpose.msra.mxu0 %v2329
        %2413 = vmatprep.subr.mxu0 0.0
        %2414 = vmatpush1.xpose.msra.mxu0 %v2332
        %2415 = vmatprep.subr.mxu0 0.0
        %2416 = vmatpush1.xpose.msra.mxu0 %v2335
        %2417 = vmatprep.subr.mxu0 0.0
        %2418 = vmatpush1.xpose.msra.mxu0 %v2338
        %2419 = vmatprep.subr.mxu0 0.0
        %2420 = vmatpush1.xpose.msra.mxu0 %v2341
        %2421 = vmatprep.subr.mxu0 0.0
        %2422 = vmatpush1.xpose.msra.mxu0 %v2344
        %2423 = vmatprep.subr.mxu0 0.0
        %2424 = vmatpush1.xpose.msra.mxu0 %v2347
        %2425 = vmatprep.subr.mxu0 0.0
        %2426 = vmatpush1.xpose.msra.mxu0 %v2350
        %2427 = vmatprep.subr.mxu0 0.0
        %2428 = vmatpush1.xpose.msra.mxu0 %v2353
        %2429 = vmatprep.subr.mxu0 0.0
        %2430 = vmatpush1.xpose.msra.mxu0 %v2356
        %2431 = vmatprep.subr.mxu0 0.0
        %2432 = vmatpush1.xpose.msra.mxu0 %v2359
        %2433 = vmatprep.subr.mxu0 0.0
        %2434 = vmatpush1.xpose.msra.mxu0 %v2362
        %2435 = vmatprep.subr.mxu0 0.0
        %2436 = vmatpush1.xpose.msra.mxu0 %v2365
        %2437 = vmatprep.subr.mxu0 0.0
        %2438 = vmatpush1.xpose.msra.mxu0 %v2368
        %2439 = vmatprep.subr.mxu0 0.0
        %2440 = vmatpush1.xpose.msra.mxu0 %v2371
        %2441 = vmatprep.subr.mxu0 0.0
        %2442 = vmatpush1.xpose.msra.mxu0 %v2374
        %2443 = vmatprep.subr.mxu0 0.0
        %2444 = vmatpush1.xpose.msra.mxu0 %v2377
        %2445 = vmatprep.subr.mxu0 0.0
        %2446 = vmatpush1.xpose.msra.mxu0 %v2380
        %2447 = vmatprep.subr.mxu0 0.0
        %2448 = vmatpush1.xpose.msra.mxu0 %v2383
        %2449 = vmatprep.mubr.f32.mxu0 0.0
        %2450 = vmatmul.mubr.f32.gmra.mrb[0].mxu0 %v2194
        %v2451 = vpop.f32.mrb[0].mxu0
        %v2452 = vadd.f32 0.0, %v2451
        %v2453 = vpop.f32.mrb[0].mxu0
        %v2454 = vadd.f32 0.0, %v2453
        %2455 = vmatprep.mubr.f32.mxu0 0.0
        %2456 = vmatmul.mubr.f32.gmra.mrb[0].mxu0 %v2197
        %v2457 = vpop.f32.mrb[0].mxu0
        %v2458 = vadd.f32 0.0, %v2457
        %v2459 = vpop.f32.mrb[0].mxu0
        %v2460 = vadd.f32 0.0, %v2459
        %2461 = vmatprep.mubr.f32.mxu0 0.0
        %2462 = vmatmul.mubr.f32.gmra.mrb[0].mxu0 %v2200
        %v2463 = vpop.f32.mrb[0].mxu0
        %v2464 = vadd.f32 0.0, %v2463
        %v2465 = vpop.f32.mrb[0].mxu0
        %v2466 = vadd.f32 0.0, %v2465
        %2467 = vmatprep.mubr.f32.mxu0 0.0
        %2468 = vmatmul.mubr.f32.gmra.mrb[0].mxu0 %v2203
        %v2469 = vpop.f32.mrb[0].mxu0
        %v2470 = vadd.f32 0.0, %v2469
        %v2471 = vpop.f32.mrb[0].mxu0
        %v2472 = vadd.f32 0.0, %v2471
        %2473 = vmatprep.mubr.f32.mxu0 0.0
        %2474 = vmatmul.mubr.f32.gmra.mrb[0].mxu0 %v2206
        %v2475 = vpop.f32.mrb[0].mxu0
        %v2476 = vadd.f32 0.0, %v2475
        %v2477 = vpop.f32.mrb[0].mxu0
        %v2478 = vadd.f32 0.0, %v2477
        %2479 = vmatprep.mubr.f32.mxu0 0.0
        %2480 = vmatmul.mubr.f32.gmra.mrb[0].mxu0 %v2209
        %v2481 = vpop.f32.mrb[0].mxu0
        %v2482 = vadd.f32 0.0, %v2481
        %v2483 = vpop.f32.mrb[0].mxu0
        %v2484 = vadd.f32 0.0, %v2483
        %2485 = vmatprep.mubr.f32.mxu0 0.0
        %2486 = vmatmul.mubr.f32.gmra.mrb[0].mxu0 %v2212
        %v2487 = vpop.f32.mrb[0].mxu0
        %v2488 = vadd.f32 0.0, %v2487
        %v2489 = vpop.f32.mrb[0].mxu0
        %v2490 = vadd.f32 0.0, %v2489
        %2491 = vmatprep.mubr.f32.mxu0 0.0
        %2492 = vmatmul.mubr.f32.gmra.mrb[0].mxu0 %v2215
        %v2493 = vpop.f32.mrb[0].mxu0
        %v2494 = vadd.f32 0.0, %v2493
        %v2495 = vpop.f32.mrb[0].mxu0
        %v2496 = vadd.f32 0.0, %v2495
        %2497 = vmatprep.mubr.f32.mxu0 0.0
        %2498 = vmatmul.mubr.f32.gmra.mrb[0].mxu0 %v2218
        %v2499 = vpop.f32.mrb[0].mxu0
        %v2500 = vadd.f32 0.0, %v2499
        %v2501 = vpop.f32.mrb[0].mxu0
        %v2502 = vadd.f32 0.0, %v2501
        %2503 = vmatprep.mubr.f32.mxu0 0.0
        %2504 = vmatmul.mubr.f32.gmra.mrb[0].mxu0 %v2221
        %v2505 = vpop.f32.mrb[0].mxu0
        %v2506 = vadd.f32 0.0, %v2505
        %v2507 = vpop.f32.mrb[0].mxu0
        %v2508 = vadd.f32 0.0, %v2507
        %2509 = vmatprep.mubr.f32.mxu0 0.0
        %2510 = vmatmul.mubr.f32.gmra.mrb[0].mxu0 %v2224
        %v2511 = vpop.f32.mrb[0].mxu0
        %v2512 = vadd.f32 0.0, %v2511
        %v2513 = vpop.f32.mrb[0].mxu0
        %v2514 = vadd.f32 0.0, %v2513
        %2515 = vmatprep.mubr.f32.mxu0 0.0
        %2516 = vmatmul.mubr.f32.gmra.mrb[0].mxu0 %v2227
        %v2517 = vpop.f32.mrb[0].mxu0
        %v2518 = vadd.f32 0.0, %v2517
        %v2519 = vpop.f32.mrb[0].mxu0
        %v2520 = vadd.f32 0.0, %v2519
        %2521 = vmatprep.mubr.f32.mxu0 0.0
        %2522 = vmatmul.mubr.f32.gmra.mrb[0].mxu0 %v2230
        %v2523 = vpop.f32.mrb[0].mxu0
        %v2524 = vadd.f32 0.0, %v2523
        %v2525 = vpop.f32.mrb[0].mxu0
        %v2526 = vadd.f32 0.0, %v2525
        %2527 = vmatprep.mubr.f32.mxu0 0.0
        %2528 = vmatmul.mubr.f32.gmra.mrb[0].mxu0 %v2233
        %v2529 = vpop.f32.mrb[0].mxu0
        %v2530 = vadd.f32 0.0, %v2529
        %v2531 = vpop.f32.mrb[0].mxu0
        %v2532 = vadd.f32 0.0, %v2531
        %2533 = vmatprep.mubr.f32.mxu0 0.0
        %2534 = vmatmul.mubr.f32.gmra.mrb[0].mxu0 %v2236
        %v2535 = vpop.f32.mrb[0].mxu0
        %v2536 = vadd.f32 0.0, %v2535
        %v2537 = vpop.f32.mrb[0].mxu0
        %v2538 = vadd.f32 0.0, %v2537
        %2539 = vmatprep.mubr.f32.mxu0 0.0
        %2540 = vmatmul.mubr.f32.gmra.mrb[0].mxu0 %v2239
        %v2541 = vpop.f32.mrb[0].mxu0
        %v2542 = vadd.f32 0.0, %v2541
        %v2543 = vpop.f32.mrb[0].mxu0
        %v2544 = vadd.f32 0.0, %v2543
        %2545 = vmatprep.mubr.f32.mxu0 0.0
        %2546 = vmatmul.mubr.f32.gmra.mrb[0].mxu0 %v2242
        %v2547 = vpop.f32.mrb[0].mxu0
        %v2548 = vadd.f32 0.0, %v2547
        %v2549 = vpop.f32.mrb[0].mxu0
        %v2550 = vadd.f32 0.0, %v2549
        %2551 = vmatprep.mubr.f32.mxu0 0.0
        %2552 = vmatmul.mubr.f32.gmra.mrb[0].mxu0 %v2245
        %v2553 = vpop.f32.mrb[0].mxu0
        %v2554 = vadd.f32 0.0, %v2553
        %v2555 = vpop.f32.mrb[0].mxu0
        %v2556 = vadd.f32 0.0, %v2555
        %2557 = vmatprep.mubr.f32.mxu0 0.0
        %2558 = vmatmul.mubr.f32.gmra.mrb[0].mxu0 %v2248
        %v2559 = vpop.f32.mrb[0].mxu0
        %v2560 = vadd.f32 0.0, %v2559
        %v2561 = vpop.f32.mrb[0].mxu0
        %v2562 = vadd.f32 0.0, %v2561
        %2563 = vmatprep.mubr.f32.mxu0 0.0
        %2564 = vmatmul.mubr.f32.gmra.mrb[0].mxu0 %v2251
        %v2565 = vpop.f32.mrb[0].mxu0
        %v2566 = vadd.f32 0.0, %v2565
        %v2567 = vpop.f32.mrb[0].mxu0
        %v2568 = vadd.f32 0.0, %v2567
        %2569 = vmatprep.mubr.f32.mxu0 0.0
        %2570 = vmatmul.mubr.f32.gmra.mrb[0].mxu0 %v2254
        %v2571 = vpop.f32.mrb[0].mxu0
        %v2572 = vadd.f32 0.0, %v2571
        %v2573 = vpop.f32.mrb[0].mxu0
        %v2574 = vadd.f32 0.0, %v2573
        %2575 = vmatprep.mubr.f32.mxu0 0.0
        %2576 = vmatmul.mubr.f32.gmra.mrb[0].mxu0 %v2257
        %v2577 = vpop.f32.mrb[0].mxu0
        %v2578 = vadd.f32 0.0, %v2577
        %v2579 = vpop.f32.mrb[0].mxu0
        %v2580 = vadd.f32 0.0, %v2579
        %2581 = vmatprep.mubr.f32.mxu0 0.0
        %2582 = vmatmul.mubr.f32.gmra.mrb[0].mxu0 %v2260
        %v2583 = vpop.f32.mrb[0].mxu0
        %v2584 = vadd.f32 0.0, %v2583
        %v2585 = vpop.f32.mrb[0].mxu0
        %v2586 = vadd.f32 0.0, %v2585
        %2587 = vmatprep.mubr.f32.mxu0 0.0
        %2588 = vmatmul.mubr.f32.gmra.mrb[0].mxu0 %v2263
        %v2589 = vpop.f32.mrb[0].mxu0
        %v2590 = vadd.f32 0.0, %v2589
        %v2591 = vpop.f32.mrb[0].mxu0
        %v2592 = vadd.f32 0.0, %v2591
        %2593 = vmatprep.mubr.f32.mxu0 0.0
        %2594 = vmatmul.mubr.f32.gmra.mrb[0].mxu0 %v2266
        %v2595 = vpop.f32.mrb[0].mxu0
        %v2596 = vadd.f32 0.0, %v2595
        %v2597 = vpop.f32.mrb[0].mxu0
        %v2598 = vadd.f32 0.0, %v2597
        %2599 = vmatprep.mubr.f32.mxu0 0.0
        %2600 = vmatmul.mubr.f32.gmra.mrb[0].mxu0 %v2269
        %v2601 = vpop.f32.mrb[0].mxu0
        %v2602 = vadd.f32 0.0, %v2601
        %v2603 = vpop.f32.mrb[0].mxu0
        %v2604 = vadd.f32 0.0, %v2603
        %2605 = vmatprep.mubr.f32.mxu0 0.0
        %2606 = vmatmul.mubr.f32.gmra.mrb[0].mxu0 %v2272
        %v2607 = vpop.f32.mrb[0].mxu0
        %v2608 = vadd.f32 0.0, %v2607
        %v2609 = vpop.f32.mrb[0].mxu0
        %v2610 = vadd.f32 0.0, %v2609
        %2611 = vmatprep.mubr.f32.mxu0 0.0
        %2612 = vmatmul.mubr.f32.gmra.mrb[0].mxu0 %v2275
        %v2613 = vpop.f32.mrb[0].mxu0
        %v2614 = vadd.f32 0.0, %v2613
        %v2615 = vpop.f32.mrb[0].mxu0
        %v2616 = vadd.f32 0.0, %v2615
        %2617 = vmatprep.mubr.f32.mxu0 0.0
        %2618 = vmatmul.mubr.f32.gmra.mrb[0].mxu0 %v2278
        %v2619 = vpop.f32.mrb[0].mxu0
        %v2620 = vadd.f32 0.0, %v2619
        %v2621 = vpop.f32.mrb[0].mxu0
        %v2622 = vadd.f32 0.0, %v2621
        %2623 = vmatprep.mubr.f32.mxu0 0.0
        %2624 = vmatmul.mubr.f32.gmra.mrb[0].mxu0 %v2281
        %v2625 = vpop.f32.mrb[0].mxu0
        %v2626 = vadd.f32 0.0, %v2625
        %v2627 = vpop.f32.mrb[0].mxu0
        %v2628 = vadd.f32 0.0, %v2627
        %2629 = vmatprep.mubr.f32.mxu0 0.0
        %2630 = vmatmul.mubr.f32.gmra.mrb[0].mxu0 %v2284
        %v2631 = vpop.f32.mrb[0].mxu0
        %v2632 = vadd.f32 0.0, %v2631
        %v2633 = vpop.f32.mrb[0].mxu0
        %v2634 = vadd.f32 0.0, %v2633
        %2635 = vmatprep.mubr.f32.mxu0 0.0
        %2636 = vmatmul.mubr.f32.gmra.mrb[0].mxu0 %v2287
        %v2637 = vpop.f32.mrb[0].mxu0
        %v2638 = vadd.f32 0.0, %v2637
        %v2639 = vpop.f32.mrb[0].mxu0
        %v2640 = vadd.f32 0.0, %v2639
        %2641 = vdwg.mxu0
        %v2642 = vmul.f32 %v2452, 1.442695
        %v2643 = vpow.pop %v2642
        %v2644 = vmul.f32 %v2454, 1.442695
        %v2645 = vpow.pop %v2644
        %v2646 = vmul.f32 %v2458, 1.442695
        %v2647 = vpow.pop %v2646
        %v2648 = vmul.f32 %v2460, 1.442695
        %v2649 = vpow.pop %v2648
        %v2650 = vmul.f32 %v2464, 1.442695
        %v2651 = vpow.pop %v2650
        %v2652 = vmul.f32 %v2466, 1.442695
        %v2653 = vpow.pop %v2652
        %v2654 = vmul.f32 %v2470, 1.442695
        %v2655 = vpow.pop %v2654
        %v2656 = vmul.f32 %v2472, 1.442695
        %v2657 = vpow.pop %v2656
        %v2658 = vmul.f32 %v2476, 1.442695
        %v2659 = vpow.pop %v2658
        %v2660 = vmul.f32 %v2478, 1.442695
        %v2661 = vpow.pop %v2660
        %v2662 = vmul.f32 %v2482, 1.442695
        %v2663 = vpow.pop %v2662
        %v2664 = vmul.f32 %v2484, 1.442695
        %v2665 = vpow.pop %v2664
        %v2666 = vmul.f32 %v2488, 1.442695
        %v2667 = vpow.pop %v2666
        %v2668 = vmul.f32 %v2490, 1.442695
        %v2669 = vpow.pop %v2668
        %v2670 = vmul.f32 %v2494, 1.442695
        %v2671 = vpow.pop %v2670
        %v2672 = vmul.f32 %v2496, 1.442695
        %v2673 = vpow.pop %v2672
        %v2674 = vmul.f32 %v2500, 1.442695
        %v2675 = vpow.pop %v2674
        %v2676 = vmul.f32 %v2502, 1.442695
        %v2677 = vpow.pop %v2676
        %v2678 = vmul.f32 %v2506, 1.442695
        %v2679 = vpow.pop %v2678
        %v2680 = vmul.f32 %v2508, 1.442695
        %v2681 = vpow.pop %v2680
        %v2682 = vmul.f32 %v2512, 1.442695
        %v2683 = vpow.pop %v2682
        %v2684 = vmul.f32 %v2514, 1.442695
        %v2685 = vpow.pop %v2684
        %v2686 = vmul.f32 %v2518, 1.442695
        %v2687 = vpow.pop %v2686
        %v2688 = vmul.f32 %v2520, 1.442695
        %v2689 = vpow.pop %v2688
        %v2690 = vmul.f32 %v2524, 1.442695
        %v2691 = vpow.pop %v2690
        %v2692 = vmul.f32 %v2526, 1.442695
        %v2693 = vpow.pop %v2692
        %v2694 = vmul.f32 %v2530, 1.442695
        %v2695 = vpow.pop %v2694
        %v2696 = vmul.f32 %v2532, 1.442695
        %v2697 = vpow.pop %v2696
        %v2698 = vmul.f32 %v2536, 1.442695
        %v2699 = vpow.pop %v2698
        %v2700 = vmul.f32 %v2538, 1.442695
        %v2701 = vpow.pop %v2700
        %v2702 = vmul.f32 %v2542, 1.442695
        %v2703 = vpow.pop %v2702
        %v2704 = vmul.f32 %v2544, 1.442695
        %v2705 = vpow.pop %v2704
        %v2706 = vmul.f32 %v2548, 1.442695
        %v2707 = vpow.pop %v2706
        %v2708 = vmul.f32 %v2550, 1.442695
        %v2709 = vpow.pop %v2708
        %v2710 = vmul.f32 %v2554, 1.442695
        %v2711 = vpow.pop %v2710
        %v2712 = vmul.f32 %v2556, 1.442695
        %v2713 = vpow.pop %v2712
        %v2714 = vmul.f32 %v2560, 1.442695
        %v2715 = vpow.pop %v2714
        %v2716 = vmul.f32 %v2562, 1.442695
        %v2717 = vpow.pop %v2716
        %v2718 = vmul.f32 %v2566, 1.442695
        %v2719 = vpow.pop %v2718
        %v2720 = vmul.f32 %v2568, 1.442695
        %v2721 = vpow.pop %v2720
        %v2722 = vmul.f32 %v2572, 1.442695
        %v2723 = vpow.pop %v2722
        %v2724 = vmul.f32 %v2574, 1.442695
        %v2725 = vpow.pop %v2724
        %v2726 = vmul.f32 %v2578, 1.442695
        %v2727 = vpow.pop %v2726
        %v2728 = vmul.f32 %v2580, 1.442695
        %v2729 = vpow.pop %v2728
        %v2730 = vmul.f32 %v2584, 1.442695
        %v2731 = vpow.pop %v2730
        %v2732 = vmul.f32 %v2586, 1.442695
        %v2733 = vpow.pop %v2732
        %v2734 = vmul.f32 %v2590, 1.442695
        %v2735 = vpow.pop %v2734
        %v2736 = vmul.f32 %v2592, 1.442695
        %v2737 = vpow.pop %v2736
        %v2738 = vmul.f32 %v2596, 1.442695
        %v2739 = vpow.pop %v2738
        %v2740 = vmul.f32 %v2598, 1.442695
        %v2741 = vpow.pop %v2740
        %v2742 = vmul.f32 %v2602, 1.442695
        %v2743 = vpow.pop %v2742
        %v2744 = vmul.f32 %v2604, 1.442695
        %v2745 = vpow.pop %v2744
        %v2746 = vmul.f32 %v2608, 1.442695
        %v2747 = vpow.pop %v2746
        %v2748 = vmul.f32 %v2610, 1.442695
        %v2749 = vpow.pop %v2748
        %v2750 = vmul.f32 %v2614, 1.442695
        %v2751 = vpow.pop %v2750
        %v2752 = vmul.f32 %v2616, 1.442695
        %v2753 = vpow.pop %v2752
        %v2754 = vmul.f32 %v2620, 1.442695
        %v2755 = vpow.pop %v2754
        %v2756 = vmul.f32 %v2622, 1.442695
        %v2757 = vpow.pop %v2756
        %v2758 = vmul.f32 %v2626, 1.442695
        %v2759 = vpow.pop %v2758
        %v2760 = vmul.f32 %v2628, 1.442695
        %v2761 = vpow.pop %v2760
        %v2762 = vmul.f32 %v2632, 1.442695
        %v2763 = vpow.pop %v2762
        %v2764 = vmul.f32 %v2634, 1.442695
        %v2765 = vpow.pop %v2764
        %v2766 = vmul.f32 %v2638, 1.442695
        %v2767 = vpow.pop %v2766
        %v2768 = vmul.f32 %v2640, 1.442695
        %v2769 = vpow.pop %v2768
        %v2770 = vadd.f32 %v2643, %v2647
        %v2771 = vadd.f32 %v2770, %v2651
        %v2772 = vadd.f32 %v2771, %v2655
        %v2773 = vadd.f32 %v2772, %v2659
        %v2774 = vadd.f32 %v2773, %v2663
        %v2775 = vadd.f32 %v2774, %v2667
        %v2776 = vadd.f32 %v2775, %v2671
        %v2777 = vadd.f32 %v2776, %v2675
        %v2778 = vadd.f32 %v2777, %v2679
        %v2779 = vadd.f32 %v2778, %v2683
        %v2780 = vadd.f32 %v2779, %v2687
        %v2781 = vadd.f32 %v2780, %v2691
        %v2782 = vadd.f32 %v2781, %v2695
        %v2783 = vadd.f32 %v2782, %v2699
        %v2784 = vadd.f32 %v2783, %v2703
        %v2785 = vadd.f32 %v2784, %v2707
        %v2786 = vadd.f32 %v2785, %v2711
        %v2787 = vadd.f32 %v2786, %v2715
        %v2788 = vadd.f32 %v2787, %v2719
        %v2789 = vadd.f32 %v2788, %v2723
        %v2790 = vadd.f32 %v2789, %v2727
        %v2791 = vadd.f32 %v2790, %v2731
        %v2792 = vadd.f32 %v2791, %v2735
        %v2793 = vadd.f32 %v2792, %v2739
        %v2794 = vadd.f32 %v2793, %v2743
        %v2795 = vadd.f32 %v2794, %v2747
        %v2796 = vadd.f32 %v2795, %v2751
        %v2797 = vadd.f32 %v2796, %v2755
        %v2798 = vadd.f32 %v2797, %v2759
        %v2799 = vadd.f32 %v2798, %v2763
        %v2800 = vadd.f32 %v2799, %v2767
        %v2801 = vrot.slane %v2800, 4
        %v2802 = vadd.f32 %v2800, %v2801
        %v2803 = vrot.slane %v2802, 2
        %v2804 = vadd.f32 %v2802, %v2803
        %v2805 = vrot.slane %v2804, 1
        %v2806 = vadd.f32 %v2804, %v2805
        %v2807 = vadd.f32 %v2645, %v2649
        %v2808 = vadd.f32 %v2807, %v2653
        %v2809 = vadd.f32 %v2808, %v2657
        %v2810 = vadd.f32 %v2809, %v2661
        %v2811 = vadd.f32 %v2810, %v2665
        %v2812 = vadd.f32 %v2811, %v2669
        %v2813 = vadd.f32 %v2812, %v2673
        %v2814 = vadd.f32 %v2813, %v2677
        %v2815 = vadd.f32 %v2814, %v2681
        %v2816 = vadd.f32 %v2815, %v2685
        %v2817 = vadd.f32 %v2816, %v2689
        %v2818 = vadd.f32 %v2817, %v2693
        %v2819 = vadd.f32 %v2818, %v2697
        %v2820 = vadd.f32 %v2819, %v2701
        %v2821 = vadd.f32 %v2820, %v2705
        %v2822 = vadd.f32 %v2821, %v2709
        %v2823 = vadd.f32 %v2822, %v2713
        %v2824 = vadd.f32 %v2823, %v2717
        %v2825 = vadd.f32 %v2824, %v2721
        %v2826 = vadd.f32 %v2825, %v2725
        %v2827 = vadd.f32 %v2826, %v2729
        %v2828 = vadd.f32 %v2827, %v2733
        %v2829 = vadd.f32 %v2828, %v2737
        %v2830 = vadd.f32 %v2829, %v2741
        %v2831 = vadd.f32 %v2830, %v2745
        %v2832 = vadd.f32 %v2831, %v2749
        %v2833 = vadd.f32 %v2832, %v2753
        %v2834 = vadd.f32 %v2833, %v2757
        %v2835 = vadd.f32 %v2834, %v2761
        %v2836 = vadd.f32 %v2835, %v2765
        %v2837 = vadd.f32 %v2836, %v2769
        %v2838 = vrot.slane %v2837, 4
        %v2839 = vadd.f32 %v2837, %v2838
        %v2840 = vrot.slane %v2839, 2
        %v2841 = vadd.f32 %v2839, %v2840
        %v2842 = vrot.slane %v2841, 1
        %v2843 = vadd.f32 %v2841, %v2842
        %v2844 = vrcp.pop %v2806
        %v2845 = vrcp.pop %v2843
        %v2846 = vmul.f32 %v2643, %v2844
        %v2847 = vmul.f32 %v2645, %v2845
        %v2848 = vmul.f32 %v2647, %v2844
        %v2849 = vmul.f32 %v2649, %v2845
        %v2850 = vmul.f32 %v2651, %v2844
        %v2851 = vmul.f32 %v2653, %v2845
        %v2852 = vmul.f32 %v2655, %v2844
        %v2853 = vmul.f32 %v2657, %v2845
        %v2854 = vmul.f32 %v2659, %v2844
        %v2855 = vmul.f32 %v2661, %v2845
        %v2856 = vmul.f32 %v2663, %v2844
        %v2857 = vmul.f32 %v2665, %v2845
        %v2858 = vmul.f32 %v2667, %v2844
        %v2859 = vmul.f32 %v2669, %v2845
        %v2860 = vmul.f32 %v2671, %v2844
        %v2861 = vmul.f32 %v2673, %v2845
        %v2862 = vmul.f32 %v2675, %v2844
        %v2863 = vmul.f32 %v2677, %v2845
        %v2864 = vmul.f32 %v2679, %v2844
        %v2865 = vmul.f32 %v2681, %v2845
        %v2866 = vmul.f32 %v2683, %v2844
        %v2867 = vmul.f32 %v2685, %v2845
        %v2868 = vmul.f32 %v2687, %v2844
        %v2869 = vmul.f32 %v2689, %v2845
        %v2870 = vmul.f32 %v2691, %v2844
        %v2871 = vmul.f32 %v2693, %v2845
        %v2872 = vmul.f32 %v2695, %v2844
        %v2873 = vmul.f32 %v2697, %v2845
        %v2874 = vmul.f32 %v2699, %v2844
        %v2875 = vmul.f32 %v2701, %v2845
        %v2876 = vmul.f32 %v2703, %v2844
        %v2877 = vmul.f32 %v2705, %v2845
        %v2878 = vmul.f32 %v2707, %v2844
        %v2879 = vmul.f32 %v2709, %v2845
        %v2880 = vmul.f32 %v2711, %v2844
        %v2881 = vmul.f32 %v2713, %v2845
        %v2882 = vmul.f32 %v2715, %v2844
        %v2883 = vmul.f32 %v2717, %v2845
        %v2884 = vmul.f32 %v2719, %v2844
        %v2885 = vmul.f32 %v2721, %v2845
        %v2886 = vmul.f32 %v2723, %v2844
        %v2887 = vmul.f32 %v2725, %v2845
        %v2888 = vmul.f32 %v2727, %v2844
        %v2889 = vmul.f32 %v2729, %v2845
        %v2890 = vmul.f32 %v2731, %v2844
        %v2891 = vmul.f32 %v2733, %v2845
        %v2892 = vmul.f32 %v2735, %v2844
        %v2893 = vmul.f32 %v2737, %v2845
        %v2894 = vmul.f32 %v2739, %v2844
        %v2895 = vmul.f32 %v2741, %v2845
        %v2896 = vmul.f32 %v2743, %v2844
        %v2897 = vmul.f32 %v2745, %v2845
        %v2898 = vmul.f32 %v2747, %v2844
        %v2899 = vmul.f32 %v2749, %v2845
        %v2900 = vmul.f32 %v2751, %v2844
        %v2901 = vmul.f32 %v2753, %v2845
        %v2902 = vmul.f32 %v2755, %v2844
        %v2903 = vmul.f32 %v2757, %v2845
        %v2904 = vmul.f32 %v2759, %v2844
        %v2905 = vmul.f32 %v2761, %v2845
        %v2906 = vmul.f32 %v2763, %v2844
        %v2907 = vmul.f32 %v2765, %v2845
        %v2908 = vmul.f32 %v2767, %v2844
        %v2909 = vmul.f32 %v2769, %v2845
        %2910 = vst [vmem:[%s653] sm:$0xff] %v2846
        %2911 = vst [vmem:[%s653 + $0x8] sm:$0xff] %v2847
        %2912 = vst [vmem:[%s653 + $0x10] sm:$0xff] %v2848
        %2913 = vst [vmem:[%s653 + $0x18] sm:$0xff] %v2849
        %2914 = vst [vmem:[%s653 + $0x20] sm:$0xff] %v2850
        %2915 = vst [vmem:[%s653 + $0x28] sm:$0xff] %v2851
        %2916 = vst [vmem:[%s653 + $0x30] sm:$0xff] %v2852
        %2917 = vst [vmem:[%s653 + $0x38] sm:$0xff] %v2853
        %2918 = vst [vmem:[%s653 + $0x40] sm:$0xff] %v2854
        %2919 = vst [vmem:[%s653 + $0x48] sm:$0xff] %v2855
        %2920 = vst [vmem:[%s653 + $0x50] sm:$0xff] %v2856
        %2921 = vst [vmem:[%s653 + $0x58] sm:$0xff] %v2857
        %2922 = vst [vmem:[%s653 + $0x60] sm:$0xff] %v2858
        %2923 = vst [vmem:[%s653 + $0x68] sm:$0xff] %v2859
        %2924 = vst [vmem:[%s653 + $0x70] sm:$0xff] %v2860
        %2925 = vst [vmem:[%s653 + $0x78] sm:$0xff] %v2861
        %2926 = vst [vmem:[%s653 + $0x80] sm:$0xff] %v2862
        %2927 = vst [vmem:[%s653 + $0x88] sm:$0xff] %v2863
        %2928 = vst [vmem:[%s653 + $0x90] sm:$0xff] %v2864
        %2929 = vst [vmem:[%s653 + $0x98] sm:$0xff] %v2865
        %2930 = vst [vmem:[%s653 + $0xa0] sm:$0xff] %v2866
        %2931 = vst [vmem:[%s653 + $0xa8] sm:$0xff] %v2867
        %2932 = vst [vmem:[%s653 + $0xb0] sm:$0xff] %v2868
        %2933 = vst [vmem:[%s653 + $0xb8] sm:$0xff] %v2869
        %2934 = vst [vmem:[%s653 + $0xc0] sm:$0xff] %v2870
        %2935 = vst [vmem:[%s653 + $0xc8] sm:$0xff] %v2871
        %2936 = vst [vmem:[%s653 + $0xd0] sm:$0xff] %v2872
        %2937 = vst [vmem:[%s653 + $0xd8] sm:$0xff] %v2873
        %2938 = vst [vmem:[%s653 + $0xe0] sm:$0xff] %v2874
        %2939 = vst [vmem:[%s653 + $0xe8] sm:$0xff] %v2875
        %2940 = vst [vmem:[%s653 + $0xf0] sm:$0xff] %v2876
        %2941 = vst [vmem:[%s653 + $0xf8] sm:$0xff] %v2877
        %2942 = vst [vmem:[%s653 + $0x100] sm:$0xff] %v2878
        %2943 = vst [vmem:[%s653 + $0x108] sm:$0xff] %v2879
        %2944 = vst [vmem:[%s653 + $0x110] sm:$0xff] %v2880
        %2945 = vst [vmem:[%s653 + $0x118] sm:$0xff] %v2881
        %2946 = vst [vmem:[%s653 + $0x120] sm:$0xff] %v2882
        %2947 = vst [vmem:[%s653 + $0x128] sm:$0xff] %v2883
        %2948 = vst [vmem:[%s653 + $0x130] sm:$0xff] %v2884
        %2949 = vst [vmem:[%s653 + $0x138] sm:$0xff] %v2885
        %2950 = vst [vmem:[%s653 + $0x140] sm:$0xff] %v2886
        %2951 = vst [vmem:[%s653 + $0x148] sm:$0xff] %v2887
        %2952 = vst [vmem:[%s653 + $0x150] sm:$0xff] %v2888
        %2953 = vst [vmem:[%s653 + $0x158] sm:$0xff] %v2889
        %2954 = vst [vmem:[%s653 + $0x160] sm:$0xff] %v2890
        %2955 = vst [vmem:[%s653 + $0x168] sm:$0xff] %v2891
        %2956 = vst [vmem:[%s653 + $0x170] sm:$0xff] %v2892
        %2957 = vst [vmem:[%s653 + $0x178] sm:$0xff] %v2893
        %2958 = vst [vmem:[%s653 + $0x180] sm:$0xff] %v2894
        %2959 = vst [vmem:[%s653 + $0x188] sm:$0xff] %v2895
        %2960 = vst [vmem:[%s653 + $0x190] sm:$0xff] %v2896
        %2961 = vst [vmem:[%s653 + $0x198] sm:$0xff] %v2897
        %2962 = vst [vmem:[%s653 + $0x1a0] sm:$0xff] %v2898
        %2963 = vst [vmem:[%s653 + $0x1a8] sm:$0xff] %v2899
        %2964 = vst [vmem:[%s653 + $0x1b0] sm:$0xff] %v2900
        %2965 = vst [vmem:[%s653 + $0x1b8] sm:$0xff] %v2901
        %2966 = vst [vmem:[%s653 + $0x1c0] sm:$0xff] %v2902
        %2967 = vst [vmem:[%s653 + $0x1c8] sm:$0xff] %v2903
        %2968 = vst [vmem:[%s653 + $0x1d0] sm:$0xff] %v2904
        %2969 = vst [vmem:[%s653 + $0x1d8] sm:$0xff] %v2905
        %2970 = vst [vmem:[%s653 + $0x1e0] sm:$0xff] %v2906
        %2971 = vst [vmem:[%s653 + $0x1e8] sm:$0xff] %v2907
        %2972 = vst [vmem:[%s653 + $0x1f0] sm:$0xff] %v2908
        %2973 = vst [vmem:[%s653 + $0x1f8] sm:$0xff] %v2909
        %v2974 = vadd.f32 %v2643, %v2645
        %2975 = vadd.xlane.f32.xlu0 %v2974
        %v2976 = vpop.xlane.xlu0 %2975
        %v2977 = vadd.f32 %v2647, %v2649
        %2978 = vadd.xlane.f32.xlu0 %v2977
        %v2979 = vpop.xlane.xlu0 %2978
        %v2980 = vadd.f32 %v2651, %v2653
        %2981 = vadd.xlane.f32.xlu0 %v2980
        %v2982 = vpop.xlane.xlu0 %2981
        %v2983 = vadd.f32 %v2655, %v2657
        %2984 = vadd.xlane.f32.xlu0 %v2983
        %v2985 = vpop.xlane.xlu0 %2984
        %v2986 = vadd.f32 %v2659, %v2661
        %2987 = vadd.xlane.f32.xlu0 %v2986
        %v2988 = vpop.xlane.xlu0 %2987
        %v2989 = vadd.f32 %v2663, %v2665
        %2990 = vadd.xlane.f32.xlu0 %v2989
        %v2991 = vpop.xlane.xlu0 %2990
        %v2992 = vadd.f32 %v2667, %v2669
        %2993 = vadd.xlane.f32.xlu0 %v2992
        %v2994 = vpop.xlane.xlu0 %2993
        %v2995 = vadd.f32 %v2671, %v2673
        %2996 = vadd.xlane.f32.xlu0 %v2995
        %v2997 = vpop.xlane.xlu0 %2996
        %v2998 = vadd.f32 %v2675, %v2677
        %2999 = vadd.xlane.f32.xlu0 %v2998
        %v3000 = vpop.xlane.xlu0 %2999
        %v3001 = vadd.f32 %v2679, %v2681
        %3002 = vadd.xlane.f32.xlu0 %v3001
        %v3003 = vpop.xlane.xlu0 %3002
        %v3004 = vadd.f32 %v2683, %v2685
        %3005 = vadd.xlane.f32.xlu0 %v3004
        %v3006 = vpop.xlane.xlu0 %3005
        %v3007 = vadd.f32 %v2687, %v2689
        %3008 = vadd.xlane.f32.xlu0 %v3007
        %v3009 = vpop.xlane.xlu0 %3008
        %v3010 = vadd.f32 %v2691, %v2693
        %3011 = vadd.xlane.f32.xlu0 %v3010
        %v3012 = vpop.xlane.xlu0 %3011
        %v3013 = vadd.f32 %v2695, %v2697
        %3014 = vadd.xlane.f32.xlu0 %v3013
        %v3015 = vpop.xlane.xlu0 %3014
        %v3016 = vadd.f32 %v2699, %v2701
        %3017 = vadd.xlane.f32.xlu0 %v3016
        %v3018 = vpop.xlane.xlu0 %3017
        %v3019 = vadd.f32 %v2703, %v2705
        %3020 = vadd.xlane.f32.xlu0 %v3019
        %v3021 = vpop.xlane.xlu0 %3020
        %v3022 = vadd.f32 %v2707, %v2709
        %3023 = vadd.xlane.f32.xlu0 %v3022
        %v3024 = vpop.xlane.xlu0 %3023
        %v3025 = vadd.f32 %v2711, %v2713
        %3026 = vadd.xlane.f32.xlu0 %v3025
        %v3027 = vpop.xlane.xlu0 %3026
        %v3028 = vadd.f32 %v2715, %v2717
        %3029 = vadd.xlane.f32.xlu0 %v3028
        %v3030 = vpop.xlane.xlu0 %3029
        %v3031 = vadd.f32 %v2719, %v2721
        %3032 = vadd.xlane.f32.xlu0 %v3031
        %v3033 = vpop.xlane.xlu0 %3032
        %v3034 = vadd.f32 %v2723, %v2725
        %3035 = vadd.xlane.f32.xlu0 %v3034
        %v3036 = vpop.xlane.xlu0 %3035
        %v3037 = vadd.f32 %v2727, %v2729
        %3038 = vadd.xlane.f32.xlu0 %v3037
        %v3039 = vpop.xlane.xlu0 %3038
        %v3040 = vadd.f32 %v2731, %v2733
        %3041 = vadd.xlane.f32.xlu0 %v3040
        %v3042 = vpop.xlane.xlu0 %3041
        %v3043 = vadd.f32 %v2735, %v2737
        %3044 = vadd.xlane.f32.xlu0 %v3043
        %v3045 = vpop.xlane.xlu0 %3044
        %v3046 = vadd.f32 %v2739, %v2741
        %3047 = vadd.xlane.f32.xlu0 %v3046
        %v3048 = vpop.xlane.xlu0 %3047
        %v3049 = vadd.f32 %v2743, %v2745
        %3050 = vadd.xlane.f32.xlu0 %v3049
        %v3051 = vpop.xlane.xlu0 %3050
        %v3052 = vadd.f32 %v2747, %v2749
        %3053 = vadd.xlane.f32.xlu0 %v3052
        %v3054 = vpop.xlane.xlu0 %3053
        %v3055 = vadd.f32 %v2751, %v2753
        %3056 = vadd.xlane.f32.xlu0 %v3055
        %v3057 = vpop.xlane.xlu0 %3056
        %v3058 = vadd.f32 %v2755, %v2757
        %3059 = vadd.xlane.f32.xlu0 %v3058
        %v3060 = vpop.xlane.xlu0 %3059
        %v3061 = vadd.f32 %v2759, %v2761
        %3062 = vadd.xlane.f32.xlu0 %v3061
        %v3063 = vpop.xlane.xlu0 %3062
        %v3064 = vadd.f32 %v2763, %v2765
        %3065 = vadd.xlane.f32.xlu0 %v3064
        %v3066 = vpop.xlane.xlu0 %3065
        %v3067 = vadd.f32 %v2767, %v2769
        %3068 = vadd.xlane.f32.xlu0 %v3067
        %v3069 = vpop.xlane.xlu0 %3068
        %v3070 = vrcp.pop %v2976
        %v3071 = vrcp.pop %v2979
        %v3072 = vrcp.pop %v2982
        %v3073 = vrcp.pop %v2985
        %v3074 = vrcp.pop %v2988
        %v3075 = vrcp.pop %v2991
        %v3076 = vrcp.pop %v2994
        %v3077 = vrcp.pop %v2997
        %v3078 = vrcp.pop %v3000
        %v3079 = vrcp.pop %v3003
        %v3080 = vrcp.pop %v3006
        %v3081 = vrcp.pop %v3009
        %v3082 = vrcp.pop %v3012
        %v3083 = vrcp.pop %v3015
        %v3084 = vrcp.pop %v3018
        %v3085 = vrcp.pop %v3021
        %v3086 = vrcp.pop %v3024
        %v3087 = vrcp.pop %v3027
        %v3088 = vrcp.pop %v3030
        %v3089 = vrcp.pop %v3033
        %v3090 = vrcp.pop %v3036
        %v3091 = vrcp.pop %v3039
        %v3092 = vrcp.pop %v3042
        %v3093 = vrcp.pop %v3045
        %v3094 = vrcp.pop %v3048
        %v3095 = vrcp.pop %v3051
        %v3096 = vrcp.pop %v3054
        %v3097 = vrcp.pop %v3057
        %v3098 = vrcp.pop %v3060
        %v3099 = vrcp.pop %v3063
        %v3100 = vrcp.pop %v3066
        %v3101 = vrcp.pop %v3069
        %v3102 = vmul.f32 %v2643, %v3070
        %v3103 = vmul.f32 %v2645, %v3070
        %v3104 = vmul.f32 %v2647, %v3071
        %v3105 = vmul.f32 %v2649, %v3071
        %v3106 = vmul.f32 %v2651, %v3072
        %v3107 = vmul.f32 %v2653, %v3072
        %v3108 = vmul.f32 %v2655, %v3073
        %v3109 = vmul.f32 %v2657, %v3073
        %v3110 = vmul.f32 %v2659, %v3074
        %v3111 = vmul.f32 %v2661, %v3074
        %v3112 = vmul.f32 %v2663, %v3075
        %v3113 = vmul.f32 %v2665, %v3075
        %v3114 = vmul.f32 %v2667, %v3076
        %v3115 = vmul.f32 %v2669, %v3076
        %v3116 = vmul.f32 %v2671, %v3077
        %v3117 = vmul.f32 %v2673, %v3077
        %v3118 = vmul.f32 %v2675, %v3078
        %v3119 = vmul.f32 %v2677, %v3078
        %v3120 = vmul.f32 %v2679, %v3079
        %v3121 = vmul.f32 %v2681, %v3079
        %v3122 = vmul.f32 %v2683, %v3080
        %v3123 = vmul.f32 %v2685, %v3080
        %v3124 = vmul.f32 %v2687, %v3081
        %v3125 = vmul.f32 %v2689, %v3081
        %v3126 = vmul.f32 %v2691, %v3082
        %v3127 = vmul.f32 %v2693, %v3082
        %v3128 = vmul.f32 %v2695, %v3083
        %v3129 = vmul.f32 %v2697, %v3083
        %v3130 = vmul.f32 %v2699, %v3084
        %v3131 = vmul.f32 %v2701, %v3084
        %v3132 = vmul.f32 %v2703, %v3085
        %v3133 = vmul.f32 %v2705, %v3085
        %v3134 = vmul.f32 %v2707, %v3086
        %v3135 = vmul.f32 %v2709, %v3086
        %v3136 = vmul.f32 %v2711, %v3087
        %v3137 = vmul.f32 %v2713, %v3087
        %v3138 = vmul.f32 %v2715, %v3088
        %v3139 = vmul.f32 %v2717, %v3088
        %v3140 = vmul.f32 %v2719, %v3089
        %v3141 = vmul.f32 %v2721, %v3089
        %v3142 = vmul.f32 %v2723, %v3090
        %v3143 = vmul.f32 %v2725, %v3090
        %v3144 = vmul.f32 %v2727, %v3091
        %v3145 = vmul.f32 %v2729, %v3091
        %v3146 = vmul.f32 %v2731, %v3092
        %v3147 = vmul.f32 %v2733, %v3092
        %v3148 = vmul.f32 %v2735, %v3093
        %v3149 = vmul.f32 %v2737, %v3093
        %v3150 = vmul.f32 %v2739, %v3094
        %v3151 = vmul.f32 %v2741, %v3094
        %v3152 = vmul.f32 %v2743, %v3095
        %v3153 = vmul.f32 %v2745, %v3095
        %v3154 = vmul.f32 %v2747, %v3096
        %v3155 = vmul.f32 %v2749, %v3096
        %v3156 = vmul.f32 %v2751, %v3097
        %v3157 = vmul.f32 %v2753, %v3097
        %v3158 = vmul.f32 %v2755, %v3098
        %v3159 = vmul.f32 %v2757, %v3098
        %v3160 = vmul.f32 %v2759, %v3099
        %v3161 = vmul.f32 %v2761, %v3099
        %v3162 = vmul.f32 %v2763, %v3100
        %v3163 = vmul.f32 %v2765, %v3100
        %v3164 = vmul.f32 %v2767, %v3101
        %v3165 = vmul.f32 %v2769, %v3101
        %v3166 = vpack.c.bf16 %v3104, %v3102
        %v3167 = vpack.c.bf16 %v3105, %v3103
        %v3168 = vpack.c.bf16 %v3108, %v3106
        %v3169 = vpack.c.bf16 %v3109, %v3107
        %v3170 = vpack.c.bf16 %v3112, %v3110
        %v3171 = vpack.c.bf16 %v3113, %v3111
        %v3172 = vpack.c.bf16 %v3116, %v3114
        %v3173 = vpack.c.bf16 %v3117, %v3115
        %v3174 = vpack.c.bf16 %v3120, %v3118
        %v3175 = vpack.c.bf16 %v3121, %v3119
        %v3176 = vpack.c.bf16 %v3124, %v3122
        %v3177 = vpack.c.bf16 %v3125, %v3123
        %v3178 = vpack.c.bf16 %v3128, %v3126
        %v3179 = vpack.c.bf16 %v3129, %v3127
        %v3180 = vpack.c.bf16 %v3132, %v3130
        %v3181 = vpack.c.bf16 %v3133, %v3131
        %v3182 = vpack.c.bf16 %v3136, %v3134
        %v3183 = vpack.c.bf16 %v3137, %v3135
        %v3184 = vpack.c.bf16 %v3140, %v3138
        %v3185 = vpack.c.bf16 %v3141, %v3139
        %v3186 = vpack.c.bf16 %v3144, %v3142
        %v3187 = vpack.c.bf16 %v3145, %v3143
        %v3188 = vpack.c.bf16 %v3148, %v3146
        %v3189 = vpack.c.bf16 %v3149, %v3147
        %v3190 = vpack.c.bf16 %v3152, %v3150
        %v3191 = vpack.c.bf16 %v3153, %v3151
        %v3192 = vpack.c.bf16 %v3156, %v3154
        %v3193 = vpack.c.bf16 %v3157, %v3155
        %v3194 = vpack.c.bf16 %v3160, %v3158
        %v3195 = vpack.c.bf16 %v3161, %v3159
        %v3196 = vpack.c.bf16 %v3164, %v3162
        %v3197 = vpack.c.bf16 %v3165, %v3163
        %v3198 = vpack.c.bf16 %v695, %v694
        %v3199 = vpack.c.bf16 %v697, %v696
        %v3200 = vpack.c.bf16 %v699, %v698
        %v3201 = vpack.c.bf16 %v701, %v700
        %v3202 = vpack.c.bf16 %v703, %v702
        %v3203 = vpack.c.bf16 %v705, %v704
        %v3204 = vpack.c.bf16 %v707, %v706
        %v3205 = vpack.c.bf16 %v709, %v708
        %v3206 = vpack.c.bf16 %v711, %v710
        %v3207 = vpack.c.bf16 %v713, %v712
        %v3208 = vpack.c.bf16 %v715, %v714
        %v3209 = vpack.c.bf16 %v717, %v716
        %v3210 = vpack.c.bf16 %v719, %v718
        %v3211 = vpack.c.bf16 %v721, %v720
        %v3212 = vpack.c.bf16 %v723, %v722
        %v3213 = vpack.c.bf16 %v725, %v724
        %3214 = vmatprep.subr.bf16.mxu0 0
        %3215 = vmatpush1.bf16.msra.mxu0 %v3198
        %3216 = vmatprep.subr.bf16.mxu0 0
        %3217 = vmatpush1.bf16.msra.mxu0 %v3199
        %3218 = vmatprep.subr.bf16.mxu0 0
        %3219 = vmatpush1.bf16.msra.mxu0 %v3200
        %3220 = vmatprep.subr.bf16.mxu0 0
        %3221 = vmatpush1.bf16.msra.mxu0 %v3201
        %3222 = vmatprep.subr.bf16.mxu0 0
        %3223 = vmatpush1.bf16.msra.mxu0 %v3202
        %3224 = vmatprep.subr.bf16.mxu0 0
        %3225 = vmatpush1.bf16.msra.mxu0 %v3203
        %3226 = vmatprep.subr.bf16.mxu0 0
        %3227 = vmatpush1.bf16.msra.mxu0 %v3204
        %3228 = vmatprep.subr.bf16.mxu0 0
        %3229 = vmatpush1.bf16.msra.mxu0 %v3205
        %3230 = vmatprep.subr.bf16.mxu0 0
        %3231 = vmatpush1.bf16.msra.mxu0 %v3206
        %3232 = vmatprep.subr.bf16.mxu0 0
        %3233 = vmatpush1.bf16.msra.mxu0 %v3207
        %3234 = vmatprep.subr.bf16.mxu0 0
        %3235 = vmatpush1.bf16.msra.mxu0 %v3208
        %3236 = vmatprep.subr.bf16.mxu0 0
        %3237 = vmatpush1.bf16.msra.mxu0 %v3209
        %3238 = vmatprep.subr.bf16.mxu0 0
        %3239 = vmatpush1.bf16.msra.mxu0 %v3210
        %3240 = vmatprep.subr.bf16.mxu0 0
        %3241 = vmatpush1.bf16.msra.mxu0 %v3211
        %3242 = vmatprep.subr.bf16.mxu0 0
        %3243 = vmatpush1.bf16.msra.mxu0 %v3212
        %3244 = vmatprep.subr.bf16.mxu0 0
        %3245 = vmatpush1.bf16.msra.mxu0 %v3213
        %3246 = vmatprep.mubr.bf16.mxu0 %v3167
        %3247 = vmatmul.mubr.bf16.gmra.mrb[0].mxu0 %v3166
        %v3248 = vpop.f32.mrb[0].mxu0
        %v3249 = vadd.f32 0.0, %v3248
        %v3250 = vpop.f32.mrb[0].mxu0
        %v3251 = vpop.f32.mrb[0].mxu0
        %v3252 = vadd.f32 0.0, %v3251
        %v3253 = vpop.f32.mrb[0].mxu0
        %3254 = vmatprep.mubr.bf16.mxu0 %v3169
        %3255 = vmatmul.mubr.bf16.gmra.mrb[0].mxu0 %v3168
        %v3256 = vpop.f32.mrb[0].mxu0
        %v3257 = vadd.f32 0.0, %v3256
        %v3258 = vpop.f32.mrb[0].mxu0
        %v3259 = vpop.f32.mrb[0].mxu0
        %v3260 = vadd.f32 0.0, %v3259
        %v3261 = vpop.f32.mrb[0].mxu0
        %3262 = vmatprep.mubr.bf16.mxu0 %v3171
        %3263 = vmatmul.mubr.bf16.gmra.mrb[0].mxu0 %v3170
        %v3264 = vpop.f32.mrb[0].mxu0
        %v3265 = vadd.f32 0.0, %v3264
        %v3266 = vpop.f32.mrb[0].mxu0
        %v3267 = vpop.f32.mrb[0].mxu0
        %v3268 = vadd.f32 0.0, %v3267
        %v3269 = vpop.f32.mrb[0].mxu0
        %3270 = vmatprep.mubr.bf16.mxu0 %v3173
        %3271 = vmatmul.mubr.bf16.gmra.mrb[0].mxu0 %v3172
        %v3272 = vpop.f32.mrb[0].mxu0
        %v3273 = vadd.f32 0.0, %v3272
        %v3274 = vpop.f32.mrb[0].mxu0
        %v3275 = vpop.f32.mrb[0].mxu0
        %v3276 = vadd.f32 0.0, %v3275
        %v3277 = vpop.f32.mrb[0].mxu0
        %3278 = vmatprep.mubr.bf16.mxu0 %v3175
        %3279 = vmatmul.mubr.bf16.gmra.mrb[0].mxu0 %v3174
        %v3280 = vpop.f32.mrb[0].mxu0
        %v3281 = vadd.f32 0.0, %v3280
        %v3282 = vpop.f32.mrb[0].mxu0
        %v3283 = vpop.f32.mrb[0].mxu0
        %v3284 = vadd.f32 0.0, %v3283
        %v3285 = vpop.f32.mrb[0].mxu0
        %3286 = vmatprep.mubr.bf16.mxu0 %v3177
        %3287 = vmatmul.mubr.bf16.gmra.mrb[0].mxu0 %v3176
        %v3288 = vpop.f32.mrb[0].mxu0
        %v3289 = vadd.f32 0.0, %v3288
        %v3290 = vpop.f32.mrb[0].mxu0
        %v3291 = vpop.f32.mrb[0].mxu0
        %v3292 = vadd.f32 0.0, %v3291
        %v3293 = vpop.f32.mrb[0].mxu0
        %3294 = vmatprep.mubr.bf16.mxu0 %v3179
        %3295 = vmatmul.mubr.bf16.gmra.mrb[0].mxu0 %v3178
        %v3296 = vpop.f32.mrb[0].mxu0
        %v3297 = vadd.f32 0.0, %v3296
        %v3298 = vpop.f32.mrb[0].mxu0
        %v3299 = vpop.f32.mrb[0].mxu0
        %v3300 = vadd.f32 0.0, %v3299
        %v3301 = vpop.f32.mrb[0].mxu0
        %3302 = vmatprep.mubr.bf16.mxu0 %v3181
        %3303 = vmatmul.mubr.bf16.gmra.mrb[0].mxu0 %v3180
        %v3304 = vpop.f32.mrb[0].mxu0
        %v3305 = vadd.f32 0.0, %v3304
        %v3306 = vpop.f32.mrb[0].mxu0
        %v3307 = vpop.f32.mrb[0].mxu0
        %v3308 = vadd.f32 0.0, %v3307
        %v3309 = vpop.f32.mrb[0].mxu0
        %3310 = vmatprep.mubr.bf16.mxu0 %v3183
        %3311 = vmatmul.mubr.bf16.gmra.mrb[0].mxu0 %v3182
        %v3312 = vpop.f32.mrb[0].mxu0
        %v3313 = vadd.f32 0.0, %v3312
        %v3314 = vpop.f32.mrb[0].mxu0
        %v3315 = vpop.f32.mrb[0].mxu0
        %v3316 = vadd.f32 0.0, %v3315
        %v3317 = vpop.f32.mrb[0].mxu0
        %3318 = vmatprep.mubr.bf16.mxu0 %v3185
        %3319 = vmatmul.mubr.bf16.gmra.mrb[0].mxu0 %v3184
        %v3320 = vpop.f32.mrb[0].mxu0
        %v3321 = vadd.f32 0.0, %v3320
        %v3322 = vpop.f32.mrb[0].mxu0
        %v3323 = vpop.f32.mrb[0].mxu0
        %v3324 = vadd.f32 0.0, %v3323
        %v3325 = vpop.f32.mrb[0].mxu0
        %3326 = vmatprep.mubr.bf16.mxu0 %v3187
        %3327 = vmatmul.mubr.bf16.gmra.mrb[0].mxu0 %v3186
        %v3328 = vpop.f32.mrb[0].mxu0
        %v3329 = vadd.f32 0.0, %v3328
        %v3330 = vpop.f32.mrb[0].mxu0
        %v3331 = vpop.f32.mrb[0].mxu0
        %v3332 = vadd.f32 0.0, %v3331
        %v3333 = vpop.f32.mrb[0].mxu0
        %3334 = vmatprep.mubr.bf16.mxu0 %v3189
        %3335 = vmatmul.mubr.bf16.gmra.mrb[0].mxu0 %v3188
        %v3336 = vpop.f32.mrb[0].mxu0
        %v3337 = vadd.f32 0.0, %v3336
        %v3338 = vpop.f32.mrb[0].mxu0
        %v3339 = vpop.f32.mrb[0].mxu0
        %v3340 = vadd.f32 0.0, %v3339
        %v3341 = vpop.f32.mrb[0].mxu0
        %3342 = vmatprep.mubr.bf16.mxu0 %v3191
        %3343 = vmatmul.mubr.bf16.gmra.mrb[0].mxu0 %v3190
        %v3344 = vpop.f32.mrb[0].mxu0
        %v3345 = vadd.f32 0.0, %v3344
        %v3346 = vpop.f32.mrb[0].mxu0
        %v3347 = vpop.f32.mrb[0].mxu0
        %v3348 = vadd.f32 0.0, %v3347
        %v3349 = vpop.f32.mrb[0].mxu0
        %3350 = vmatprep.mubr.bf16.mxu0 %v3193
        %3351 = vmatmul.mubr.bf16.gmra.mrb[0].mxu0 %v3192
        %v3352 = vpop.f32.mrb[0].mxu0
        %v3353 = vadd.f32 0.0, %v3352
        %v3354 = vpop.f32.mrb[0].mxu0
        %v3355 = vpop.f32.mrb[0].mxu0
        %v3356 = vadd.f32 0.0, %v3355
        %v3357 = vpop.f32.mrb[0].mxu0
        %3358 = vmatprep.mubr.bf16.mxu0 %v3195
        %3359 = vmatmul.mubr.bf16.gmra.mrb[0].mxu0 %v3194
        %v3360 = vpop.f32.mrb[0].mxu0
        %v3361 = vadd.f32 0.0, %v3360
        %v3362 = vpop.f32.mrb[0].mxu0
        %v3363 = vpop.f32.mrb[0].mxu0
        %v3364 = vadd.f32 0.0, %v3363
        %v3365 = vpop.f32.mrb[0].mxu0
        %3366 = vmatprep.mubr.bf16.mxu0 %v3197
        %3367 = vmatmul.mubr.bf16.gmra.mrb[0].mxu0 %v3196
        %v3368 = vpop.f32.mrb[0].mxu0
        %v3369 = vadd.f32 0.0, %v3368
        %v3370 = vpop.f32.mrb[0].mxu0
        %v3371 = vpop.f32.mrb[0].mxu0
        %v3372 = vadd.f32 0.0, %v3371
        %v3373 = vpop.f32.mrb[0].mxu0
        %3374 = vdwg.mxu0
        %v3375 = vsel %vm1518, %v694, 0.0
        %v3376 = vsel %vm1518, %v695, 0.0
        %v3377 = vadd.f32 %v3375, %v3376
        %v3378 = vsel %vm1518, %v696, 0.0
        %v3379 = vadd.f32 %v3377, %v3378
        %v3380 = vsel %vm1518, %v697, 0.0
        %v3381 = vadd.f32 %v3379, %v3380
        %v3382 = vsel %vm1518, %v698, 0.0
        %v3383 = vadd.f32 %v3381, %v3382
        %v3384 = vsel %vm1518, %v699, 0.0
        %v3385 = vadd.f32 %v3383, %v3384
        %v3386 = vsel %vm1518, %v700, 0.0
        %v3387 = vadd.f32 %v3385, %v3386
        %v3388 = vsel %vm1518, %v701, 0.0
        %v3389 = vadd.f32 %v3387, %v3388
        %v3390 = vsel %vm1518, %v702, 0.0
        %v3391 = vadd.f32 %v3389, %v3390
        %v3392 = vsel %vm1518, %v703, 0.0
        %v3393 = vadd.f32 %v3391, %v3392
        %v3394 = vsel %vm1518, %v704, 0.0
        %v3395 = vadd.f32 %v3393, %v3394
        %v3396 = vsel %vm1518, %v705, 0.0
        %v3397 = vadd.f32 %v3395, %v3396
        %v3398 = vsel %vm1518, %v706, 0.0
        %v3399 = vadd.f32 %v3397, %v3398
        %v3400 = vsel %vm1518, %v707, 0.0
        %v3401 = vadd.f32 %v3399, %v3400
        %v3402 = vsel %vm1518, %v708, 0.0
        %v3403 = vadd.f32 %v3401, %v3402
        %v3404 = vsel %vm1518, %v709, 0.0
        %v3405 = vadd.f32 %v3403, %v3404
        %v3406 = vsel %vm1518, %v710, 0.0
        %v3407 = vadd.f32 %v3405, %v3406
        %v3408 = vsel %vm1518, %v711, 0.0
        %v3409 = vadd.f32 %v3407, %v3408
        %v3410 = vsel %vm1518, %v712, 0.0
        %v3411 = vadd.f32 %v3409, %v3410
        %v3412 = vsel %vm1518, %v713, 0.0
        %v3413 = vadd.f32 %v3411, %v3412
        %v3414 = vsel %vm1518, %v714, 0.0
        %v3415 = vadd.f32 %v3413, %v3414
        %v3416 = vsel %vm1518, %v715, 0.0
        %v3417 = vadd.f32 %v3415, %v3416
        %v3418 = vsel %vm1518, %v716, 0.0
        %v3419 = vadd.f32 %v3417, %v3418
        %v3420 = vsel %vm1518, %v717, 0.0
        %v3421 = vadd.f32 %v3419, %v3420
        %v3422 = vsel %vm1518, %v718, 0.0
        %v3423 = vadd.f32 %v3421, %v3422
        %v3424 = vsel %vm1518, %v719, 0.0
        %v3425 = vadd.f32 %v3423, %v3424
        %v3426 = vsel %vm1518, %v720, 0.0
        %v3427 = vadd.f32 %v3425, %v3426
        %v3428 = vsel %vm1518, %v721, 0.0
        %v3429 = vadd.f32 %v3427, %v3428
        %v3430 = vsel %vm1518, %v722, 0.0
        %v3431 = vadd.f32 %v3429, %v3430
        %v3432 = vsel %vm1518, %v723, 0.0
        %v3433 = vadd.f32 %v3431, %v3432
        %v3434 = vsel %vm1518, %v724, 0.0
        %v3435 = vadd.f32 %v3433, %v3434
        %v3436 = vsel %vm1518, %v725, 0.0
        %v3437 = vadd.f32 %v3435, %v3436
        %v3438 = vrot.slane %v3437, 4
        %v3439 = vadd.f32 %v3437, %v3438
        %v3440 = vrot.slane %v3439, 2
        %v3441 = vadd.f32 %v3439, %v3440
        %v3442 = vrot.slane %v3441, 1
        %v3443 = vadd.f32 %v3441, %v3442
        %v3444 = vld [vmem:[#allocation9] sm:$0xff]
        %v3445 = vld [vmem:[#allocation9 + $0x8] sm:$0xff]
        %v3446 = vld [vmem:[#allocation9 + $0x10] sm:$0xff]
        %v3447 = vld [vmem:[#allocation9 + $0x18] sm:$0xff]
        %v3448 = vld [vmem:[#allocation11] sm:$0x1]
        %v3450 = vsel %vm1518, %v3443, 0
        %3452 = vmatprep.subr.mxu0 0.0
        %3453 = vmatpush1.msra.mxu0 %v3444
        %3454 = vmatprep.subr.mxu0 0.0
        %3455 = vmatpush1.msra.mxu0 %v3445
        %3456 = vmatprep.subr.mxu0 0.0
        %3457 = vmatpush1.msra.mxu0 %v3446
        %3458 = vmatprep.subr.mxu0 0.0
        %3459 = vmatpush1.msra.mxu0 %v3447
        %3460 = vmatprep.subr.mxu0 0.0
        %3461 = vmatpush1.msra.mxu0 0.0
        %3462 = vmatprep.subr.mxu0 0.0
        %3463 = vmatpush1.msra.mxu0 0.0
        %3464 = vmatprep.subr.mxu0 0.0
        %3465 = vmatpush1.msra.mxu0 0.0
        %3466 = vmatprep.subr.mxu0 0.0
        %3467 = vmatpush1.msra.mxu0 0.0
        %3468 = vmatprep.subr.mxu0 0.0
        %3469 = vmatpush1.msra.mxu0 0.0
        %3470 = vmatprep.subr.mxu0 0.0
        %3471 = vmatpush1.msra.mxu0 0.0
        %3472 = vmatprep.subr.mxu0 0.0
        %3473 = vmatpush1.msra.mxu0 0.0
        %3474 = vmatprep.subr.mxu0 0.0
        %3475 = vmatpush1.msra.mxu0 0.0
        %3476 = vmatprep.subr.mxu0 0.0
        %3477 = vmatpush1.msra.mxu0 0.0
        %3478 = vmatprep.subr.mxu0 0.0
        %3479 = vmatpush1.msra.mxu0 0.0
        %3480 = vmatprep.subr.mxu0 0.0
        %3481 = vmatpush1.msra.mxu0 0.0
        %3482 = vmatprep.subr.mxu0 0.0
        %3483 = vmatpush1.msra.mxu0 0.0
        %3484 = vmatprep.subr.mxu0 0.0
        %3485 = vmatpush1.msra.mxu0 0.0
        %3486 = vmatprep.subr.mxu0 0.0
        %3487 = vmatpush1.msra.mxu0 0.0
        %3488 = vmatprep.subr.mxu0 0.0
        %3489 = vmatpush1.msra.mxu0 0.0
        %3490 = vmatprep.subr.mxu0 0.0
        %3491 = vmatpush1.msra.mxu0 0.0
        %3492 = vmatprep.subr.mxu0 0.0
        %3493 = vmatpush1.msra.mxu0 0.0
        %3494 = vmatprep.subr.mxu0 0.0
        %3495 = vmatpush1.msra.mxu0 0.0
        %3496 = vmatprep.subr.mxu0 0.0
        %3497 = vmatpush1.msra.mxu0 0.0
        %3498 = vmatprep.subr.mxu0 0.0
        %3499 = vmatpush1.msra.mxu0 0.0
        %3500 = vmatprep.subr.mxu0 0.0
        %3501 = vmatpush1.msra.mxu0 0.0
        %3502 = vmatprep.subr.mxu0 0.0
        %3503 = vmatpush1.msra.mxu0 0.0
        %3504 = vmatprep.subr.mxu0 0.0
        %3505 = vmatpush1.msra.mxu0 0.0
        %3506 = vmatprep.subr.mxu0 0.0
        %3507 = vmatpush1.msra.mxu0 0.0
        %3508 = vmatprep.subr.mxu0 0.0
        %3509 = vmatpush1.msra.mxu0 0.0
        %3510 = vmatprep.subr.mxu0 0.0
        %3511 = vmatpush1.msra.mxu0 0.0
        %3512 = vmatprep.subr.mxu0 0.0
        %3513 = vmatpush1.msra.mxu0 0.0
        %3514 = vmatprep.subr.mxu0 0.0
        %3515 = vmatpush1.msra.mxu0 0.0
        %3516 = vmatprep.mubr.f32.mxu0 0.0
        %3517 = vmatmul.mubr.f32.gmra.mrb[0].mxu0 %v3450
        %v3518 = vpop.f32.mrb[0].mxu0
        %v3519 = vadd.f32 %v3448, %v3518
        %v3520 = vpop.f32.mrb[0].mxu0
        %3521 = vdwg.mxu0
        %v3522 = vpack.c.bf16 %v3252, %v3249
        %v3523 = vpack.c.bf16 %v3260, %v3257
        %v3524 = vpack.c.bf16 %v3268, %v3265
        %v3525 = vpack.c.bf16 %v3276, %v3273
        %v3526 = vpack.c.bf16 %v3284, %v3281
        %v3527 = vpack.c.bf16 %v3292, %v3289
        %v3528 = vpack.c.bf16 %v3300, %v3297
        %v3529 = vpack.c.bf16 %v3308, %v3305
        %v3530 = vpack.c.bf16 %v3316, %v3313
        %v3531 = vpack.c.bf16 %v3324, %v3321
        %v3532 = vpack.c.bf16 %v3332, %v3329
        %v3533 = vpack.c.bf16 %v3340, %v3337
        %v3534 = vpack.c.bf16 %v3348, %v3345
        %v3535 = vpack.c.bf16 %v3356, %v3353
        %v3536 = vpack.c.bf16 %v3364, %v3361
        %v3537 = vpack.c.bf16 %v3372, %v3369
        %v3538 = vld [vmem:[#allocation8] sm:$0xf]
        %v3539 = vld [vmem:[#allocation8 + $0x4] sm:$0xf]
        %v3540 = vld [vmem:[#allocation8 + $0x8] sm:$0xf]
        %v3541 = vld [vmem:[#allocation8 + $0xc] sm:$0xf]
        %v3542 = vlaneseq
        %v3543 = vshrl.u32 %v3542, 7
        %v3544 = vsub.s32 0, %v3543
        %v3545 = vrot.slane %v3519, %v3544
        %v3550 = vunpack.c.l.b16 %v3538
        %v3551 = vunpack.c.l.b16 %v3539
        %v3552 = vunpack.c.l.b16 %v3540
        %v3553 = vunpack.c.l.b16 %v3541
        %v3554 = vpack.c.b16 %v3551, %v3550
        %v3555 = vpack.c.b16 %v3553, %v3552
        %v3559 = vsel %vm1518, %v3522, 0
        %v3562 = vsel %vm1518, %v3523, 0
        %v3565 = vsel %vm1518, %v3524, 0
        %v3568 = vsel %vm1518, %v3525, 0
        %v3571 = vsel %vm1518, %v3526, 0
        %v3574 = vsel %vm1518, %v3527, 0
        %v3577 = vsel %vm1518, %v3528, 0
        %v3580 = vsel %vm1518, %v3529, 0
        %v3583 = vsel %vm1518, %v3530, 0
        %v3586 = vsel %vm1518, %v3531, 0
        %v3589 = vsel %vm1518, %v3532, 0
        %v3592 = vsel %vm1518, %v3533, 0
        %v3595 = vsel %vm1518, %v3534, 0
        %v3598 = vsel %vm1518, %v3535, 0
        %v3601 = vsel %vm1518, %v3536, 0
        %v3604 = vsel %vm1518, %v3537, 0
        %3606 = vmatprep.subr.bf16.mxu0 0
        %3607 = vmatpush1.bf16.msra.mxu0 %v3554
        %3608 = vmatprep.subr.bf16.mxu0 0
        %3609 = vmatpush1.bf16.msra.mxu0 %v3555
        %3610 = vmatprep.subr.bf16.mxu0 0
        %3611 = vmatpush1.bf16.msra.mxu0 0
        %3612 = vmatprep.subr.bf16.mxu0 0
        %3613 = vmatpush1.bf16.msra.mxu0 0
        %3614 = vmatprep.subr.bf16.mxu0 0
        %3615 = vmatpush1.bf16.msra.mxu0 0
        %3616 = vmatprep.subr.bf16.mxu0 0
        %3617 = vmatpush1.bf16.msra.mxu0 0
        %3618 = vmatprep.subr.bf16.mxu0 0
        %3619 = vmatpush1.bf16.msra.mxu0 0
        %3620 = vmatprep.subr.bf16.mxu0 0
        %3621 = vmatpush1.bf16.msra.mxu0 0
        %3622 = vmatprep.subr.bf16.mxu0 0
        %3623 = vmatpush1.bf16.msra.mxu0 0
        %3624 = vmatprep.subr.bf16.mxu0 0
        %3625 = vmatpush1.bf16.msra.mxu0 0
        %3626 = vmatprep.subr.bf16.mxu0 0
        %3627 = vmatpush1.bf16.msra.mxu0 0
        %3628 = vmatprep.subr.bf16.mxu0 0
        %3629 = vmatpush1.bf16.msra.mxu0 0
        %3630 = vmatprep.subr.bf16.mxu0 0
        %3631 = vmatpush1.bf16.msra.mxu0 0
        %3632 = vmatprep.subr.bf16.mxu0 0
        %3633 = vmatpush1.bf16.msra.mxu0 0
        %3634 = vmatprep.subr.bf16.mxu0 0
        %3635 = vmatpush1.bf16.msra.mxu0 0
        %3636 = vmatprep.subr.bf16.mxu0 0
        %3637 = vmatpush1.bf16.msra.mxu0 0
        %3638 = vmatprep.mubr.bf16.mxu0 0
        %3639 = vmatmul.mubr.bf16.gmra.mrb[0].mxu0 %v3559
        %v3640 = vpop.f32.mrb[0].mxu0
        %v3641 = vadd.f32 %v3545, %v3640
        %v3642 = vpop.f32.mrb[0].mxu0
        %v3643 = vpop.f32.mrb[0].mxu0
        %v3644 = vadd.f32 %v3545, %v3643
        %v3645 = vpop.f32.mrb[0].mxu0
        %3646 = vmatprep.mubr.bf16.mxu0 0
        %3647 = vmatmul.mubr.bf16.gmra.mrb[0].mxu0 %v3562
        %v3648 = vpop.f32.mrb[0].mxu0
        %v3649 = vadd.f32 %v3545, %v3648
        %v3650 = vpop.f32.mrb[0].mxu0
        %v3651 = vpop.f32.mrb[0].mxu0
        %v3652 = vadd.f32 %v3545, %v3651
        %v3653 = vpop.f32.mrb[0].mxu0
        %3654 = vmatprep.mubr.bf16.mxu0 0
        %3655 = vmatmul.mubr.bf16.gmra.mrb[0].mxu0 %v3565
        %v3656 = vpop.f32.mrb[0].mxu0
        %v3657 = vadd.f32 %v3545, %v3656
        %v3658 = vpop.f32.mrb[0].mxu0
        %v3659 = vpop.f32.mrb[0].mxu0
        %v3660 = vadd.f32 %v3545, %v3659
        %v3661 = vpop.f32.mrb[0].mxu0
        %3662 = vmatprep.mubr.bf16.mxu0 0
        %3663 = vmatmul.mubr.bf16.gmra.mrb[0].mxu0 %v3568
        %v3664 = vpop.f32.mrb[0].mxu0
        %v3665 = vadd.f32 %v3545, %v3664
        %v3666 = vpop.f32.mrb[0].mxu0
        %v3667 = vpop.f32.mrb[0].mxu0
        %v3668 = vadd.f32 %v3545, %v3667
        %v3669 = vpop.f32.mrb[0].mxu0
        %3670 = vmatprep.mubr.bf16.mxu0 0
        %3671 = vmatmul.mubr.bf16.gmra.mrb[0].mxu0 %v3571
        %v3672 = vpop.f32.mrb[0].mxu0
        %v3673 = vadd.f32 %v3545, %v3672
        %v3674 = vpop.f32.mrb[0].mxu0
        %v3675 = vpop.f32.mrb[0].mxu0
        %v3676 = vadd.f32 %v3545, %v3675
        %v3677 = vpop.f32.mrb[0].mxu0
        %3678 = vmatprep.mubr.bf16.mxu0 0
        %3679 = vmatmul.mubr.bf16.gmra.mrb[0].mxu0 %v3574
        %v3680 = vpop.f32.mrb[0].mxu0
        %v3681 = vadd.f32 %v3545, %v3680
        %v3682 = vpop.f32.mrb[0].mxu0
        %v3683 = vpop.f32.mrb[0].mxu0
        %v3684 = vadd.f32 %v3545, %v3683
        %v3685 = vpop.f32.mrb[0].mxu0
        %3686 = vmatprep.mubr.bf16.mxu0 0
        %3687 = vmatmul.mubr.bf16.gmra.mrb[0].mxu0 %v3577
        %v3688 = vpop.f32.mrb[0].mxu0
        %v3689 = vadd.f32 %v3545, %v3688
        %v3690 = vpop.f32.mrb[0].mxu0
        %v3691 = vpop.f32.mrb[0].mxu0
        %v3692 = vadd.f32 %v3545, %v3691
        %v3693 = vpop.f32.mrb[0].mxu0
        %3694 = vmatprep.mubr.bf16.mxu0 0
        %3695 = vmatmul.mubr.bf16.gmra.mrb[0].mxu0 %v3580
        %v3696 = vpop.f32.mrb[0].mxu0
        %v3697 = vadd.f32 %v3545, %v3696
        %v3698 = vpop.f32.mrb[0].mxu0
        %v3699 = vpop.f32.mrb[0].mxu0
        %v3700 = vadd.f32 %v3545, %v3699
        %v3701 = vpop.f32.mrb[0].mxu0
        %3702 = vmatprep.mubr.bf16.mxu0 0
        %3703 = vmatmul.mubr.bf16.gmra.mrb[0].mxu0 %v3583
        %v3704 = vpop.f32.mrb[0].mxu0
        %v3705 = vadd.f32 %v3545, %v3704
        %v3706 = vpop.f32.mrb[0].mxu0
        %v3707 = vpop.f32.mrb[0].mxu0
        %v3708 = vadd.f32 %v3545, %v3707
        %v3709 = vpop.f32.mrb[0].mxu0
        %3710 = vmatprep.mubr.bf16.mxu0 0
        %3711 = vmatmul.mubr.bf16.gmra.mrb[0].mxu0 %v3586
        %v3712 = vpop.f32.mrb[0].mxu0
        %v3713 = vadd.f32 %v3545, %v3712
        %v3714 = vpop.f32.mrb[0].mxu0
        %v3715 = vpop.f32.mrb[0].mxu0
        %v3716 = vadd.f32 %v3545, %v3715
        %v3717 = vpop.f32.mrb[0].mxu0
        %3718 = vmatprep.mubr.bf16.mxu0 0
        %3719 = vmatmul.mubr.bf16.gmra.mrb[0].mxu0 %v3589
        %v3720 = vpop.f32.mrb[0].mxu0
        %v3721 = vadd.f32 %v3545, %v3720
        %v3722 = vpop.f32.mrb[0].mxu0
        %v3723 = vpop.f32.mrb[0].mxu0
        %v3724 = vadd.f32 %v3545, %v3723
        %v3725 = vpop.f32.mrb[0].mxu0
        %3726 = vmatprep.mubr.bf16.mxu0 0
        %3727 = vmatmul.mubr.bf16.gmra.mrb[0].mxu0 %v3592
        %v3728 = vpop.f32.mrb[0].mxu0
        %v3729 = vadd.f32 %v3545, %v3728
        %v3730 = vpop.f32.mrb[0].mxu0
        %v3731 = vpop.f32.mrb[0].mxu0
        %v3732 = vadd.f32 %v3545, %v3731
        %v3733 = vpop.f32.mrb[0].mxu0
        %3734 = vmatprep.mubr.bf16.mxu0 0
        %3735 = vmatmul.mubr.bf16.gmra.mrb[0].mxu0 %v3595
        %v3736 = vpop.f32.mrb[0].mxu0
        %v3737 = vadd.f32 %v3545, %v3736
        %v3738 = vpop.f32.mrb[0].mxu0
        %v3739 = vpop.f32.mrb[0].mxu0
        %v3740 = vadd.f32 %v3545, %v3739
        %v3741 = vpop.f32.mrb[0].mxu0
        %3742 = vmatprep.mubr.bf16.mxu0 0
        %3743 = vmatmul.mubr.bf16.gmra.mrb[0].mxu0 %v3598
        %v3744 = vpop.f32.mrb[0].mxu0
        %v3745 = vadd.f32 %v3545, %v3744
        %v3746 = vpop.f32.mrb[0].mxu0
        %v3747 = vpop.f32.mrb[0].mxu0
        %v3748 = vadd.f32 %v3545, %v3747
        %v3749 = vpop.f32.mrb[0].mxu0
        %3750 = vmatprep.mubr.bf16.mxu0 0
        %3751 = vmatmul.mubr.bf16.gmra.mrb[0].mxu0 %v3601
        %v3752 = vpop.f32.mrb[0].mxu0
        %v3753 = vadd.f32 %v3545, %v3752
        %v3754 = vpop.f32.mrb[0].mxu0
        %v3755 = vpop.f32.mrb[0].mxu0
        %v3756 = vadd.f32 %v3545, %v3755
        %v3757 = vpop.f32.mrb[0].mxu0
        %3758 = vmatprep.mubr.bf16.mxu0 0
        %3759 = vmatmul.mubr.bf16.gmra.mrb[0].mxu0 %v3604
        %v3760 = vpop.f32.mrb[0].mxu0
        %v3761 = vadd.f32 %v3545, %v3760
        %v3762 = vpop.f32.mrb[0].mxu0
        %v3763 = vpop.f32.mrb[0].mxu0
        %v3764 = vadd.f32 %v3545, %v3763
        %v3765 = vpop.f32.mrb[0].mxu0
        %3766 = vdwg.mxu0
        %v3767 = vmax.f32 %v3641, 0.0
        %v3768 = vmax.f32 %v3644, 0.0
        %v3769 = vmax.f32 %v3649, 0.0
        %v3770 = vmax.f32 %v3652, 0.0
        %v3771 = vmax.f32 %v3657, 0.0
        %v3772 = vmax.f32 %v3660, 0.0
        %v3773 = vmax.f32 %v3665, 0.0
        %v3774 = vmax.f32 %v3668, 0.0
        %v3775 = vmax.f32 %v3673, 0.0
        %v3776 = vmax.f32 %v3676, 0.0
        %v3777 = vmax.f32 %v3681, 0.0
        %v3778 = vmax.f32 %v3684, 0.0
        %v3779 = vmax.f32 %v3689, 0.0
        %v3780 = vmax.f32 %v3692, 0.0
        %v3781 = vmax.f32 %v3697, 0.0
        %v3782 = vmax.f32 %v3700, 0.0
        %v3783 = vmax.f32 %v3705, 0.0
        %v3784 = vmax.f32 %v3708, 0.0
        %v3785 = vmax.f32 %v3713, 0.0
        %v3786 = vmax.f32 %v3716, 0.0
        %v3787 = vmax.f32 %v3721, 0.0
        %v3788 = vmax.f32 %v3724, 0.0
        %v3789 = vmax.f32 %v3729, 0.0
        %v3790 = vmax.f32 %v3732, 0.0
        %v3791 = vmax.f32 %v3737, 0.0
        %v3792 = vmax.f32 %v3740, 0.0
        %v3793 = vmax.f32 %v3745, 0.0
        %v3794 = vmax.f32 %v3748, 0.0
        %v3795 = vmax.f32 %v3753, 0.0
        %v3796 = vmax.f32 %v3756, 0.0
        %v3797 = vmax.f32 %v3761, 0.0
        %v3798 = vmax.f32 %v3764, 0.0
        %v3799 = vpack.c.bf16 %v3768, %v3767
        %v3800 = vpack.c.bf16 %v3770, %v3769
        %v3801 = vpack.c.bf16 %v3772, %v3771
        %v3802 = vpack.c.bf16 %v3774, %v3773
        %v3803 = vpack.c.bf16 %v3776, %v3775
        %v3804 = vpack.c.bf16 %v3778, %v3777
        %v3805 = vpack.c.bf16 %v3780, %v3779
        %v3806 = vpack.c.bf16 %v3782, %v3781
        %v3807 = vpack.c.bf16 %v3784, %v3783
        %v3808 = vpack.c.bf16 %v3786, %v3785
        %v3809 = vpack.c.bf16 %v3788, %v3787
        %v3810 = vpack.c.bf16 %v3790, %v3789
        %v3811 = vpack.c.bf16 %v3792, %v3791
        %v3812 = vpack.c.bf16 %v3794, %v3793
        %v3813 = vpack.c.bf16 %v3796, %v3795
        %v3814 = vpack.c.bf16 %v3798, %v3797
        %v3815 = vld [vmem:[%s9] sm:$0xf]
        %v3816 = vld [vmem:[%s9 + $0x4] sm:$0xf]
        %v3817 = vld [vmem:[%s9 + $0x8] sm:$0xf]
        %v3818 = vld [vmem:[%s9 + $0xc] sm:$0xf]
        %v3819 = vld [vmem:[%s9 + $0x10] sm:$0xf]
        %v3820 = vld [vmem:[%s9 + $0x14] sm:$0xf]
        %v3821 = vld [vmem:[%s9 + $0x18] sm:$0xf]
        %v3822 = vld [vmem:[%s9 + $0x1c] sm:$0xf]
        %v3823 = vld [vmem:[#allocation12] sm:$0x1]
        %v3825 = vlaneseq
        %v3826 = vshrl.u32 %v3825, 7
        %v3827 = vsub.s32 0, %v3826
        %v3828 = vrot.slane %v3823, %v3827
        %v3838 = vunpack.c.l.b16 %v3815
        %v3839 = vunpack.c.l.b16 %v3816
        %v3840 = vunpack.c.l.b16 %v3817
        %v3841 = vunpack.c.l.b16 %v3818
        %v3842 = vunpack.c.l.b16 %v3819
        %v3843 = vunpack.c.l.b16 %v3820
        %v3844 = vunpack.c.l.b16 %v3821
        %v3845 = vunpack.c.l.b16 %v3822
        %v3846 = vpack.c.b16 %v3839, %v3838
        %v3847 = vpack.c.b16 %v3841, %v3840
        %v3848 = vpack.c.b16 %v3843, %v3842
        %v3849 = vpack.c.b16 %v3845, %v3844
        %vm3854 = vcmask 523264
        %v3856 = vsel %vm3854, %v3799, 0
        %v3859 = vsel %vm3854, %v3800, 0
        %v3862 = vsel %vm3854, %v3801, 0
        %v3865 = vsel %vm3854, %v3802, 0
        %v3868 = vsel %vm3854, %v3803, 0
        %v3871 = vsel %vm3854, %v3804, 0
        %v3874 = vsel %vm3854, %v3805, 0
        %v3877 = vsel %vm3854, %v3806, 0
        %v3880 = vsel %vm3854, %v3807, 0
        %v3883 = vsel %vm3854, %v3808, 0
        %v3886 = vsel %vm3854, %v3809, 0
        %v3889 = vsel %vm3854, %v3810, 0
        %v3892 = vsel %vm3854, %v3811, 0
        %v3895 = vsel %vm3854, %v3812, 0
        %v3898 = vsel %vm3854, %v3813, 0
        %v3901 = vsel %vm3854, %v3814, 0
        %3903 = vmatprep.subr.bf16.mxu0 0
        %3904 = vmatpush1.bf16.msra.mxu0 %v3846
        %3905 = vmatprep.subr.bf16.mxu0 0
        %3906 = vmatpush1.bf16.msra.mxu0 %v3847
        %3907 = vmatprep.subr.bf16.mxu0 0
        %3908 = vmatpush1.bf16.msra.mxu0 %v3848
        %3909 = vmatprep.subr.bf16.mxu0 0
        %3910 = vmatpush1.bf16.msra.mxu0 %v3849
        %3911 = vmatprep.subr.bf16.mxu0 0
        %3912 = vmatpush1.bf16.msra.mxu0 0
        %3913 = vmatprep.subr.bf16.mxu0 0
        %3914 = vmatpush1.bf16.msra.mxu0 0
        %3915 = vmatprep.subr.bf16.mxu0 0
        %3916 = vmatpush1.bf16.msra.mxu0 0
        %3917 = vmatprep.subr.bf16.mxu0 0
        %3918 = vmatpush1.bf16.msra.mxu0 0
        %3919 = vmatprep.subr.bf16.mxu0 0
        %3920 = vmatpush1.bf16.msra.mxu0 0
        %3921 = vmatprep.subr.bf16.mxu0 0
        %3922 = vmatpush1.bf16.msra.mxu0 0
        %3923 = vmatprep.subr.bf16.mxu0 0
        %3924 = vmatpush1.bf16.msra.mxu0 0
        %3925 = vmatprep.subr.bf16.mxu0 0
        %3926 = vmatpush1.bf16.msra.mxu0 0
        %3927 = vmatprep.subr.bf16.mxu0 0
        %3928 = vmatpush1.bf16.msra.mxu0 0
        %3929 = vmatprep.subr.bf16.mxu0 0
        %3930 = vmatpush1.bf16.msra.mxu0 0
        %3931 = vmatprep.subr.bf16.mxu0 0
        %3932 = vmatpush1.bf16.msra.mxu0 0
        %3933 = vmatprep.subr.bf16.mxu0 0
        %3934 = vmatpush1.bf16.msra.mxu0 0
        %3935 = vmatprep.mubr.bf16.mxu0 0
        %3936 = vmatmul.mubr.bf16.gmra.mrb[0].mxu0 %v3856
        %v3937 = vpop.f32.mrb[0].mxu0
        %v3938 = vadd.f32 %v3828, %v3937
        %v3939 = vpop.f32.mrb[0].mxu0
        %v3940 = vpop.f32.mrb[0].mxu0
        %v3941 = vadd.f32 %v3828, %v3940
        %v3942 = vpop.f32.mrb[0].mxu0
        %3943 = vmatprep.mubr.bf16.mxu0 0
        %3944 = vmatmul.mubr.bf16.gmra.mrb[0].mxu0 %v3859
        %v3945 = vpop.f32.mrb[0].mxu0
        %v3946 = vadd.f32 %v3828, %v3945
        %v3947 = vpop.f32.mrb[0].mxu0
        %v3948 = vpop.f32.mrb[0].mxu0
        %v3949 = vadd.f32 %v3828, %v3948
        %v3950 = vpop.f32.mrb[0].mxu0
        %3951 = vmatprep.mubr.bf16.mxu0 0
        %3952 = vmatmul.mubr.bf16.gmra.mrb[0].mxu0 %v3862
        %v3953 = vpop.f32.mrb[0].mxu0
        %v3954 = vadd.f32 %v3828, %v3953
        %v3955 = vpop.f32.mrb[0].mxu0
        %v3956 = vpop.f32.mrb[0].mxu0
        %v3957 = vadd.f32 %v3828, %v3956
        %v3958 = vpop.f32.mrb[0].mxu0
        %3959 = vmatprep.mubr.bf16.mxu0 0
        %3960 = vmatmul.mubr.bf16.gmra.mrb[0].mxu0 %v3865
        %v3961 = vpop.f32.mrb[0].mxu0
        %v3962 = vadd.f32 %v3828, %v3961
        %v3963 = vpop.f32.mrb[0].mxu0
        %v3964 = vpop.f32.mrb[0].mxu0
        %v3965 = vadd.f32 %v3828, %v3964
        %v3966 = vpop.f32.mrb[0].mxu0
        %3967 = vmatprep.mubr.bf16.mxu0 0
        %3968 = vmatmul.mubr.bf16.gmra.mrb[0].mxu0 %v3868
        %v3969 = vpop.f32.mrb[0].mxu0
        %v3970 = vadd.f32 %v3828, %v3969
        %v3971 = vpop.f32.mrb[0].mxu0
        %v3972 = vpop.f32.mrb[0].mxu0
        %v3973 = vadd.f32 %v3828, %v3972
        %v3974 = vpop.f32.mrb[0].mxu0
        %3975 = vmatprep.mubr.bf16.mxu0 0
        %3976 = vmatmul.mubr.bf16.gmra.mrb[0].mxu0 %v3871
        %v3977 = vpop.f32.mrb[0].mxu0
        %v3978 = vadd.f32 %v3828, %v3977
        %v3979 = vpop.f32.mrb[0].mxu0
        %v3980 = vpop.f32.mrb[0].mxu0
        %v3981 = vadd.f32 %v3828, %v3980
        %v3982 = vpop.f32.mrb[0].mxu0
        %3983 = vmatprep.mubr.bf16.mxu0 0
        %3984 = vmatmul.mubr.bf16.gmra.mrb[0].mxu0 %v3874
        %v3985 = vpop.f32.mrb[0].mxu0
        %v3986 = vadd.f32 %v3828, %v3985
        %v3987 = vpop.f32.mrb[0].mxu0
        %v3988 = vpop.f32.mrb[0].mxu0
        %v3989 = vadd.f32 %v3828, %v3988
        %v3990 = vpop.f32.mrb[0].mxu0
        %3991 = vmatprep.mubr.bf16.mxu0 0
        %3992 = vmatmul.mubr.bf16.gmra.mrb[0].mxu0 %v3877
        %v3993 = vpop.f32.mrb[0].mxu0
        %v3994 = vadd.f32 %v3828, %v3993
        %v3995 = vpop.f32.mrb[0].mxu0
        %v3996 = vpop.f32.mrb[0].mxu0
        %v3997 = vadd.f32 %v3828, %v3996
        %v3998 = vpop.f32.mrb[0].mxu0
        %3999 = vmatprep.mubr.bf16.mxu0 0
        %4000 = vmatmul.mubr.bf16.gmra.mrb[0].mxu0 %v3880
        %v4001 = vpop.f32.mrb[0].mxu0
        %v4002 = vadd.f32 %v3828, %v4001
        %v4003 = vpop.f32.mrb[0].mxu0
        %v4004 = vpop.f32.mrb[0].mxu0
        %v4005 = vadd.f32 %v3828, %v4004
        %v4006 = vpop.f32.mrb[0].mxu0
        %4007 = vmatprep.mubr.bf16.mxu0 0
        %4008 = vmatmul.mubr.bf16.gmra.mrb[0].mxu0 %v3883
        %v4009 = vpop.f32.mrb[0].mxu0
        %v4010 = vadd.f32 %v3828, %v4009
        %v4011 = vpop.f32.mrb[0].mxu0
        %v4012 = vpop.f32.mrb[0].mxu0
        %v4013 = vadd.f32 %v3828, %v4012
        %v4014 = vpop.f32.mrb[0].mxu0
        %4015 = vmatprep.mubr.bf16.mxu0 0
        %4016 = vmatmul.mubr.bf16.gmra.mrb[0].mxu0 %v3886
        %v4017 = vpop.f32.mrb[0].mxu0
        %v4018 = vadd.f32 %v3828, %v4017
        %v4019 = vpop.f32.mrb[0].mxu0
        %v4020 = vpop.f32.mrb[0].mxu0
        %v4021 = vadd.f32 %v3828, %v4020
        %v4022 = vpop.f32.mrb[0].mxu0
        %4023 = vmatprep.mubr.bf16.mxu0 0
        %4024 = vmatmul.mubr.bf16.gmra.mrb[0].mxu0 %v3889
        %v4025 = vpop.f32.mrb[0].mxu0
        %v4026 = vadd.f32 %v3828, %v4025
        %v4027 = vpop.f32.mrb[0].mxu0
        %v4028 = vpop.f32.mrb[0].mxu0
        %v4029 = vadd.f32 %v3828, %v4028
        %v4030 = vpop.f32.mrb[0].mxu0
        %4031 = vmatprep.mubr.bf16.mxu0 0
        %4032 = vmatmul.mubr.bf16.gmra.mrb[0].mxu0 %v3892
        %v4033 = vpop.f32.mrb[0].mxu0
        %v4034 = vadd.f32 %v3828, %v4033
        %v4035 = vpop.f32.mrb[0].mxu0
        %v4036 = vpop.f32.mrb[0].mxu0
        %v4037 = vadd.f32 %v3828, %v4036
        %v4038 = vpop.f32.mrb[0].mxu0
        %4039 = vmatprep.mubr.bf16.mxu0 0
        %4040 = vmatmul.mubr.bf16.gmra.mrb[0].mxu0 %v3895
        %v4041 = vpop.f32.mrb[0].mxu0
        %v4042 = vadd.f32 %v3828, %v4041
        %v4043 = vpop.f32.mrb[0].mxu0
        %v4044 = vpop.f32.mrb[0].mxu0
        %v4045 = vadd.f32 %v3828, %v4044
        %v4046 = vpop.f32.mrb[0].mxu0
        %4047 = vmatprep.mubr.bf16.mxu0 0
        %4048 = vmatmul.mubr.bf16.gmra.mrb[0].mxu0 %v3898
        %v4049 = vpop.f32.mrb[0].mxu0
        %v4050 = vadd.f32 %v3828, %v4049
        %v4051 = vpop.f32.mrb[0].mxu0
        %v4052 = vpop.f32.mrb[0].mxu0
        %v4053 = vadd.f32 %v3828, %v4052
        %v4054 = vpop.f32.mrb[0].mxu0
        %4055 = vmatprep.mubr.bf16.mxu0 0
        %4056 = vmatmul.mubr.bf16.gmra.mrb[0].mxu0 %v3901
        %v4057 = vpop.f32.mrb[0].mxu0
        %v4058 = vadd.f32 %v3828, %v4057
        %v4059 = vpop.f32.mrb[0].mxu0
        %v4060 = vpop.f32.mrb[0].mxu0
        %v4061 = vadd.f32 %v3828, %v4060
        %v4062 = vpop.f32.mrb[0].mxu0
        %4063 = vdwg.mxu0
        %v4064 = vmax.f32 %v3938, 0.0
        %v4065 = vmax.f32 %v3941, 0.0
        %v4066 = vmax.f32 %v3946, 0.0
        %v4067 = vmax.f32 %v3949, 0.0
        %v4068 = vmax.f32 %v3954, 0.0
        %v4069 = vmax.f32 %v3957, 0.0
        %v4070 = vmax.f32 %v3962, 0.0
        %v4071 = vmax.f32 %v3965, 0.0
        %v4072 = vmax.f32 %v3970, 0.0
        %v4073 = vmax.f32 %v3973, 0.0
        %v4074 = vmax.f32 %v3978, 0.0
        %v4075 = vmax.f32 %v3981, 0.0
        %v4076 = vmax.f32 %v3986, 0.0
        %v4077 = vmax.f32 %v3989, 0.0
        %v4078 = vmax.f32 %v3994, 0.0
        %v4079 = vmax.f32 %v3997, 0.0
        %v4080 = vmax.f32 %v4002, 0.0
        %v4081 = vmax.f32 %v4005, 0.0
        %v4082 = vmax.f32 %v4010, 0.0
        %v4083 = vmax.f32 %v4013, 0.0
        %v4084 = vmax.f32 %v4018, 0.0
        %v4085 = vmax.f32 %v4021, 0.0
        %v4086 = vmax.f32 %v4026, 0.0
        %v4087 = vmax.f32 %v4029, 0.0
        %v4088 = vmax.f32 %v4034, 0.0
        %v4089 = vmax.f32 %v4037, 0.0
        %v4090 = vmax.f32 %v4042, 0.0
        %v4091 = vmax.f32 %v4045, 0.0
        %v4092 = vmax.f32 %v4050, 0.0
        %v4093 = vmax.f32 %v4053, 0.0
        %v4094 = vmax.f32 %v4058, 0.0
        %v4095 = vmax.f32 %v4061, 0.0
        %v4096 = vld [vmem:[%s677] sm:$0xff]
        %v4097 = vld [vmem:[%s677 + $0x8] sm:$0xff]
        %v4098 = vld [vmem:[%s677 + $0x10] sm:$0xff]
        %v4099 = vld [vmem:[%s677 + $0x18] sm:$0xff]
        %v4100 = vld [vmem:[%s677 + $0x20] sm:$0xff]
        %v4101 = vld [vmem:[%s677 + $0x28] sm:$0xff]
        %v4102 = vld [vmem:[%s677 + $0x30] sm:$0xff]
        %v4103 = vld [vmem:[%s677 + $0x38] sm:$0xff]
        %v4104 = vld [vmem:[%s677 + $0x40] sm:$0xff]
        %v4105 = vld [vmem:[%s677 + $0x48] sm:$0xff]
        %v4106 = vld [vmem:[%s677 + $0x50] sm:$0xff]
        %v4107 = vld [vmem:[%s677 + $0x58] sm:$0xff]
        %v4108 = vld [vmem:[%s677 + $0x60] sm:$0xff]
        %v4109 = vld [vmem:[%s677 + $0x68] sm:$0xff]
        %v4110 = vld [vmem:[%s677 + $0x70] sm:$0xff]
        %v4111 = vld [vmem:[%s677 + $0x78] sm:$0xff]
        %v4112 = vld [vmem:[%s677 + $0x80] sm:$0xff]
        %v4113 = vld [vmem:[%s677 + $0x88] sm:$0xff]
        %v4114 = vld [vmem:[%s677 + $0x90] sm:$0xff]
        %v4115 = vld [vmem:[%s677 + $0x98] sm:$0xff]
        %v4116 = vld [vmem:[%s677 + $0xa0] sm:$0xff]
        %v4117 = vld [vmem:[%s677 + $0xa8] sm:$0xff]
        %v4118 = vld [vmem:[%s677 + $0xb0] sm:$0xff]
        %v4119 = vld [vmem:[%s677 + $0xb8] sm:$0xff]
        %v4120 = vld [vmem:[%s677 + $0xc0] sm:$0xff]
        %v4121 = vld [vmem:[%s677 + $0xc8] sm:$0xff]
        %v4122 = vld [vmem:[%s677 + $0xd0] sm:$0xff]
        %v4123 = vld [vmem:[%s677 + $0xd8] sm:$0xff]
        %v4124 = vld [vmem:[%s677 + $0xe0] sm:$0xff]
        %v4125 = vld [vmem:[%s677 + $0xe8] sm:$0xff]
        %v4126 = vld [vmem:[%s677 + $0xf0] sm:$0xff]
        %v4127 = vld [vmem:[%s677 + $0xf8] sm:$0xff]
        %s4128 = smul.u32 %s691, 2
        %s4129 = scalar_lea.vmem [#allocation3], %s4128
        %v4130 = vld [vmem:[%s4129] sm:$0x3]
        %4132 = vset.pattern.permute.xlu0 0
        %4133 = vperm.xlu0 %4132, %v4096
        %v4134 = vpop.permute.xlu0 %4133
        %4137 = vset.pattern.permute.xlu0 0
        %4138 = vperm.xlu0 %4137, %v4097
        %v4139 = vpop.permute.xlu0 %4138
        %4142 = vset.pattern.permute.xlu0 0
        %4143 = vperm.xlu0 %4142, %v4098
        %v4144 = vpop.permute.xlu0 %4143
        %4147 = vset.pattern.permute.xlu0 0
        %4148 = vperm.xlu0 %4147, %v4099
        %v4149 = vpop.permute.xlu0 %4148
        %4152 = vset.pattern.permute.xlu0 0
        %4153 = vperm.xlu0 %4152, %v4100
        %v4154 = vpop.permute.xlu0 %4153
        %4157 = vset.pattern.permute.xlu0 0
        %4158 = vperm.xlu0 %4157, %v4101
        %v4159 = vpop.permute.xlu0 %4158
        %4162 = vset.pattern.permute.xlu0 0
        %4163 = vperm.xlu0 %4162, %v4102
        %v4164 = vpop.permute.xlu0 %4163
        %4167 = vset.pattern.permute.xlu0 0
        %4168 = vperm.xlu0 %4167, %v4103
        %v4169 = vpop.permute.xlu0 %4168
        %4172 = vset.pattern.permute.xlu0 0
        %4173 = vperm.xlu0 %4172, %v4104
        %v4174 = vpop.permute.xlu0 %4173
        %4177 = vset.pattern.permute.xlu0 0
        %4178 = vperm.xlu0 %4177, %v4105
        %v4179 = vpop.permute.xlu0 %4178
        %4182 = vset.pattern.permute.xlu0 0
        %4183 = vperm.xlu0 %4182, %v4106
        %v4184 = vpop.permute.xlu0 %4183
        %4187 = vset.pattern.permute.xlu0 0
        %4188 = vperm.xlu0 %4187, %v4107
        %v4189 = vpop.permute.xlu0 %4188
        %4192 = vset.pattern.permute.xlu0 0
        %4193 = vperm.xlu0 %4192, %v4108
        %v4194 = vpop.permute.xlu0 %4193
        %4197 = vset.pattern.permute.xlu0 0
        %4198 = vperm.xlu0 %4197, %v4109
        %v4199 = vpop.permute.xlu0 %4198
        %4202 = vset.pattern.permute.xlu0 0
        %4203 = vperm.xlu0 %4202, %v4110
        %v4204 = vpop.permute.xlu0 %4203
        %4207 = vset.pattern.permute.xlu0 0
        %4208 = vperm.xlu0 %4207, %v4111
        %v4209 = vpop.permute.xlu0 %4208
        %4212 = vset.pattern.permute.xlu0 0
        %4213 = vperm.xlu0 %4212, %v4112
        %v4214 = vpop.permute.xlu0 %4213
        %4217 = vset.pattern.permute.xlu0 0
        %4218 = vperm.xlu0 %4217, %v4113
        %v4219 = vpop.permute.xlu0 %4218
        %4222 = vset.pattern.permute.xlu0 0
        %4223 = vperm.xlu0 %4222, %v4114
        %v4224 = vpop.permute.xlu0 %4223
        %4227 = vset.pattern.permute.xlu0 0
        %4228 = vperm.xlu0 %4227, %v4115
        %v4229 = vpop.permute.xlu0 %4228
        %4232 = vset.pattern.permute.xlu0 0
        %4233 = vperm.xlu0 %4232, %v4116
        %v4234 = vpop.permute.xlu0 %4233
        %4237 = vset.pattern.permute.xlu0 0
        %4238 = vperm.xlu0 %4237, %v4117
        %v4239 = vpop.permute.xlu0 %4238
        %4242 = vset.pattern.permute.xlu0 0
        %4243 = vperm.xlu0 %4242, %v4118
        %v4244 = vpop.permute.xlu0 %4243
        %4247 = vset.pattern.permute.xlu0 0
        %4248 = vperm.xlu0 %4247, %v4119
        %v4249 = vpop.permute.xlu0 %4248
        %4252 = vset.pattern.permute.xlu0 0
        %4253 = vperm.xlu0 %4252, %v4120
        %v4254 = vpop.permute.xlu0 %4253
        %4257 = vset.pattern.permute.xlu0 0
        %4258 = vperm.xlu0 %4257, %v4121
        %v4259 = vpop.permute.xlu0 %4258
        %4262 = vset.pattern.permute.xlu0 0
        %4263 = vperm.xlu0 %4262, %v4122
        %v4264 = vpop.permute.xlu0 %4263
        %4267 = vset.pattern.permute.xlu0 0
        %4268 = vperm.xlu0 %4267, %v4123
        %v4269 = vpop.permute.xlu0 %4268
        %4272 = vset.pattern.permute.xlu0 0
        %4273 = vperm.xlu0 %4272, %v4124
        %v4274 = vpop.permute.xlu0 %4273
        %4277 = vset.pattern.permute.xlu0 0
        %4278 = vperm.xlu0 %4277, %v4125
        %v4279 = vpop.permute.xlu0 %4278
        %4282 = vset.pattern.permute.xlu0 0
        %4283 = vperm.xlu0 %4282, %v4126
        %v4284 = vpop.permute.xlu0 %4283
        %4287 = vset.pattern.permute.xlu0 0
        %4288 = vperm.xlu0 %4287, %v4127
        %v4289 = vpop.permute.xlu0 %4288
        %v4292 = vlaneseq
        %v4293 = vshrl.u32 %v4292, 7
        %v4294 = vsub.s32 0, %v4293
        %v4295 = vrot.slane %v4130, %v4294
        %v4296 = vlaneseq
        %v4297 = vshrl.u32 %v4296, 7
        %v4298 = vsub.s32 1, %v4297
        %v4299 = vrot.slane %v4130, %v4298
        %vm4302 = vcmp.eq.f32.partialorder %v4134, %v4295
        %vm4303 = vcmp.eq.f32.partialorder %v4134, %v4299
        %vm4304 = vcmp.eq.f32.partialorder %v4139, %v4295
        %vm4305 = vcmp.eq.f32.partialorder %v4139, %v4299
        %vm4306 = vcmp.eq.f32.partialorder %v4144, %v4295
        %vm4307 = vcmp.eq.f32.partialorder %v4144, %v4299
        %vm4308 = vcmp.eq.f32.partialorder %v4149, %v4295
        %vm4309 = vcmp.eq.f32.partialorder %v4149, %v4299
        %vm4310 = vcmp.eq.f32.partialorder %v4154, %v4295
        %vm4311 = vcmp.eq.f32.partialorder %v4154, %v4299
        %vm4312 = vcmp.eq.f32.partialorder %v4159, %v4295
        %vm4313 = vcmp.eq.f32.partialorder %v4159, %v4299
        %vm4314 = vcmp.eq.f32.partialorder %v4164, %v4295
        %vm4315 = vcmp.eq.f32.partialorder %v4164, %v4299
        %vm4316 = vcmp.eq.f32.partialorder %v4169, %v4295
        %vm4317 = vcmp.eq.f32.partialorder %v4169, %v4299
        %vm4318 = vcmp.eq.f32.partialorder %v4174, %v4295
        %vm4319 = vcmp.eq.f32.partialorder %v4174, %v4299
        %vm4320 = vcmp.eq.f32.partialorder %v4179, %v4295
        %vm4321 = vcmp.eq.f32.partialorder %v4179, %v4299
        %vm4322 = vcmp.eq.f32.partialorder %v4184, %v4295
        %vm4323 = vcmp.eq.f32.partialorder %v4184, %v4299
        %vm4324 = vcmp.eq.f32.partialorder %v4189, %v4295
        %vm4325 = vcmp.eq.f32.partialorder %v4189, %v4299
        %vm4326 = vcmp.eq.f32.partialorder %v4194, %v4295
        %vm4327 = vcmp.eq.f32.partialorder %v4194, %v4299
        %vm4328 = vcmp.eq.f32.partialorder %v4199, %v4295
        %vm4329 = vcmp.eq.f32.partialorder %v4199, %v4299
        %vm4330 = vcmp.eq.f32.partialorder %v4204, %v4295
        %vm4331 = vcmp.eq.f32.partialorder %v4204, %v4299
        %vm4332 = vcmp.eq.f32.partialorder %v4209, %v4295
        %vm4333 = vcmp.eq.f32.partialorder %v4209, %v4299
        %vm4334 = vcmp.eq.f32.partialorder %v4214, %v4295
        %vm4335 = vcmp.eq.f32.partialorder %v4214, %v4299
        %vm4336 = vcmp.eq.f32.partialorder %v4219, %v4295
        %vm4337 = vcmp.eq.f32.partialorder %v4219, %v4299
        %vm4338 = vcmp.eq.f32.partialorder %v4224, %v4295
        %vm4339 = vcmp.eq.f32.partialorder %v4224, %v4299
        %vm4340 = vcmp.eq.f32.partialorder %v4229, %v4295
        %vm4341 = vcmp.eq.f32.partialorder %v4229, %v4299
        %vm4342 = vcmp.eq.f32.partialorder %v4234, %v4295
        %vm4343 = vcmp.eq.f32.partialorder %v4234, %v4299
        %vm4344 = vcmp.eq.f32.partialorder %v4239, %v4295
        %vm4345 = vcmp.eq.f32.partialorder %v4239, %v4299
        %vm4346 = vcmp.eq.f32.partialorder %v4244, %v4295
        %vm4347 = vcmp.eq.f32.partialorder %v4244, %v4299
        %vm4348 = vcmp.eq.f32.partialorder %v4249, %v4295
        %vm4349 = vcmp.eq.f32.partialorder %v4249, %v4299
        %vm4350 = vcmp.eq.f32.partialorder %v4254, %v4295
        %vm4351 = vcmp.eq.f32.partialorder %v4254, %v4299
        %vm4352 = vcmp.eq.f32.partialorder %v4259, %v4295
        %vm4353 = vcmp.eq.f32.partialorder %v4259, %v4299
        %vm4354 = vcmp.eq.f32.partialorder %v4264, %v4295
        %vm4355 = vcmp.eq.f32.partialorder %v4264, %v4299
        %vm4356 = vcmp.eq.f32.partialorder %v4269, %v4295
        %vm4357 = vcmp.eq.f32.partialorder %v4269, %v4299
        %vm4358 = vcmp.eq.f32.partialorder %v4274, %v4295
        %vm4359 = vcmp.eq.f32.partialorder %v4274, %v4299
        %vm4360 = vcmp.eq.f32.partialorder %v4279, %v4295
        %vm4361 = vcmp.eq.f32.partialorder %v4279, %v4299
        %vm4362 = vcmp.eq.f32.partialorder %v4284, %v4295
        %vm4363 = vcmp.eq.f32.partialorder %v4284, %v4299
        %vm4364 = vcmp.eq.f32.partialorder %v4289, %v4295
        %vm4365 = vcmp.eq.f32.partialorder %v4289, %v4299
        %v4366 = vsel %vm4302, 1, 0
        %v4367 = vsel %vm4303, 1, 0
        %v4368 = vsel %vm4304, 1, 0
        %v4369 = vsel %vm4305, 1, 0
        %v4370 = vsel %vm4306, 1, 0
        %v4371 = vsel %vm4307, 1, 0
        %v4372 = vsel %vm4308, 1, 0
        %v4373 = vsel %vm4309, 1, 0
        %v4374 = vsel %vm4310, 1, 0
        %v4375 = vsel %vm4311, 1, 0
        %v4376 = vsel %vm4312, 1, 0
        %v4377 = vsel %vm4313, 1, 0
        %v4378 = vsel %vm4314, 1, 0
        %v4379 = vsel %vm4315, 1, 0
        %v4380 = vsel %vm4316, 1, 0
        %v4381 = vsel %vm4317, 1, 0
        %v4382 = vsel %vm4318, 1, 0
        %v4383 = vsel %vm4319, 1, 0
        %v4384 = vsel %vm4320, 1, 0
        %v4385 = vsel %vm4321, 1, 0
        %v4386 = vsel %vm4322, 1, 0
        %v4387 = vsel %vm4323, 1, 0
        %v4388 = vsel %vm4324, 1, 0
        %v4389 = vsel %vm4325, 1, 0
        %v4390 = vsel %vm4326, 1, 0
        %v4391 = vsel %vm4327, 1, 0
        %v4392 = vsel %vm4328, 1, 0
        %v4393 = vsel %vm4329, 1, 0
        %v4394 = vsel %vm4330, 1, 0
        %v4395 = vsel %vm4331, 1, 0
        %v4396 = vsel %vm4332, 1, 0
        %v4397 = vsel %vm4333, 1, 0
        %v4398 = vsel %vm4334, 1, 0
        %v4399 = vsel %vm4335, 1, 0
        %v4400 = vsel %vm4336, 1, 0
        %v4401 = vsel %vm4337, 1, 0
        %v4402 = vsel %vm4338, 1, 0
        %v4403 = vsel %vm4339, 1, 0
        %v4404 = vsel %vm4340, 1, 0
        %v4405 = vsel %vm4341, 1, 0
        %v4406 = vsel %vm4342, 1, 0
        %v4407 = vsel %vm4343, 1, 0
        %v4408 = vsel %vm4344, 1, 0
        %v4409 = vsel %vm4345, 1, 0
        %v4410 = vsel %vm4346, 1, 0
        %v4411 = vsel %vm4347, 1, 0
        %v4412 = vsel %vm4348, 1, 0
        %v4413 = vsel %vm4349, 1, 0
        %v4414 = vsel %vm4350, 1, 0
        %v4415 = vsel %vm4351, 1, 0
        %v4416 = vsel %vm4352, 1, 0
        %v4417 = vsel %vm4353, 1, 0
        %v4418 = vsel %vm4354, 1, 0
        %v4419 = vsel %vm4355, 1, 0
        %v4420 = vsel %vm4356, 1, 0
        %v4421 = vsel %vm4357, 1, 0
        %v4422 = vsel %vm4358, 1, 0
        %v4423 = vsel %vm4359, 1, 0
        %v4424 = vsel %vm4360, 1, 0
        %v4425 = vsel %vm4361, 1, 0
        %v4426 = vsel %vm4362, 1, 0
        %v4427 = vsel %vm4363, 1, 0
        %v4428 = vsel %vm4364, 1, 0
        %v4429 = vsel %vm4365, 1, 0
        %v4430 = vcvt.s32.f32 %v4366
        %v4431 = vcvt.s32.f32 %v4367
        %v4432 = vcvt.s32.f32 %v4368
        %v4433 = vcvt.s32.f32 %v4369
        %v4434 = vcvt.s32.f32 %v4370
        %v4435 = vcvt.s32.f32 %v4371
        %v4436 = vcvt.s32.f32 %v4372
        %v4437 = vcvt.s32.f32 %v4373
        %v4438 = vcvt.s32.f32 %v4374
        %v4439 = vcvt.s32.f32 %v4375
        %v4440 = vcvt.s32.f32 %v4376
        %v4441 = vcvt.s32.f32 %v4377
        %v4442 = vcvt.s32.f32 %v4378
        %v4443 = vcvt.s32.f32 %v4379
        %v4444 = vcvt.s32.f32 %v4380
        %v4445 = vcvt.s32.f32 %v4381
        %v4446 = vcvt.s32.f32 %v4382
        %v4447 = vcvt.s32.f32 %v4383
        %v4448 = vcvt.s32.f32 %v4384
        %v4449 = vcvt.s32.f32 %v4385
        %v4450 = vcvt.s32.f32 %v4386
        %v4451 = vcvt.s32.f32 %v4387
        %v4452 = vcvt.s32.f32 %v4388
        %v4453 = vcvt.s32.f32 %v4389
        %v4454 = vcvt.s32.f32 %v4390
        %v4455 = vcvt.s32.f32 %v4391
        %v4456 = vcvt.s32.f32 %v4392
        %v4457 = vcvt.s32.f32 %v4393
        %v4458 = vcvt.s32.f32 %v4394
        %v4459 = vcvt.s32.f32 %v4395
        %v4460 = vcvt.s32.f32 %v4396
        %v4461 = vcvt.s32.f32 %v4397
        %v4462 = vcvt.s32.f32 %v4398
        %v4463 = vcvt.s32.f32 %v4399
        %v4464 = vcvt.s32.f32 %v4400
        %v4465 = vcvt.s32.f32 %v4401
        %v4466 = vcvt.s32.f32 %v4402
        %v4467 = vcvt.s32.f32 %v4403
        %v4468 = vcvt.s32.f32 %v4404
        %v4469 = vcvt.s32.f32 %v4405
        %v4470 = vcvt.s32.f32 %v4406
        %v4471 = vcvt.s32.f32 %v4407
        %v4472 = vcvt.s32.f32 %v4408
        %v4473 = vcvt.s32.f32 %v4409
        %v4474 = vcvt.s32.f32 %v4410
        %v4475 = vcvt.s32.f32 %v4411
        %v4476 = vcvt.s32.f32 %v4412
        %v4477 = vcvt.s32.f32 %v4413
        %v4478 = vcvt.s32.f32 %v4414
        %v4479 = vcvt.s32.f32 %v4415
        %v4480 = vcvt.s32.f32 %v4416
        %v4481 = vcvt.s32.f32 %v4417
        %v4482 = vcvt.s32.f32 %v4418
        %v4483 = vcvt.s32.f32 %v4419
        %v4484 = vcvt.s32.f32 %v4420
        %v4485 = vcvt.s32.f32 %v4421
        %v4486 = vcvt.s32.f32 %v4422
        %v4487 = vcvt.s32.f32 %v4423
        %v4488 = vcvt.s32.f32 %v4424
        %v4489 = vcvt.s32.f32 %v4425
        %v4490 = vcvt.s32.f32 %v4426
        %v4491 = vcvt.s32.f32 %v4427
        %v4492 = vcvt.s32.f32 %v4428
        %v4493 = vcvt.s32.f32 %v4429
        %4494 = vst [vmem:[%s660] sm:$0xff] %v4430
        %4495 = vst [vmem:[%s660 + $0x8] sm:$0xff] %v4431
        %4496 = vst [vmem:[%s660 + $0x10] sm:$0xff] %v4432
        %4497 = vst [vmem:[%s660 + $0x18] sm:$0xff] %v4433
        %4498 = vst [vmem:[%s660 + $0x20] sm:$0xff] %v4434
        %4499 = vst [vmem:[%s660 + $0x28] sm:$0xff] %v4435
        %4500 = vst [vmem:[%s660 + $0x30] sm:$0xff] %v4436
        %4501 = vst [vmem:[%s660 + $0x38] sm:$0xff] %v4437
        %4502 = vst [vmem:[%s660 + $0x40] sm:$0xff] %v4438
        %4503 = vst [vmem:[%s660 + $0x48] sm:$0xff] %v4439
        %4504 = vst [vmem:[%s660 + $0x50] sm:$0xff] %v4440
        %4505 = vst [vmem:[%s660 + $0x58] sm:$0xff] %v4441
        %4506 = vst [vmem:[%s660 + $0x60] sm:$0xff] %v4442
        %4507 = vst [vmem:[%s660 + $0x68] sm:$0xff] %v4443
        %4508 = vst [vmem:[%s660 + $0x70] sm:$0xff] %v4444
        %4509 = vst [vmem:[%s660 + $0x78] sm:$0xff] %v4445
        %4510 = vst [vmem:[%s660 + $0x80] sm:$0xff] %v4446
        %4511 = vst [vmem:[%s660 + $0x88] sm:$0xff] %v4447
        %4512 = vst [vmem:[%s660 + $0x90] sm:$0xff] %v4448
        %4513 = vst [vmem:[%s660 + $0x98] sm:$0xff] %v4449
        %4514 = vst [vmem:[%s660 + $0xa0] sm:$0xff] %v4450
        %4515 = vst [vmem:[%s660 + $0xa8] sm:$0xff] %v4451
        %4516 = vst [vmem:[%s660 + $0xb0] sm:$0xff] %v4452
        %4517 = vst [vmem:[%s660 + $0xb8] sm:$0xff] %v4453
        %4518 = vst [vmem:[%s660 + $0xc0] sm:$0xff] %v4454
        %4519 = vst [vmem:[%s660 + $0xc8] sm:$0xff] %v4455
        %4520 = vst [vmem:[%s660 + $0xd0] sm:$0xff] %v4456
        %4521 = vst [vmem:[%s660 + $0xd8] sm:$0xff] %v4457
        %4522 = vst [vmem:[%s660 + $0xe0] sm:$0xff] %v4458
        %4523 = vst [vmem:[%s660 + $0xe8] sm:$0xff] %v4459
        %4524 = vst [vmem:[%s660 + $0xf0] sm:$0xff] %v4460
        %4525 = vst [vmem:[%s660 + $0xf8] sm:$0xff] %v4461
        %4526 = vst [vmem:[%s660 + $0x100] sm:$0xff] %v4462
        %4527 = vst [vmem:[%s660 + $0x108] sm:$0xff] %v4463
        %4528 = vst [vmem:[%s660 + $0x110] sm:$0xff] %v4464
        %4529 = vst [vmem:[%s660 + $0x118] sm:$0xff] %v4465
        %4530 = vst [vmem:[%s660 + $0x120] sm:$0xff] %v4466
        %4531 = vst [vmem:[%s660 + $0x128] sm:$0xff] %v4467
        %4532 = vst [vmem:[%s660 + $0x130] sm:$0xff] %v4468
        %4533 = vst [vmem:[%s660 + $0x138] sm:$0xff] %v4469
        %4534 = vst [vmem:[%s660 + $0x140] sm:$0xff] %v4470
        %4535 = vst [vmem:[%s660 + $0x148] sm:$0xff] %v4471
        %4536 = vst [vmem:[%s660 + $0x150] sm:$0xff] %v4472
        %4537 = vst [vmem:[%s660 + $0x158] sm:$0xff] %v4473
        %4538 = vst [vmem:[%s660 + $0x160] sm:$0xff] %v4474
        %4539 = vst [vmem:[%s660 + $0x168] sm:$0xff] %v4475
        %4540 = vst [vmem:[%s660 + $0x170] sm:$0xff] %v4476
        %4541 = vst [vmem:[%s660 + $0x178] sm:$0xff] %v4477
        %4542 = vst [vmem:[%s660 + $0x180] sm:$0xff] %v4478
        %4543 = vst [vmem:[%s660 + $0x188] sm:$0xff] %v4479
        %4544 = vst [vmem:[%s660 + $0x190] sm:$0xff] %v4480
        %4545 = vst [vmem:[%s660 + $0x198] sm:$0xff] %v4481
        %4546 = vst [vmem:[%s660 + $0x1a0] sm:$0xff] %v4482
        %4547 = vst [vmem:[%s660 + $0x1a8] sm:$0xff] %v4483
        %4548 = vst [vmem:[%s660 + $0x1b0] sm:$0xff] %v4484
        %4549 = vst [vmem:[%s660 + $0x1b8] sm:$0xff] %v4485
        %4550 = vst [vmem:[%s660 + $0x1c0] sm:$0xff] %v4486
        %4551 = vst [vmem:[%s660 + $0x1c8] sm:$0xff] %v4487
        %4552 = vst [vmem:[%s660 + $0x1d0] sm:$0xff] %v4488
        %4553 = vst [vmem:[%s660 + $0x1d8] sm:$0xff] %v4489
        %4554 = vst [vmem:[%s660 + $0x1e0] sm:$0xff] %v4490
        %4555 = vst [vmem:[%s660 + $0x1e8] sm:$0xff] %v4491
        %4556 = vst [vmem:[%s660 + $0x1f0] sm:$0xff] %v4492
        %4557 = vst [vmem:[%s660 + $0x1f8] sm:$0xff] %v4493
        %v4558 = vpack.c.bf16 %v4065, %v4064
        %v4559 = vpack.c.bf16 %v4067, %v4066
        %v4560 = vpack.c.bf16 %v4069, %v4068
        %v4561 = vpack.c.bf16 %v4071, %v4070
        %v4562 = vpack.c.bf16 %v4073, %v4072
        %v4563 = vpack.c.bf16 %v4075, %v4074
        %v4564 = vpack.c.bf16 %v4077, %v4076
        %v4565 = vpack.c.bf16 %v4079, %v4078
        %v4566 = vpack.c.bf16 %v4081, %v4080
        %v4567 = vpack.c.bf16 %v4083, %v4082
        %v4568 = vpack.c.bf16 %v4085, %v4084
        %v4569 = vpack.c.bf16 %v4087, %v4086
        %v4570 = vpack.c.bf16 %v4089, %v4088
        %v4571 = vpack.c.bf16 %v4091, %v4090
        %v4572 = vpack.c.bf16 %v4093, %v4092
        %v4573 = vpack.c.bf16 %v4095, %v4094
        %v4574 = vld [vmem:[%s597] sm:$0xf]
        %v4575 = vld [vmem:[%s597 + $0x4] sm:$0xf]
        %v4576 = vld [vmem:[%s597 + $0x8] sm:$0xf]
        %v4577 = vld [vmem:[%s597 + $0xc] sm:$0xf]
        %v4582 = vunpack.c.l.b16 %v4574
        %v4583 = vunpack.c.l.b16 %v4575
        %v4584 = vunpack.c.l.b16 %v4576
        %v4585 = vunpack.c.l.b16 %v4577
        %v4586 = vpack.c.b16 %v4583, %v4582
        %v4587 = vpack.c.b16 %v4585, %v4584
        %v4591 = vsel %vm1518, %v4558, 0
        %v4594 = vsel %vm1518, %v4559, 0
        %v4597 = vsel %vm1518, %v4560, 0
        %v4600 = vsel %vm1518, %v4561, 0
        %v4603 = vsel %vm1518, %v4562, 0
        %v4606 = vsel %vm1518, %v4563, 0
        %v4609 = vsel %vm1518, %v4564, 0
        %v4612 = vsel %vm1518, %v4565, 0
        %v4615 = vsel %vm1518, %v4566, 0
        %v4618 = vsel %vm1518, %v4567, 0
        %v4621 = vsel %vm1518, %v4568, 0
        %v4624 = vsel %vm1518, %v4569, 0
        %v4627 = vsel %vm1518, %v4570, 0
        %v4630 = vsel %vm1518, %v4571, 0
        %v4633 = vsel %vm1518, %v4572, 0
        %v4636 = vsel %vm1518, %v4573, 0
        %4638 = vmatprep.subr.bf16.mxu0 0
        %4639 = vmatpush1.bf16.msra.mxu0 %v4586
        %4640 = vmatprep.subr.bf16.mxu0 0
        %4641 = vmatpush1.bf16.msra.mxu0 %v4587
        %4642 = vmatprep.subr.bf16.mxu0 0
        %4643 = vmatpush1.bf16.msra.mxu0 0
        %4644 = vmatprep.subr.bf16.mxu0 0
        %4645 = vmatpush1.bf16.msra.mxu0 0
        %4646 = vmatprep.subr.bf16.mxu0 0
        %4647 = vmatpush1.bf16.msra.mxu0 0
        %4648 = vmatprep.subr.bf16.mxu0 0
        %4649 = vmatpush1.bf16.msra.mxu0 0
        %4650 = vmatprep.subr.bf16.mxu0 0
        %4651 = vmatpush1.bf16.msra.mxu0 0
        %4652 = vmatprep.subr.bf16.mxu0 0
        %4653 = vmatpush1.bf16.msra.mxu0 0
        %4654 = vmatprep.subr.bf16.mxu0 0
        %4655 = vmatpush1.bf16.msra.mxu0 0
        %4656 = vmatprep.subr.bf16.mxu0 0
        %4657 = vmatpush1.bf16.msra.mxu0 0
        %4658 = vmatprep.subr.bf16.mxu0 0
        %4659 = vmatpush1.bf16.msra.mxu0 0
        %4660 = vmatprep.subr.bf16.mxu0 0
        %4661 = vmatpush1.bf16.msra.mxu0 0
        %4662 = vmatprep.subr.bf16.mxu0 0
        %4663 = vmatpush1.bf16.msra.mxu0 0
        %4664 = vmatprep.subr.bf16.mxu0 0
        %4665 = vmatpush1.bf16.msra.mxu0 0
        %4666 = vmatprep.subr.bf16.mxu0 0
        %4667 = vmatpush1.bf16.msra.mxu0 0
        %4668 = vmatprep.subr.bf16.mxu0 0
        %4669 = vmatpush1.bf16.msra.mxu0 0
        %4670 = vmatprep.mubr.bf16.mxu0 0
        %4671 = vmatmul.mubr.bf16.gmra.mrb[0].mxu0 %v4591
        %v4672 = vpop.f32.mrb[0].mxu0
        %v4673 = vadd.f32 0.0, %v4672
        %v4674 = vpop.f32.mrb[0].mxu0
        %v4675 = vpop.f32.mrb[0].mxu0
        %v4676 = vadd.f32 0.0, %v4675
        %v4677 = vpop.f32.mrb[0].mxu0
        %4678 = vmatprep.mubr.bf16.mxu0 0
        %4679 = vmatmul.mubr.bf16.gmra.mrb[0].mxu0 %v4594
        %v4680 = vpop.f32.mrb[0].mxu0
        %v4681 = vadd.f32 0.0, %v4680
        %v4682 = vpop.f32.mrb[0].mxu0
        %v4683 = vpop.f32.mrb[0].mxu0
        %v4684 = vadd.f32 0.0, %v4683
        %v4685 = vpop.f32.mrb[0].mxu0
        %4686 = vmatprep.mubr.bf16.mxu0 0
        %4687 = vmatmul.mubr.bf16.gmra.mrb[0].mxu0 %v4597
        %v4688 = vpop.f32.mrb[0].mxu0
        %v4689 = vadd.f32 0.0, %v4688
        %v4690 = vpop.f32.mrb[0].mxu0
        %v4691 = vpop.f32.mrb[0].mxu0
        %v4692 = vadd.f32 0.0, %v4691
        %v4693 = vpop.f32.mrb[0].mxu0
        %4694 = vmatprep.mubr.bf16.mxu0 0
        %4695 = vmatmul.mubr.bf16.gmra.mrb[0].mxu0 %v4600
        %v4696 = vpop.f32.mrb[0].mxu0
        %v4697 = vadd.f32 0.0, %v4696
        %v4698 = vpop.f32.mrb[0].mxu0
        %v4699 = vpop.f32.mrb[0].mxu0
        %v4700 = vadd.f32 0.0, %v4699
        %v4701 = vpop.f32.mrb[0].mxu0
        %4702 = vmatprep.mubr.bf16.mxu0 0
        %4703 = vmatmul.mubr.bf16.gmra.mrb[0].mxu0 %v4603
        %v4704 = vpop.f32.mrb[0].mxu0
        %v4705 = vadd.f32 0.0, %v4704
        %v4706 = vpop.f32.mrb[0].mxu0
        %v4707 = vpop.f32.mrb[0].mxu0
        %v4708 = vadd.f32 0.0, %v4707
        %v4709 = vpop.f32.mrb[0].mxu0
        %4710 = vmatprep.mubr.bf16.mxu0 0
        %4711 = vmatmul.mubr.bf16.gmra.mrb[0].mxu0 %v4606
        %v4712 = vpop.f32.mrb[0].mxu0
        %v4713 = vadd.f32 0.0, %v4712
        %v4714 = vpop.f32.mrb[0].mxu0
        %v4715 = vpop.f32.mrb[0].mxu0
        %v4716 = vadd.f32 0.0, %v4715
        %v4717 = vpop.f32.mrb[0].mxu0
        %4718 = vmatprep.mubr.bf16.mxu0 0
        %4719 = vmatmul.mubr.bf16.gmra.mrb[0].mxu0 %v4609
        %v4720 = vpop.f32.mrb[0].mxu0
        %v4721 = vadd.f32 0.0, %v4720
        %v4722 = vpop.f32.mrb[0].mxu0
        %v4723 = vpop.f32.mrb[0].mxu0
        %v4724 = vadd.f32 0.0, %v4723
        %v4725 = vpop.f32.mrb[0].mxu0
        %4726 = vmatprep.mubr.bf16.mxu0 0
        %4727 = vmatmul.mubr.bf16.gmra.mrb[0].mxu0 %v4612
        %v4728 = vpop.f32.mrb[0].mxu0
        %v4729 = vadd.f32 0.0, %v4728
        %v4730 = vpop.f32.mrb[0].mxu0
        %v4731 = vpop.f32.mrb[0].mxu0
        %v4732 = vadd.f32 0.0, %v4731
        %v4733 = vpop.f32.mrb[0].mxu0
        %4734 = vmatprep.mubr.bf16.mxu0 0
        %4735 = vmatmul.mubr.bf16.gmra.mrb[0].mxu0 %v4615
        %v4736 = vpop.f32.mrb[0].mxu0
        %v4737 = vadd.f32 0.0, %v4736
        %v4738 = vpop.f32.mrb[0].mxu0
        %v4739 = vpop.f32.mrb[0].mxu0
        %v4740 = vadd.f32 0.0, %v4739
        %v4741 = vpop.f32.mrb[0].mxu0
        %4742 = vmatprep.mubr.bf16.mxu0 0
        %4743 = vmatmul.mubr.bf16.gmra.mrb[0].mxu0 %v4618
        %v4744 = vpop.f32.mrb[0].mxu0
        %v4745 = vadd.f32 0.0, %v4744
        %v4746 = vpop.f32.mrb[0].mxu0
        %v4747 = vpop.f32.mrb[0].mxu0
        %v4748 = vadd.f32 0.0, %v4747
        %v4749 = vpop.f32.mrb[0].mxu0
        %4750 = vmatprep.mubr.bf16.mxu0 0
        %4751 = vmatmul.mubr.bf16.gmra.mrb[0].mxu0 %v4621
        %v4752 = vpop.f32.mrb[0].mxu0
        %v4753 = vadd.f32 0.0, %v4752
        %v4754 = vpop.f32.mrb[0].mxu0
        %v4755 = vpop.f32.mrb[0].mxu0
        %v4756 = vadd.f32 0.0, %v4755
        %v4757 = vpop.f32.mrb[0].mxu0
        %4758 = vmatprep.mubr.bf16.mxu0 0
        %4759 = vmatmul.mubr.bf16.gmra.mrb[0].mxu0 %v4624
        %v4760 = vpop.f32.mrb[0].mxu0
        %v4761 = vadd.f32 0.0, %v4760
        %v4762 = vpop.f32.mrb[0].mxu0
        %v4763 = vpop.f32.mrb[0].mxu0
        %v4764 = vadd.f32 0.0, %v4763
        %v4765 = vpop.f32.mrb[0].mxu0
        %4766 = vmatprep.mubr.bf16.mxu0 0
        %4767 = vmatmul.mubr.bf16.gmra.mrb[0].mxu0 %v4627
        %v4768 = vpop.f32.mrb[0].mxu0
        %v4769 = vadd.f32 0.0, %v4768
        %v4770 = vpop.f32.mrb[0].mxu0
        %v4771 = vpop.f32.mrb[0].mxu0
        %v4772 = vadd.f32 0.0, %v4771
        %v4773 = vpop.f32.mrb[0].mxu0
        %4774 = vmatprep.mubr.bf16.mxu0 0
        %4775 = vmatmul.mubr.bf16.gmra.mrb[0].mxu0 %v4630
        %v4776 = vpop.f32.mrb[0].mxu0
        %v4777 = vadd.f32 0.0, %v4776
        %v4778 = vpop.f32.mrb[0].mxu0
        %v4779 = vpop.f32.mrb[0].mxu0
        %v4780 = vadd.f32 0.0, %v4779
        %v4781 = vpop.f32.mrb[0].mxu0
        %4782 = vmatprep.mubr.bf16.mxu0 0
        %4783 = vmatmul.mubr.bf16.gmra.mrb[0].mxu0 %v4633
        %v4784 = vpop.f32.mrb[0].mxu0
        %v4785 = vadd.f32 0.0, %v4784
        %v4786 = vpop.f32.mrb[0].mxu0
        %v4787 = vpop.f32.mrb[0].mxu0
        %v4788 = vadd.f32 0.0, %v4787
        %v4789 = vpop.f32.mrb[0].mxu0
        %4790 = vmatprep.mubr.bf16.mxu0 0
        %4791 = vmatmul.mubr.bf16.gmra.mrb[0].mxu0 %v4636
        %v4792 = vpop.f32.mrb[0].mxu0
        %v4793 = vadd.f32 0.0, %v4792
        %v4794 = vpop.f32.mrb[0].mxu0
        %v4795 = vpop.f32.mrb[0].mxu0
        %v4796 = vadd.f32 0.0, %v4795
        %v4797 = vpop.f32.mrb[0].mxu0
        %4798 = vdwg.mxu0
        // Predicated region
        $region109: #{tpu_custom_call.1} parent=71 // pred_check
          %p4799 = pneg %p731
        $region110: #{tpu_custom_call.1} parent=71 // pred_check_branch
          %4801 = sbr.rel (%p4799) target = $region112
        $region111: #{tpu_custom_call.1} parent=71 // pred_region
          %4802 = vst [vmem:[%s667] sm:$0xff] %v4673
          %4803 = vst [vmem:[%s667 + $0x8] sm:$0xff] %v4676
          %4804 = vst [vmem:[%s667 + $0x10] sm:$0xff] %v4681
          %4805 = vst [vmem:[%s667 + $0x18] sm:$0xff] %v4684
          %4806 = vst [vmem:[%s667 + $0x20] sm:$0xff] %v4689
          %4807 = vst [vmem:[%s667 + $0x28] sm:$0xff] %v4692
          %4808 = vst [vmem:[%s667 + $0x30] sm:$0xff] %v4697
          %4809 = vst [vmem:[%s667 + $0x38] sm:$0xff] %v4700
          %4810 = vst [vmem:[%s667 + $0x40] sm:$0xff] %v4705
          %4811 = vst [vmem:[%s667 + $0x48] sm:$0xff] %v4708
          %4812 = vst [vmem:[%s667 + $0x50] sm:$0xff] %v4713
          %4813 = vst [vmem:[%s667 + $0x58] sm:$0xff] %v4716
          %4814 = vst [vmem:[%s667 + $0x60] sm:$0xff] %v4721
          %4815 = vst [vmem:[%s667 + $0x68] sm:$0xff] %v4724
          %4816 = vst [vmem:[%s667 + $0x70] sm:$0xff] %v4729
          %4817 = vst [vmem:[%s667 + $0x78] sm:$0xff] %v4732
          %4818 = vst [vmem:[%s667 + $0x80] sm:$0xff] %v4737
          %4819 = vst [vmem:[%s667 + $0x88] sm:$0xff] %v4740
          %4820 = vst [vmem:[%s667 + $0x90] sm:$0xff] %v4745
          %4821 = vst [vmem:[%s667 + $0x98] sm:$0xff] %v4748
          %4822 = vst [vmem:[%s667 + $0xa0] sm:$0xff] %v4753
          %4823 = vst [vmem:[%s667 + $0xa8] sm:$0xff] %v4756
          %4824 = vst [vmem:[%s667 + $0xb0] sm:$0xff] %v4761
          %4825 = vst [vmem:[%s667 + $0xb8] sm:$0xff] %v4764
          %4826 = vst [vmem:[%s667 + $0xc0] sm:$0xff] %v4769
          %4827 = vst [vmem:[%s667 + $0xc8] sm:$0xff] %v4772
          %4828 = vst [vmem:[%s667 + $0xd0] sm:$0xff] %v4777
          %4829 = vst [vmem:[%s667 + $0xd8] sm:$0xff] %v4780
          %4830 = vst [vmem:[%s667 + $0xe0] sm:$0xff] %v4785
          %4831 = vst [vmem:[%s667 + $0xe8] sm:$0xff] %v4788
          %4832 = vst [vmem:[%s667 + $0xf0] sm:$0xff] %v4793
          %4833 = vst [vmem:[%s667 + $0xf8] sm:$0xff] %v4796
        $region112: #{tpu_custom_call.1} parent=71 // pred_fallthru
          _
        %p4834 = scmp.ne.s32.totalorder %s42, 0
        // Predicated region
        $region113: #{tpu_custom_call.1} parent=71 // pred_check
          %p4835 = pneg %p4834
        $region114: #{tpu_custom_call.1} parent=71 // pred_check_branch
          %4837 = sbr.rel (%p4835) target = $region116
        $region115: #{tpu_custom_call.1} parent=71 // pred_region
          %v4838 = vld [vmem:[%s667] sm:$0xff]
          %v4839 = vld [vmem:[%s667 + $0x8] sm:$0xff]
          %v4840 = vld [vmem:[%s667 + $0x10] sm:$0xff]
          %v4841 = vld [vmem:[%s667 + $0x18] sm:$0xff]
          %v4842 = vld [vmem:[%s667 + $0x20] sm:$0xff]
          %v4843 = vld [vmem:[%s667 + $0x28] sm:$0xff]
          %v4844 = vld [vmem:[%s667 + $0x30] sm:$0xff]
          %v4845 = vld [vmem:[%s667 + $0x38] sm:$0xff]
          %v4846 = vld [vmem:[%s667 + $0x40] sm:$0xff]
          %v4847 = vld [vmem:[%s667 + $0x48] sm:$0xff]
          %v4848 = vld [vmem:[%s667 + $0x50] sm:$0xff]
          %v4849 = vld [vmem:[%s667 + $0x58] sm:$0xff]
          %v4850 = vld [vmem:[%s667 + $0x60] sm:$0xff]
          %v4851 = vld [vmem:[%s667 + $0x68] sm:$0xff]
          %v4852 = vld [vmem:[%s667 + $0x70] sm:$0xff]
          %v4853 = vld [vmem:[%s667 + $0x78] sm:$0xff]
          %v4854 = vld [vmem:[%s667 + $0x80] sm:$0xff]
          %v4855 = vld [vmem:[%s667 + $0x88] sm:$0xff]
          %v4856 = vld [vmem:[%s667 + $0x90] sm:$0xff]
          %v4857 = vld [vmem:[%s667 + $0x98] sm:$0xff]
          %v4858 = vld [vmem:[%s667 + $0xa0] sm:$0xff]
          %v4859 = vld [vmem:[%s667 + $0xa8] sm:$0xff]
          %v4860 = vld [vmem:[%s667 + $0xb0] sm:$0xff]
          %v4861 = vld [vmem:[%s667 + $0xb8] sm:$0xff]
          %v4862 = vld [vmem:[%s667 + $0xc0] sm:$0xff]
          %v4863 = vld [vmem:[%s667 + $0xc8] sm:$0xff]
          %v4864 = vld [vmem:[%s667 + $0xd0] sm:$0xff]
          %v4865 = vld [vmem:[%s667 + $0xd8] sm:$0xff]
          %v4866 = vld [vmem:[%s667 + $0xe0] sm:$0xff]
          %v4867 = vld [vmem:[%s667 + $0xe8] sm:$0xff]
          %v4868 = vld [vmem:[%s667 + $0xf0] sm:$0xff]
          %v4869 = vld [vmem:[%s667 + $0xf8] sm:$0xff]
          %v4870 = vadd.f32 %v4838, %v4673
          %v4871 = vadd.f32 %v4839, %v4676
          %v4872 = vadd.f32 %v4840, %v4681
          %v4873 = vadd.f32 %v4841, %v4684
          %v4874 = vadd.f32 %v4842, %v4689
          %v4875 = vadd.f32 %v4843, %v4692
          %v4876 = vadd.f32 %v4844, %v4697
          %v4877 = vadd.f32 %v4845, %v4700
          %v4878 = vadd.f32 %v4846, %v4705
          %v4879 = vadd.f32 %v4847, %v4708
          %v4880 = vadd.f32 %v4848, %v4713
          %v4881 = vadd.f32 %v4849, %v4716
          %v4882 = vadd.f32 %v4850, %v4721
          %v4883 = vadd.f32 %v4851, %v4724
          %v4884 = vadd.f32 %v4852, %v4729
          %v4885 = vadd.f32 %v4853, %v4732
          %v4886 = vadd.f32 %v4854, %v4737
          %v4887 = vadd.f32 %v4855, %v4740
          %v4888 = vadd.f32 %v4856, %v4745
          %v4889 = vadd.f32 %v4857, %v4748
          %v4890 = vadd.f32 %v4858, %v4753
          %v4891 = vadd.f32 %v4859, %v4756
          %v4892 = vadd.f32 %v4860, %v4761
          %v4893 = vadd.f32 %v4861, %v4764
          %v4894 = vadd.f32 %v4862, %v4769
          %v4895 = vadd.f32 %v4863, %v4772
          %v4896 = vadd.f32 %v4864, %v4777
          %v4897 = vadd.f32 %v4865, %v4780
          %v4898 = vadd.f32 %v4866, %v4785
          %v4899 = vadd.f32 %v4867, %v4788
          %v4900 = vadd.f32 %v4868, %v4793
          %v4901 = vadd.f32 %v4869, %v4796
          %4902 = vst [vmem:[%s667] sm:$0xff] %v4870
          %4903 = vst [vmem:[%s667 + $0x8] sm:$0xff] %v4871
          %4904 = vst [vmem:[%s667 + $0x10] sm:$0xff] %v4872
          %4905 = vst [vmem:[%s667 + $0x18] sm:$0xff] %v4873
          %4906 = vst [vmem:[%s667 + $0x20] sm:$0xff] %v4874
          %4907 = vst [vmem:[%s667 + $0x28] sm:$0xff] %v4875
          %4908 = vst [vmem:[%s667 + $0x30] sm:$0xff] %v4876
          %4909 = vst [vmem:[%s667 + $0x38] sm:$0xff] %v4877
          %4910 = vst [vmem:[%s667 + $0x40] sm:$0xff] %v4878
          %4911 = vst [vmem:[%s667 + $0x48] sm:$0xff] %v4879
          %4912 = vst [vmem:[%s667 + $0x50] sm:$0xff] %v4880
          %4913 = vst [vmem:[%s667 + $0x58] sm:$0xff] %v4881
          %4914 = vst [vmem:[%s667 + $0x60] sm:$0xff] %v4882
          %4915 = vst [vmem:[%s667 + $0x68] sm:$0xff] %v4883
          %4916 = vst [vmem:[%s667 + $0x70] sm:$0xff] %v4884
          %4917 = vst [vmem:[%s667 + $0x78] sm:$0xff] %v4885
          %4918 = vst [vmem:[%s667 + $0x80] sm:$0xff] %v4886
          %4919 = vst [vmem:[%s667 + $0x88] sm:$0xff] %v4887
          %4920 = vst [vmem:[%s667 + $0x90] sm:$0xff] %v4888
          %4921 = vst [vmem:[%s667 + $0x98] sm:$0xff] %v4889
          %4922 = vst [vmem:[%s667 + $0xa0] sm:$0xff] %v4890
          %4923 = vst [vmem:[%s667 + $0xa8] sm:$0xff] %v4891
          %4924 = vst [vmem:[%s667 + $0xb0] sm:$0xff] %v4892
          %4925 = vst [vmem:[%s667 + $0xb8] sm:$0xff] %v4893
          %4926 = vst [vmem:[%s667 + $0xc0] sm:$0xff] %v4894
          %4927 = vst [vmem:[%s667 + $0xc8] sm:$0xff] %v4895
          %4928 = vst [vmem:[%s667 + $0xd0] sm:$0xff] %v4896
          %4929 = vst [vmem:[%s667 + $0xd8] sm:$0xff] %v4897
          %4930 = vst [vmem:[%s667 + $0xe0] sm:$0xff] %v4898
          %4931 = vst [vmem:[%s667 + $0xe8] sm:$0xff] %v4899
          %4932 = vst [vmem:[%s667 + $0xf0] sm:$0xff] %v4900
          %4933 = vst [vmem:[%s667 + $0xf8] sm:$0xff] %v4901
        $region116: #{tpu_custom_call.1} parent=71 // pred_fallthru
          _
        %p4934 = scmp.eq.s32.totalorder %s42, 3
        // Predicated region
        $region117: #{tpu_custom_call.1} parent=71 // pred_check
          %p4935 = pneg %p4934
        $region118: #{tpu_custom_call.1} parent=71 // pred_check_branch
          %4937 = sbr.rel (%p4935) target = $region120
        $region119: #{tpu_custom_call.1} parent=71 // pred_region
          %v4938 = vld [vmem:[%s667] sm:$0xff]
          %v4939 = vld [vmem:[%s667 + $0x8] sm:$0xff]
          %v4940 = vld [vmem:[%s667 + $0x10] sm:$0xff]
          %v4941 = vld [vmem:[%s667 + $0x18] sm:$0xff]
          %v4942 = vld [vmem:[%s667 + $0x20] sm:$0xff]
          %v4943 = vld [vmem:[%s667 + $0x28] sm:$0xff]
          %v4944 = vld [vmem:[%s667 + $0x30] sm:$0xff]
          %v4945 = vld [vmem:[%s667 + $0x38] sm:$0xff]
          %v4946 = vld [vmem:[%s667 + $0x40] sm:$0xff]
          %v4947 = vld [vmem:[%s667 + $0x48] sm:$0xff]
          %v4948 = vld [vmem:[%s667 + $0x50] sm:$0xff]
          %v4949 = vld [vmem:[%s667 + $0x58] sm:$0xff]
          %v4950 = vld [vmem:[%s667 + $0x60] sm:$0xff]
          %v4951 = vld [vmem:[%s667 + $0x68] sm:$0xff]
          %v4952 = vld [vmem:[%s667 + $0x70] sm:$0xff]
          %v4953 = vld [vmem:[%s667 + $0x78] sm:$0xff]
          %v4954 = vld [vmem:[%s667 + $0x80] sm:$0xff]
          %v4955 = vld [vmem:[%s667 + $0x88] sm:$0xff]
          %v4956 = vld [vmem:[%s667 + $0x90] sm:$0xff]
          %v4957 = vld [vmem:[%s667 + $0x98] sm:$0xff]
          %v4958 = vld [vmem:[%s667 + $0xa0] sm:$0xff]
          %v4959 = vld [vmem:[%s667 + $0xa8] sm:$0xff]
          %v4960 = vld [vmem:[%s667 + $0xb0] sm:$0xff]
          %v4961 = vld [vmem:[%s667 + $0xb8] sm:$0xff]
          %v4962 = vld [vmem:[%s667 + $0xc0] sm:$0xff]
          %v4963 = vld [vmem:[%s667 + $0xc8] sm:$0xff]
          %v4964 = vld [vmem:[%s667 + $0xd0] sm:$0xff]
          %v4965 = vld [vmem:[%s667 + $0xd8] sm:$0xff]
          %v4966 = vld [vmem:[%s667 + $0xe0] sm:$0xff]
          %v4967 = vld [vmem:[%s667 + $0xe8] sm:$0xff]
          %v4968 = vld [vmem:[%s667 + $0xf0] sm:$0xff]
          %v4969 = vld [vmem:[%s667 + $0xf8] sm:$0xff]
          %v4970 = vld [vmem:[#allocation15] sm:$0x1]
          %v4972 = vlaneseq
          %v4973 = vshrl.u32 %v4972, 7
          %v4974 = vsub.s32 0, %v4973
          %v4975 = vrot.slane %v4970, %v4974
          %v4977 = vadd.f32 %v4938, %v4975
          %v4978 = vadd.f32 %v4939, %v4975
          %v4979 = vadd.f32 %v4940, %v4975
          %v4980 = vadd.f32 %v4941, %v4975
          %v4981 = vadd.f32 %v4942, %v4975
          %v4982 = vadd.f32 %v4943, %v4975
          %v4983 = vadd.f32 %v4944, %v4975
          %v4984 = vadd.f32 %v4945, %v4975
          %v4985 = vadd.f32 %v4946, %v4975
          %v4986 = vadd.f32 %v4947, %v4975
          %v4987 = vadd.f32 %v4948, %v4975
          %v4988 = vadd.f32 %v4949, %v4975
          %v4989 = vadd.f32 %v4950, %v4975
          %v4990 = vadd.f32 %v4951, %v4975
          %v4991 = vadd.f32 %v4952, %v4975
          %v4992 = vadd.f32 %v4953, %v4975
          %v4993 = vadd.f32 %v4954, %v4975
          %v4994 = vadd.f32 %v4955, %v4975
          %v4995 = vadd.f32 %v4956, %v4975
          %v4996 = vadd.f32 %v4957, %v4975
          %v4997 = vadd.f32 %v4958, %v4975
          %v4998 = vadd.f32 %v4959, %v4975
          %v4999 = vadd.f32 %v4960, %v4975
          %v5000 = vadd.f32 %v4961, %v4975
          %v5001 = vadd.f32 %v4962, %v4975
          %v5002 = vadd.f32 %v4963, %v4975
          %v5003 = vadd.f32 %v4964, %v4975
          %v5004 = vadd.f32 %v4965, %v4975
          %v5005 = vadd.f32 %v4966, %v4975
          %v5006 = vadd.f32 %v4967, %v4975
          %v5007 = vadd.f32 %v4968, %v4975
          %v5008 = vadd.f32 %v4969, %v4975
          %v5009 = vmax.f32 %v4977, 0.0
          %v5010 = vmax.f32 %v4978, 0.0
          %v5011 = vmax.f32 %v4979, 0.0
          %v5012 = vmax.f32 %v4980, 0.0
          %v5013 = vmax.f32 %v4981, 0.0
          %v5014 = vmax.f32 %v4982, 0.0
          %v5015 = vmax.f32 %v4983, 0.0
          %v5016 = vmax.f32 %v4984, 0.0
          %v5017 = vmax.f32 %v4985, 0.0
          %v5018 = vmax.f32 %v4986, 0.0
          %v5019 = vmax.f32 %v4987, 0.0
          %v5020 = vmax.f32 %v4988, 0.0
          %v5021 = vmax.f32 %v4989, 0.0
          %v5022 = vmax.f32 %v4990, 0.0
          %v5023 = vmax.f32 %v4991, 0.0
          %v5024 = vmax.f32 %v4992, 0.0
          %v5025 = vmax.f32 %v4993, 0.0
          %v5026 = vmax.f32 %v4994, 0.0
          %v5027 = vmax.f32 %v4995, 0.0
          %v5028 = vmax.f32 %v4996, 0.0
          %v5029 = vmax.f32 %v4997, 0.0
          %v5030 = vmax.f32 %v4998, 0.0
          %v5031 = vmax.f32 %v4999, 0.0
          %v5032 = vmax.f32 %v5000, 0.0
          %v5033 = vmax.f32 %v5001, 0.0
          %v5034 = vmax.f32 %v5002, 0.0
          %v5035 = vmax.f32 %v5003, 0.0
          %v5036 = vmax.f32 %v5004, 0.0
          %v5037 = vmax.f32 %v5005, 0.0
          %v5038 = vmax.f32 %v5006, 0.0
          %v5039 = vmax.f32 %v5007, 0.0
          %v5040 = vmax.f32 %v5008, 0.0
          %5041 = vst [vmem:[%s667] sm:$0xff] %v5009
          %5042 = vst [vmem:[%s667 + $0x8] sm:$0xff] %v5010
          %5043 = vst [vmem:[%s667 + $0x10] sm:$0xff] %v5011
          %5044 = vst [vmem:[%s667 + $0x18] sm:$0xff] %v5012
          %5045 = vst [vmem:[%s667 + $0x20] sm:$0xff] %v5013
          %5046 = vst [vmem:[%s667 + $0x28] sm:$0xff] %v5014
          %5047 = vst [vmem:[%s667 + $0x30] sm:$0xff] %v5015
          %5048 = vst [vmem:[%s667 + $0x38] sm:$0xff] %v5016
          %5049 = vst [vmem:[%s667 + $0x40] sm:$0xff] %v5017
          %5050 = vst [vmem:[%s667 + $0x48] sm:$0xff] %v5018
          %5051 = vst [vmem:[%s667 + $0x50] sm:$0xff] %v5019
          %5052 = vst [vmem:[%s667 + $0x58] sm:$0xff] %v5020
          %5053 = vst [vmem:[%s667 + $0x60] sm:$0xff] %v5021
          %5054 = vst [vmem:[%s667 + $0x68] sm:$0xff] %v5022
          %5055 = vst [vmem:[%s667 + $0x70] sm:$0xff] %v5023
          %5056 = vst [vmem:[%s667 + $0x78] sm:$0xff] %v5024
          %5057 = vst [vmem:[%s667 + $0x80] sm:$0xff] %v5025
          %5058 = vst [vmem:[%s667 + $0x88] sm:$0xff] %v5026
          %5059 = vst [vmem:[%s667 + $0x90] sm:$0xff] %v5027
          %5060 = vst [vmem:[%s667 + $0x98] sm:$0xff] %v5028
          %5061 = vst [vmem:[%s667 + $0xa0] sm:$0xff] %v5029
          %5062 = vst [vmem:[%s667 + $0xa8] sm:$0xff] %v5030
          %5063 = vst [vmem:[%s667 + $0xb0] sm:$0xff] %v5031
          %5064 = vst [vmem:[%s667 + $0xb8] sm:$0xff] %v5032
          %5065 = vst [vmem:[%s667 + $0xc0] sm:$0xff] %v5033
          %5066 = vst [vmem:[%s667 + $0xc8] sm:$0xff] %v5034
          %5067 = vst [vmem:[%s667 + $0xd0] sm:$0xff] %v5035
          %5068 = vst [vmem:[%s667 + $0xd8] sm:$0xff] %v5036
          %5069 = vst [vmem:[%s667 + $0xe0] sm:$0xff] %v5037
          %5070 = vst [vmem:[%s667 + $0xe8] sm:$0xff] %v5038
          %5071 = vst [vmem:[%s667 + $0xf0] sm:$0xff] %v5039
          %5072 = vst [vmem:[%s667 + $0xf8] sm:$0xff] %v5040
        $region120: #{tpu_custom_call.1} parent=71 // pred_fallthru
          _
        %s5073 = sand.u32 %s347, 1
        %s5074 = scalar_lea.sflag [#allocation5], %s5073
        %s5075 = sand.u32 %s347, 1
        %s5076 = smul.addr %s5075, 512
        %s5077 = scalar_lea.vmem [#allocation16], %s5076
        %s5078 = sand.u32 %s37, 1
        %s5079 = scalar_lea.sflag [#allocation18], %s5078
        %s5080 = sand.u32 %s375, 1
        %s5081 = smul.addr %s5080, 512
        %s5082 = scalar_lea.vmem [#allocation17], %s5081
        %s5083 = sand.u32 %s37, 1
        %s5084 = scalar_lea.sflag [#allocation18], %s5083
        %s5085 = sand.u32 %s401, 1
        %s5086 = smul.addr %s5085, 256
        %s5087 = scalar_lea.vmem [#allocation19], %s5086
        // Predicated region
        $region121: #{tpu_custom_call.1} parent=71 // pred_check
          %p5088 = pneg %p357
        $region122: #{tpu_custom_call.1} parent=71 // pred_check_branch
          %5090 = sbr.rel (%p5088) target = $region124
        $region123: #{tpu_custom_call.1} parent=71 // pred_region
          %s5092 = ssub.s32 8192, 8192
          %5093 = vsyncadd %s5074, %s5092
          %s5094 = smul.addr %s41, 64
          %s5095 = smul.addr %s42, 128
          %s5096 = sadd.s32 %s5094, %s5095
          %s5097 = smul.addr %s5096, 128
          %s5098 = scalar_lea.hbm %s13, %s5097
          %s5099 = sshll.u32 %s5077, 4
          %s5100 = int_to_ptr.vmem [resolvable:$true] %s5099
          %5105 = dma.vmem_to_hbm [thread:$0]  %s5100, 8192, %s5098, %s5074, 256, 256, 16
        $region124: #{tpu_custom_call.1} parent=71 // pred_fallthru
          _
        // Predicated region
        $region125: #{tpu_custom_call.1} parent=71 // pred_check
          %p5106 = pneg %p385
        $region126: #{tpu_custom_call.1} parent=71 // pred_check_branch
          %5108 = sbr.rel (%p5106) target = $region128
        $region127: #{tpu_custom_call.1} parent=71 // pred_region
          %s5110 = ssub.s32 8192, 8192
          %5111 = vsyncadd %s5079, %s5110
          %s5112 = smul.addr %s41, 64
          %s5113 = smul.addr %s42, 128
          %s5114 = sadd.s32 %s5112, %s5113
          %s5115 = smul.addr %s5114, 128
          %s5116 = scalar_lea.hbm %s14, %s5115
          %s5117 = sshll.u32 %s5082, 4
          %s5118 = int_to_ptr.vmem [resolvable:$true] %s5117
          %5123 = dma.vmem_to_hbm [thread:$0]  %s5118, 8192, %s5116, %s5079, 256, 256, 16
        $region128: #{tpu_custom_call.1} parent=71 // pred_fallthru
          _
        // Predicated region
        $region129: #{tpu_custom_call.1} parent=71 // pred_check
          %p5124 = pneg %p411
        $region130: #{tpu_custom_call.1} parent=71 // pred_check_branch
          %5126 = sbr.rel (%p5124) target = $region132
        $region131: #{tpu_custom_call.1} parent=71 // pred_region
          %s5128 = ssub.s32 4096, 4096
          %5129 = vsyncadd %s5084, %s5128
          %s5130 = smul.addr %s41, 32
          %s5131 = smul.addr %s5130, 128
          %s5132 = scalar_lea.hbm %s15, %s5131
          %s5133 = sshll.u32 %s5087, 4
          %s5134 = int_to_ptr.vmem [resolvable:$true] %s5133
          %5139 = dma.vmem_to_hbm [thread:$0]  %s5134, 4096, %s5132, %s5084, 128, 128, 8
        $region132: #{tpu_custom_call.1} parent=71 // pred_fallthru
          _
      $region72: #{tpu_custom_call.1} parent=5 // pred_fallthru
        _
      %p5140 = scmp.le.s32.totalorder 2, %s32
      // Predicated region
      $region133: #{tpu_custom_call.1} parent=5 // pred_check
        %p5141 = pneg %p5140
      $region134: #{tpu_custom_call.1} parent=5 // pred_check_branch
        %5143 = sbr.rel (%p5141) target = $region136
      $region135: #{tpu_custom_call.1} parent=5 // pred_region
        %s5144 = ssub.s32 %s32, 2
        // Predicated region
        $region137: #{tpu_custom_call.1} parent=135 // pred_check
          %p5145 = pneg %p363
        $region138: #{tpu_custom_call.1} parent=135 // pred_check_branch
          %5147 = sbr.rel (%p5145) target = $region140
        $region139: #{tpu_custom_call.1} parent=135 // pred_region
          %s5148 = sand.u32 %s348, 1
          %s5149 = scalar_lea.sflag [#allocation5], %s5148
          %s5150 = sand.u32 %s348, 1
          %s5151 = smul.addr %s5150, 512
          %s5152 = scalar_lea.vmem [#allocation16], %s5151
          %5153 = dma.done %s5149, 8192
        $region140: #{tpu_custom_call.1} parent=135 // pred_fallthru
          _
        // Predicated region
        $region141: #{tpu_custom_call.1} parent=135 // pred_check
          %p5154 = pneg %p391
        $region142: #{tpu_custom_call.1} parent=135 // pred_check_branch
          %5156 = sbr.rel (%p5154) target = $region144
        $region143: #{tpu_custom_call.1} parent=135 // pred_region
          %s5157 = sand.u32 %s38, 1
          %s5158 = scalar_lea.sflag [#allocation18], %s5157
          %s5159 = sand.u32 %s376, 1
          %s5160 = smul.addr %s5159, 512
          %s5161 = scalar_lea.vmem [#allocation17], %s5160
          %5162 = dma.done %s5158, 8192
        $region144: #{tpu_custom_call.1} parent=135 // pred_fallthru
          _
        // Predicated region
        $region145: #{tpu_custom_call.1} parent=135 // pred_check
          %p5163 = pneg %p417
        $region146: #{tpu_custom_call.1} parent=135 // pred_check_branch
          %5165 = sbr.rel (%p5163) target = $region148
        $region147: #{tpu_custom_call.1} parent=135 // pred_region
          %s5166 = sand.u32 %s38, 1
          %s5167 = scalar_lea.sflag [#allocation18], %s5166
          %s5168 = sand.u32 %s402, 1
          %s5169 = smul.addr %s5168, 256
          %s5170 = scalar_lea.vmem [#allocation19], %s5169
          %5171 = dma.done %s5167, 4096
        $region148: #{tpu_custom_call.1} parent=135 // pred_fallthru
          _
      $region136: #{tpu_custom_call.1} parent=5 // pred_fallthru
        _
    $region6: #{tpu_custom_call.1} parent=1 // loop_footer
      %s36 = sadd.s32 1, %s32
    $region7: #{tpu_custom_call.1} parent=1 // loop_footer_branch
      %31 = sbr.rel target = $region3
    $region8: #{tpu_custom_call.1} parent=1 // loop_exit
      _
    %5172 = vsyncpa [#allocation4], 1
    %s5173 = scalar_lea.sflag [#allocation4], 1
    %5174 = vsyncpa %s5173, 1
    %5175 = vsyncpa [#allocation7], 1
    %5176 = vsyncpa [#allocation10], 1
    %5177 = vsyncpa [#allocation13], 1
    %5178 = vsyncpa [#allocation5], 1
    %s5179 = scalar_lea.sflag [#allocation5], 1
    %5180 = vsyncpa %s5179, 1
    %5181 = vsyncpa [#allocation18], 1
    %s5182 = scalar_lea.sflag [#allocation18], 1
    %5183 = vsyncpa %s5182, 1

</llo_original>
